<compile_context>
chip_gen: v7x
topology: tpu7x:2x2x1
jax: 0.10.0
libtpu: 0.0.40
codegen_flags: <defaults>
</compile_context>

<pallas_src>
import jax
import jax.numpy as jnp
from jax.experimental import pallas as pl
from jax.experimental.pallas import tpu as pltpu


def _round_up(x, m):
    return ((x + m - 1) // m) * m


def _full_spec(arr):
    """Whole-array BlockSpec for a grid=() kernel."""
    nd = arr.ndim
    return pl.BlockSpec(arr.shape, lambda *_: (0,) * nd)


# --------------------------------------------------------------------------
# Fused kernel: all LSTM layers + time-step select + dis_out MLP head.
# --------------------------------------------------------------------------
def _make_fused_rnn_kernel(S, B, H, nlayers):
    def kernel(*refs):
        emb_ref, ll_ref, h0_ref, c0_ref = refs[:4]
        lw = refs[4:4 + 3 * nlayers]                       # (w_ih, w_hh, b) per layer
        (w1_ref, b1_ref, w2_ref, b2_ref,
         dec_ref, sel_ref, xbuf_sc) = refs[4 + 3 * nlayers:]

        # Per-example select index; emulate negative-index wrap (torch/jax semantics).
        tsel = ll_ref[...] - 2                             # (B, 1) int32
        tsel = jnp.where(tsel < 0, tsel + S, tsel)

        sel = jnp.zeros((B, H), jnp.float32)

        for l in range(nlayers):
            w_ih = lw[3 * l][...]
            w_hh = lw[3 * l + 1][...]
            b = lw[3 * l + 2][...]

            # Hoisted input projection (+ bias): one big MXU matmul per layer.
            x_in = emb_ref[...] if l == 0 else xbuf_sc[...]          # (S*B, D_in)
            gx = jnp.dot(x_in, w_ih,
                         preferred_element_type=jnp.float32) + b     # (S*B, 4H)

            h = h0_ref[l]                                            # (B, H)
            c = c0_ref[l]
            last = (l == nlayers - 1)

            for t in range(S):                                       # S is small; fully unrolled
                gates = gx[t * B:(t + 1) * B, :] + jnp.dot(
                    h, w_hh, preferred_element_type=jnp.float32)     # (B, 4H)
                # Full-width activations (dense EUP work), then gate slices.
                sg = jax.nn.sigmoid(gates)
                th = jnp.tanh(gates)
                i_g = sg[:, 0 * H:1 * H]
                f_g = sg[:, 1 * H:2 * H]
                g_g = th[:, 2 * H:3 * H]
                o_g = sg[:, 3 * H:4 * H]
                c = f_g * c + i_g * g_g
                h = o_g * jnp.tanh(c)
                if last:
                    # Per-example time-step select done in-kernel.
                    sel = jnp.where(tsel == t, h, sel)
                else:
                    # Next layer's input stays resident in VMEM scratch.
                    xbuf_sc[t * B:(t + 1) * B, :] = h

        sel_ref[...] = sel.astype(sel_ref.dtype)

        # dis_out head: Linear -> ReLU -> (Dropout=id) -> Linear, lane-padded to 128.
        hh = jnp.maximum(
            jnp.dot(sel, w1_ref[...], preferred_element_type=jnp.float32) + b1_ref[...],
            0.0)
        dec_ref[...] = (jnp.dot(hh, w2_ref[...], preferred_element_type=jnp.float32)
                        + b2_ref[...]).astype(dec_ref.dtype)

    return kernel


def fused_rnn_forward(emb_flat, last_location, h0, c0, layer_weights,
                      w1p, b1p, w2p, b2p, *, S, B, H, nlayers):
    """emb_flat: (S*B, ninp) time-major; layer_weights: [(w_ih, w_hh, b)] * nlayers.
       Returns (decoded_padded (B, NCP), selected (B, H))."""
    inputs = [emb_flat, last_location.reshape(B, 1).astype(jnp.int32), h0, c0]
    for (w_ih, w_hh, b) in layer_weights:
        inputs += [w_ih, w_hh, b]
    inputs += [w1p, b1p, w2p, b2p]

    NCP = w2p.shape[-1]
    kernel = _make_fused_rnn_kernel(S, B, H, nlayers)
    return pl.pallas_call(
        kernel,
        out_shape=(jax.ShapeDtypeStruct((B, NCP), jnp.float32),
                   jax.ShapeDtypeStruct((B, H), jnp.float32)),
        grid=(),
        in_specs=[_full_spec(x) for x in inputs],
        out_specs=(pl.BlockSpec((B, NCP), lambda *_: (0, 0)),
                   pl.BlockSpec((B, H), lambda *_: (0, 0))),
        scratch_shapes=[pltpu.VMEM((S * B, H), jnp.float32)],   # inter-layer activations
    )(*inputs)


# --------------------------------------------------------------------------
# Full model forward (glue in plain JAX: embedding gather + weight padding)
# --------------------------------------------------------------------------
def rnn_model_forward(params, tokens, hidden, last_location):
    """tokens: (S, B) int32; hidden: (h0, c0) each (nlayers, B, H);
       last_location: (B,) int32. Returns (decoded (B, nclass), selected (B, H))."""
    h0, c0 = hidden
    S, B = tokens.shape
    nlayers = params["nlayers"]
    H = h0.shape[-1]
    n_cl_hidden = params["w1"].shape[-1]
    nclass = params["w2"].shape[-1]

    # Embedding lookup: data-dependent gather -> plain JAX glue.
    emb = jnp.take(params["emb"], tokens, axis=0)            # (S, B, ninp)
    # drop_em: identity (eval mode).  TODO(synk): add PRNG-based dropout if training.
    emb_flat = emb.reshape(S * B, emb.shape[-1])             # time-major flatten

    # Zero-pad the head to 128 lanes (numerically exact; sliced off below).
    CP = _round_up(n_cl_hidden, 128)
    NCP = _round_up(nclass, 128)
    w1p = jnp.zeros((H, CP), jnp.float32).at[:, :n_cl_hidden].set(params["w1"])
    b1p = jnp.zeros((1, CP), jnp.float32).at[:, :n_cl_hidden].set(params["b1"])
    w2p = jnp.zeros((CP, NCP), jnp.float32).at[:n_cl_hidden, :nclass].set(params["w2"])
    b2p = jnp.zeros((1, NCP), jnp.float32).at[:, :nclass].set(params["b2"])

    layer_weights = list(zip(params["w_ih"], params["w_hh"], params["b"]))
    dec_pad, selected = fused_rnn_forward(
        emb_flat, last_location, h0, c0, layer_weights,
        w1p, b1p, w2p, b2p, S=S, B=B, H=H, nlayers=nlayers)
    return dec_pad[:, :nclass], selected


# --------------------------------------------------------------------------
# Pure-JAX reference (for correctness check only)
# --------------------------------------------------------------------------
def _ref_forward(params, tokens, hidden, last_location):
    h0, c0 = hidden
    x = jnp.take(params["emb"], tokens, axis=0)
    for l in range(params["nlayers"]):
        w_ih, w_hh, b = params["w_ih"][l], params["w_hh"][l], params["b"][l]

        def step(carry, xt):
            h, c = carry
            gates = xt @ w_ih + h @ w_hh + b
            i, f, g, o = jnp.split(gates, 4, axis=-1)
            i, f, o = jax.nn.sigmoid(i), jax.nn.sigmoid(f), jax.nn.sigmoid(o)
            g = jnp.tanh(g)
            c = f * c + i * g
            h = o * jnp.tanh(c)
            return (h, c), h

        (_, _), x = jax.lax.scan(step, (h0[l], c0[l]), x)
    B = tokens.shape[1]
    sel = x[last_location - 2, jnp.arange(B)]
    hdec = jnp.maximum(sel @ params["w1"] + params["b1"], 0.0)
    dec = hdec @ params["w2"] + params["b2"]
    return dec, sel


# --------------------------------------------------------------------------
# Deterministic parameter construction (mirrors the PyTorch __init__ shapes)
# --------------------------------------------------------------------------
def make_params(key, ntoken, ninp, nhid, nlayers, nclass, n_cl_hidden):
    ks = jax.random.split(key, 3 + 4 * nlayers)
    initrange = 0.1
    params = {"nlayers": nlayers}
    # encoder.weight ~ U(-0.1, 0.1)   (padding row also overwritten, as in the module)
    params["emb"] = jax.random.uniform(ks[0], (ntoken, ninp), jnp.float32,
                                       -initrange, initrange)
    # LSTM weights ~ U(-1/sqrt(nhid), 1/sqrt(nhid)), stored transposed (in, 4H)
    k_lstm = 1.0 / jnp.sqrt(nhid)
    w_ih, w_hh, b = [], [], []
    for l in range(nlayers):
        d_in = ninp if l == 0 else nhid
        w_ih.append(jax.random.uniform(ks[3 + 4 * l], (d_in, 4 * nhid), jnp.float32,
                                       -k_lstm, k_lstm))
        w_hh.append(jax.random.uniform(ks[4 + 4 * l], (nhid, 4 * nhid), jnp.float32,
                                       -k_lstm, k_lstm))
        b_ih = jax.random.uniform(ks[5 + 4 * l], (4 * nhid,), jnp.float32, -k_lstm, k_lstm)
        b_hh = jax.random.uniform(ks[6 + 4 * l], (4 * nhid,), jnp.float32, -k_lstm, k_lstm)
        b.append((b_ih + b_hh).reshape(1, 4 * nhid))
    params["w_ih"], params["w_hh"], params["b"] = w_ih, w_hh, b
    # dis_out: Linear weights ~ U(-0.1, 0.1), biases zero (weights_init)
    params["w1"] = jax.random.uniform(ks[1], (nhid, n_cl_hidden), jnp.float32,
                                      -initrange, initrange)
    params["b1"] = jnp.zeros((1, n_cl_hidden), jnp.float32)
    params["w2"] = jax.random.uniform(ks[2], (n_cl_hidden, nclass), jnp.float32,
                                      -initrange, initrange)
    params["b2"] = jnp.zeros((1, nclass), jnp.float32)
    return params


if __name__ == "__main__":
    # Small, module-consistent shapes.
    ntoken, ninp, nhid, nlayers = 50, 32, 32, 2
    nclass, n_cl_hidden = 3, 30
    seq_len, batch = 10, 8

    key = jax.random.PRNGKey(0)
    kp, kt, kl = jax.random.split(key, 3)
    params = make_params(kp, ntoken, ninp, nhid, nlayers, nclass, n_cl_hidden)

    tokens = jax.random.randint(kt, (seq_len, batch), 0, ntoken, dtype=jnp.int32)
    last_location = jax.random.randint(kl, (batch,), 2, seq_len + 1, dtype=jnp.int32)
    # init_hidden: zeros (nlayers, batch, nhid) for (h0, c0)
    hidden = (jnp.zeros((nlayers, batch, nhid), jnp.float32),
              jnp.zeros((nlayers, batch, nhid), jnp.float32))

    decoded, selected = rnn_model_forward(params, tokens, hidden, last_location)
    decoded = jax.block_until_ready(decoded)
    selected = jax.block_until_ready(selected)

    # Verify against a pure-JAX reference.
    dec_ref, sel_ref = _ref_forward(params, tokens, hidden, last_location)
    assert decoded.shape == (batch, nclass)
    assert selected.shape == (batch, nhid)
    assert jnp.allclose(decoded, dec_ref, rtol=1e-5, atol=1e-5)
    assert jnp.allclose(selected, sel_ref, rtol=1e-5, atol=1e-5)

    print("KERNEL_OK")
</pallas_src>

<mosaic_0001>
module attributes {stable_mosaic.version = 11 : i64} {
  func.func @kernel(%arg0: memref<80x32xf32, #tpu.memory_space<vmem>>, %arg1: memref<8x1xi32, #tpu.memory_space<vmem>>, %arg2: memref<2x8x32xf32, #tpu.memory_space<vmem>>, %arg3: memref<2x8x32xf32, #tpu.memory_space<vmem>>, %arg4: memref<32x128xf32, #tpu.memory_space<vmem>>, %arg5: memref<32x128xf32, #tpu.memory_space<vmem>>, %arg6: memref<1x128xf32, #tpu.memory_space<vmem>>, %arg7: memref<32x128xf32, #tpu.memory_space<vmem>>, %arg8: memref<32x128xf32, #tpu.memory_space<vmem>>, %arg9: memref<1x128xf32, #tpu.memory_space<vmem>>, %arg10: memref<32x128xf32, #tpu.memory_space<vmem>>, %arg11: memref<1x128xf32, #tpu.memory_space<vmem>>, %arg12: memref<128x128xf32, #tpu.memory_space<vmem>>, %arg13: memref<1x128xf32, #tpu.memory_space<vmem>>, %arg14: memref<8x128xf32, #tpu.memory_space<vmem>>, %arg15: memref<8x32xf32, #tpu.memory_space<vmem>>, %arg16: memref<80x32xf32, #tpu.memory_space<vmem>>) attributes {dimension_semantics = [], scalar_prefetch = 0 : i64, scratch_operands = 1 : i64, tpu.core_type = #tpu.core_type<tc>} {
    %c0 = arith.constant 0 : index
    %c0_0 = arith.constant 0 : index
    %0 = vector.load %arg1[%c0, %c0_0] : memref<8x1xi32, #tpu.memory_space<vmem>>, vector<8x1xi32>
    %c2_i32 = arith.constant 2 : i32
    %1 = vector.broadcast %c2_i32 : i32 to vector<8x1xi32>
    %2 = arith.subi %0, %1 : vector<8x1xi32>
    %c0_i32 = arith.constant 0 : i32
    %3 = vector.broadcast %c0_i32 : i32 to vector<8x1xi32>
    %4 = arith.cmpi slt, %2, %3 : vector<8x1xi32>
    %c10_i32 = arith.constant 10 : i32
    %5 = vector.broadcast %c10_i32 : i32 to vector<8x1xi32>
    %6 = arith.addi %2, %5 : vector<8x1xi32>
    %7 = arith.select %4, %6, %2 : vector<8x1xi1>, vector<8x1xi32>
    %cst = arith.constant 0.000000e+00 : f32
    %8 = vector.broadcast %cst : f32 to vector<8x32xf32>
    %c0_1 = arith.constant 0 : index
    %c0_2 = arith.constant 0 : index
    %9 = vector.load %arg4[%c0_1, %c0_2] : memref<32x128xf32, #tpu.memory_space<vmem>>, vector<32x128xf32>
    %c0_3 = arith.constant 0 : index
    %c0_4 = arith.constant 0 : index
    %10 = vector.load %arg5[%c0_3, %c0_4] : memref<32x128xf32, #tpu.memory_space<vmem>>, vector<32x128xf32>
    %c0_5 = arith.constant 0 : index
    %c0_6 = arith.constant 0 : index
    %11 = vector.load %arg6[%c0_5, %c0_6] : memref<1x128xf32, #tpu.memory_space<vmem>>, vector<1x128xf32>
    %c0_7 = arith.constant 0 : index
    %c0_8 = arith.constant 0 : index
    %12 = vector.load %arg0[%c0_7, %c0_8] : memref<80x32xf32, #tpu.memory_space<vmem>>, vector<80x32xf32>
    %cst_9 = arith.constant dense<0.000000e+00> : vector<80x128xf32>
    %13 = tpu.matmul %12, %9, %cst_9 {dimension_numbers = #tpu.dot_dimension_numbers<[1], [0], [0], [1], [0, 0, 1, 1], [], []>} : vector<80x32xf32>, vector<32x128xf32>, vector<80x128xf32> -> vector<80x128xf32>
    %14 = vector.broadcast %11 : vector<1x128xf32> to vector<80x128xf32>
    %15 = arith.addf %13, %14 : vector<80x128xf32>
    %c0_10 = arith.constant 0 : index
    %c0_11 = arith.constant 0 : index
    %c0_12 = arith.constant 0 : index
    %16 = vector.load %arg2[%c0_10, %c0_11, %c0_12] : memref<2x8x32xf32, #tpu.memory_space<vmem>>, vector<1x8x32xf32>
    %17 = vector.shape_cast %16 : vector<1x8x32xf32> to vector<8x32xf32>
    %c0_13 = arith.constant 0 : index
    %c0_14 = arith.constant 0 : index
    %c0_15 = arith.constant 0 : index
    %18 = vector.load %arg3[%c0_13, %c0_14, %c0_15] : memref<2x8x32xf32, #tpu.memory_space<vmem>>, vector<1x8x32xf32>
    %19 = vector.shape_cast %18 : vector<1x8x32xf32> to vector<8x32xf32>
    %20 = vector.extract_strided_slice %15 {offsets = [0, 0], sizes = [8, 128], strides = [1, 1]} : vector<80x128xf32> to vector<8x128xf32>
    %cst_16 = arith.constant dense<0.000000e+00> : vector<8x128xf32>
    %21 = tpu.matmul %17, %10, %cst_16 {dimension_numbers = #tpu.dot_dimension_numbers<[1], [0], [0], [1], [0, 0, 1, 1], [], []>} : vector<8x32xf32>, vector<32x128xf32>, vector<8x128xf32> -> vector<8x128xf32>
    %22 = arith.addf %20, %21 : vector<8x128xf32>
    %23 = arith.negf %22 : vector<8x128xf32>
    %24 = math.exp %23 : vector<8x128xf32>
    %cst_17 = arith.constant 1.000000e+00 : f32
    %25 = vector.broadcast %cst_17 : f32 to vector<8x128xf32>
    %26 = arith.addf %25, %24 : vector<8x128xf32>
    %27 = arith.divf %25, %26 : vector<8x128xf32>
    %28 = math.tanh %22 : vector<8x128xf32>
    %29 = vector.extract_strided_slice %27 {offsets = [0, 0], sizes = [8, 32], strides = [1, 1]} : vector<8x128xf32> to vector<8x32xf32>
    %30 = vector.extract_strided_slice %27 {offsets = [0, 32], sizes = [8, 32], strides = [1, 1]} : vector<8x128xf32> to vector<8x32xf32>
    %31 = vector.extract_strided_slice %28 {offsets = [0, 64], sizes = [8, 32], strides = [1, 1]} : vector<8x128xf32> to vector<8x32xf32>
    %32 = vector.extract_strided_slice %27 {offsets = [0, 96], sizes = [8, 32], strides = [1, 1]} : vector<8x128xf32> to vector<8x32xf32>
    %33 = arith.mulf %30, %19 : vector<8x32xf32>
    %34 = arith.mulf %29, %31 : vector<8x32xf32>
    %35 = arith.addf %33, %34 : vector<8x32xf32>
    %36 = math.tanh %35 : vector<8x32xf32>
    %37 = arith.mulf %32, %36 : vector<8x32xf32>
    %c0_18 = arith.constant 0 : index
    %c0_19 = arith.constant 0 : index
    %38 = vector.load %arg16[%c0_18, %c0_19] : memref<80x32xf32, #tpu.memory_space<vmem>>, vector<8x32xf32>
    tpu.vector_store %arg16[%c0_18, %c0_19], %37 {strides = array<i32>} : memref<80x32xf32, #tpu.memory_space<vmem>>, vector<8x32xf32>,
    %39 = vector.extract_strided_slice %15 {offsets = [8, 0], sizes = [8, 128], strides = [1, 1]} : vector<80x128xf32> to vector<8x128xf32>
    %cst_20 = arith.constant dense<0.000000e+00> : vector<8x128xf32>
    %40 = tpu.matmul %37, %10, %cst_20 {dimension_numbers = #tpu.dot_dimension_numbers<[1], [0], [0], [1], [0, 0, 1, 1], [], []>} : vector<8x32xf32>, vector<32x128xf32>, vector<8x128xf32> -> vector<8x128xf32>
    %41 = arith.addf %39, %40 : vector<8x128xf32>
    %42 = arith.negf %41 : vector<8x128xf32>
    %43 = math.exp %42 : vector<8x128xf32>
    %cst_21 = arith.constant 1.000000e+00 : f32
    %44 = vector.broadcast %cst_21 : f32 to vector<8x128xf32>
    %45 = arith.addf %44, %43 : vector<8x128xf32>
    %46 = arith.divf %44, %45 : vector<8x128xf32>
    %47 = math.tanh %41 : vector<8x128xf32>
    %48 = vector.extract_strided_slice %46 {offsets = [0, 0], sizes = [8, 32], strides = [1, 1]} : vector<8x128xf32> to vector<8x32xf32>
    %49 = vector.extract_strided_slice %46 {offsets = [0, 32], sizes = [8, 32], strides = [1, 1]} : vector<8x128xf32> to vector<8x32xf32>
    %50 = vector.extract_strided_slice %47 {offsets = [0, 64], sizes = [8, 32], strides = [1, 1]} : vector<8x128xf32> to vector<8x32xf32>
    %51 = vector.extract_strided_slice %46 {offsets = [0, 96], sizes = [8, 32], strides = [1, 1]} : vector<8x128xf32> to vector<8x32xf32>
    %52 = arith.mulf %49, %35 : vector<8x32xf32>
    %53 = arith.mulf %48, %50 : vector<8x32xf32>
    %54 = arith.addf %52, %53 : vector<8x32xf32>
    %55 = math.tanh %54 : vector<8x32xf32>
    %56 = arith.mulf %51, %55 : vector<8x32xf32>
    %c8 = arith.constant 8 : index
    %c0_22 = arith.constant 0 : index
    %57 = vector.load %arg16[%c8, %c0_22] : memref<80x32xf32, #tpu.memory_space<vmem>>, vector<8x32xf32>
    tpu.vector_store %arg16[%c8, %c0_22], %56 {strides = array<i32>} : memref<80x32xf32, #tpu.memory_space<vmem>>, vector<8x32xf32>,
    %58 = vector.extract_strided_slice %15 {offsets = [16, 0], sizes = [8, 128], strides = [1, 1]} : vector<80x128xf32> to vector<8x128xf32>
    %cst_23 = arith.constant dense<0.000000e+00> : vector<8x128xf32>
    %59 = tpu.matmul %56, %10, %cst_23 {dimension_numbers = #tpu.dot_dimension_numbers<[1], [0], [0], [1], [0, 0, 1, 1], [], []>} : vector<8x32xf32>, vector<32x128xf32>, vector<8x128xf32> -> vector<8x128xf32>
    %60 = arith.addf %58, %59 : vector<8x128xf32>
    %61 = arith.negf %60 : vector<8x128xf32>
    %62 = math.exp %61 : vector<8x128xf32>
    %cst_24 = arith.constant 1.000000e+00 : f32
    %63 = vector.broadcast %cst_24 : f32 to vector<8x128xf32>
    %64 = arith.addf %63, %62 : vector<8x128xf32>
    %65 = arith.divf %63, %64 : vector<8x128xf32>
    %66 = math.tanh %60 : vector<8x128xf32>
    %67 = vector.extract_strided_slice %65 {offsets = [0, 0], sizes = [8, 32], strides = [1, 1]} : vector<8x128xf32> to vector<8x32xf32>
    %68 = vector.extract_strided_slice %65 {offsets = [0, 32], sizes = [8, 32], strides = [1, 1]} : vector<8x128xf32> to vector<8x32xf32>
    %69 = vector.extract_strided_slice %66 {offsets = [0, 64], sizes = [8, 32], strides = [1, 1]} : vector<8x128xf32> to vector<8x32xf32>
    %70 = vector.extract_strided_slice %65 {offsets = [0, 96], sizes = [8, 32], strides = [1, 1]} : vector<8x128xf32> to vector<8x32xf32>
    %71 = arith.mulf %68, %54 : vector<8x32xf32>
    %72 = arith.mulf %67, %69 : vector<8x32xf32>
    %73 = arith.addf %71, %72 : vector<8x32xf32>
    %74 = math.tanh %73 : vector<8x32xf32>
    %75 = arith.mulf %70, %74 : vector<8x32xf32>
    %c16 = arith.constant 16 : index
    %c0_25 = arith.constant 0 : index
    %76 = vector.load %arg16[%c16, %c0_25] : memref<80x32xf32, #tpu.memory_space<vmem>>, vector<8x32xf32>
    tpu.vector_store %arg16[%c16, %c0_25], %75 {strides = array<i32>} : memref<80x32xf32, #tpu.memory_space<vmem>>, vector<8x32xf32>,
    %77 = vector.extract_strided_slice %15 {offsets = [24, 0], sizes = [8, 128], strides = [1, 1]} : vector<80x128xf32> to vector<8x128xf32>
    %cst_26 = arith.constant dense<0.000000e+00> : vector<8x128xf32>
    %78 = tpu.matmul %75, %10, %cst_26 {dimension_numbers = #tpu.dot_dimension_numbers<[1], [0], [0], [1], [0, 0, 1, 1], [], []>} : vector<8x32xf32>, vector<32x128xf32>, vector<8x128xf32> -> vector<8x128xf32>
    %79 = arith.addf %77, %78 : vector<8x128xf32>
    %80 = arith.negf %79 : vector<8x128xf32>
    %81 = math.exp %80 : vector<8x128xf32>
    %cst_27 = arith.constant 1.000000e+00 : f32
    %82 = vector.broadcast %cst_27 : f32 to vector<8x128xf32>
    %83 = arith.addf %82, %81 : vector<8x128xf32>
    %84 = arith.divf %82, %83 : vector<8x128xf32>
    %85 = math.tanh %79 : vector<8x128xf32>
    %86 = vector.extract_strided_slice %84 {offsets = [0, 0], sizes = [8, 32], strides = [1, 1]} : vector<8x128xf32> to vector<8x32xf32>
    %87 = vector.extract_strided_slice %84 {offsets = [0, 32], sizes = [8, 32], strides = [1, 1]} : vector<8x128xf32> to vector<8x32xf32>
    %88 = vector.extract_strided_slice %85 {offsets = [0, 64], sizes = [8, 32], strides = [1, 1]} : vector<8x128xf32> to vector<8x32xf32>
    %89 = vector.extract_strided_slice %84 {offsets = [0, 96], sizes = [8, 32], strides = [1, 1]} : vector<8x128xf32> to vector<8x32xf32>
    %90 = arith.mulf %87, %73 : vector<8x32xf32>
    %91 = arith.mulf %86, %88 : vector<8x32xf32>
    %92 = arith.addf %90, %91 : vector<8x32xf32>
    %93 = math.tanh %92 : vector<8x32xf32>
    %94 = arith.mulf %89, %93 : vector<8x32xf32>
    %c24 = arith.constant 24 : index
    %c0_28 = arith.constant 0 : index
    %95 = vector.load %arg16[%c24, %c0_28] : memref<80x32xf32, #tpu.memory_space<vmem>>, vector<8x32xf32>
    tpu.vector_store %arg16[%c24, %c0_28], %94 {strides = array<i32>} : memref<80x32xf32, #tpu.memory_space<vmem>>, vector<8x32xf32>,
    %96 = vector.extract_strided_slice %15 {offsets = [32, 0], sizes = [8, 128], strides = [1, 1]} : vector<80x128xf32> to vector<8x128xf32>
    %cst_29 = arith.constant dense<0.000000e+00> : vector<8x128xf32>
    %97 = tpu.matmul %94, %10, %cst_29 {dimension_numbers = #tpu.dot_dimension_numbers<[1], [0], [0], [1], [0, 0, 1, 1], [], []>} : vector<8x32xf32>, vector<32x128xf32>, vector<8x128xf32> -> vector<8x128xf32>
    %98 = arith.addf %96, %97 : vector<8x128xf32>
    %99 = arith.negf %98 : vector<8x128xf32>
    %100 = math.exp %99 : vector<8x128xf32>
    %cst_30 = arith.constant 1.000000e+00 : f32
    %101 = vector.broadcast %cst_30 : f32 to vector<8x128xf32>
    %102 = arith.addf %101, %100 : vector<8x128xf32>
    %103 = arith.divf %101, %102 : vector<8x128xf32>
    %104 = math.tanh %98 : vector<8x128xf32>
    %105 = vector.extract_strided_slice %103 {offsets = [0, 0], sizes = [8, 32], strides = [1, 1]} : vector<8x128xf32> to vector<8x32xf32>
    %106 = vector.extract_strided_slice %103 {offsets = [0, 32], sizes = [8, 32], strides = [1, 1]} : vector<8x128xf32> to vector<8x32xf32>
    %107 = vector.extract_strided_slice %104 {offsets = [0, 64], sizes = [8, 32], strides = [1, 1]} : vector<8x128xf32> to vector<8x32xf32>
    %108 = vector.extract_strided_slice %103 {offsets = [0, 96], sizes = [8, 32], strides = [1, 1]} : vector<8x128xf32> to vector<8x32xf32>
    %109 = arith.mulf %106, %92 : vector<8x32xf32>
    %110 = arith.mulf %105, %107 : vector<8x32xf32>
    %111 = arith.addf %109, %110 : vector<8x32xf32>
    %112 = math.tanh %111 : vector<8x32xf32>
    %113 = arith.mulf %108, %112 : vector<8x32xf32>
    %c32 = arith.constant 32 : index
    %c0_31 = arith.constant 0 : index
    %114 = vector.load %arg16[%c32, %c0_31] : memref<80x32xf32, #tpu.memory_space<vmem>>, vector<8x32xf32>
    tpu.vector_store %arg16[%c32, %c0_31], %113 {strides = array<i32>} : memref<80x32xf32, #tpu.memory_space<vmem>>, vector<8x32xf32>,
    %115 = vector.extract_strided_slice %15 {offsets = [40, 0], sizes = [8, 128], strides = [1, 1]} : vector<80x128xf32> to vector<8x128xf32>
    %cst_32 = arith.constant dense<0.000000e+00> : vector<8x128xf32>
    %116 = tpu.matmul %113, %10, %cst_32 {dimension_numbers = #tpu.dot_dimension_numbers<[1], [0], [0], [1], [0, 0, 1, 1], [], []>} : vector<8x32xf32>, vector<32x128xf32>, vector<8x128xf32> -> vector<8x128xf32>
    %117 = arith.addf %115, %116 : vector<8x128xf32>
    %118 = arith.negf %117 : vector<8x128xf32>
    %119 = math.exp %118 : vector<8x128xf32>
    %cst_33 = arith.constant 1.000000e+00 : f32
    %120 = vector.broadcast %cst_33 : f32 to vector<8x128xf32>
    %121 = arith.addf %120, %119 : vector<8x128xf32>
    %122 = arith.divf %120, %121 : vector<8x128xf32>
    %123 = math.tanh %117 : vector<8x128xf32>
    %124 = vector.extract_strided_slice %122 {offsets = [0, 0], sizes = [8, 32], strides = [1, 1]} : vector<8x128xf32> to vector<8x32xf32>
    %125 = vector.extract_strided_slice %122 {offsets = [0, 32], sizes = [8, 32], strides = [1, 1]} : vector<8x128xf32> to vector<8x32xf32>
    %126 = vector.extract_strided_slice %123 {offsets = [0, 64], sizes = [8, 32], strides = [1, 1]} : vector<8x128xf32> to vector<8x32xf32>
    %127 = vector.extract_strided_slice %122 {offsets = [0, 96], sizes = [8, 32], strides = [1, 1]} : vector<8x128xf32> to vector<8x32xf32>
    %128 = arith.mulf %125, %111 : vector<8x32xf32>
    %129 = arith.mulf %124, %126 : vector<8x32xf32>
    %130 = arith.addf %128, %129 : vector<8x32xf32>
    %131 = math.tanh %130 : vector<8x32xf32>
    %132 = arith.mulf %127, %131 : vector<8x32xf32>
    %c40 = arith.constant 40 : index
    %c0_34 = arith.constant 0 : index
    %133 = vector.load %arg16[%c40, %c0_34] : memref<80x32xf32, #tpu.memory_space<vmem>>, vector<8x32xf32>
    tpu.vector_store %arg16[%c40, %c0_34], %132 {strides = array<i32>} : memref<80x32xf32, #tpu.memory_space<vmem>>, vector<8x32xf32>,
    %134 = vector.extract_strided_slice %15 {offsets = [48, 0], sizes = [8, 128], strides = [1, 1]} : vector<80x128xf32> to vector<8x128xf32>
    %cst_35 = arith.constant dense<0.000000e+00> : vector<8x128xf32>
    %135 = tpu.matmul %132, %10, %cst_35 {dimension_numbers = #tpu.dot_dimension_numbers<[1], [0], [0], [1], [0, 0, 1, 1], [], []>} : vector<8x32xf32>, vector<32x128xf32>, vector<8x128xf32> -> vector<8x128xf32>
    %136 = arith.addf %134, %135 : vector<8x128xf32>
    %137 = arith.negf %136 : vector<8x128xf32>
    %138 = math.exp %137 : vector<8x128xf32>
    %cst_36 = arith.constant 1.000000e+00 : f32
    %139 = vector.broadcast %cst_36 : f32 to vector<8x128xf32>
    %140 = arith.addf %139, %138 : vector<8x128xf32>
    %141 = arith.divf %139, %140 : vector<8x128xf32>
    %142 = math.tanh %136 : vector<8x128xf32>
    %143 = vector.extract_strided_slice %141 {offsets = [0, 0], sizes = [8, 32], strides = [1, 1]} : vector<8x128xf32> to vector<8x32xf32>
    %144 = vector.extract_strided_slice %141 {offsets = [0, 32], sizes = [8, 32], strides = [1, 1]} : vector<8x128xf32> to vector<8x32xf32>
    %145 = vector.extract_strided_slice %142 {offsets = [0, 64], sizes = [8, 32], strides = [1, 1]} : vector<8x128xf32> to vector<8x32xf32>
    %146 = vector.extract_strided_slice %141 {offsets = [0, 96], sizes = [8, 32], strides = [1, 1]} : vector<8x128xf32> to vector<8x32xf32>
    %147 = arith.mulf %144, %130 : vector<8x32xf32>
    %148 = arith.mulf %143, %145 : vector<8x32xf32>
    %149 = arith.addf %147, %148 : vector<8x32xf32>
    %150 = math.tanh %149 : vector<8x32xf32>
    %151 = arith.mulf %146, %150 : vector<8x32xf32>
    %c48 = arith.constant 48 : index
    %c0_37 = arith.constant 0 : index
    %152 = vector.load %arg16[%c48, %c0_37] : memref<80x32xf32, #tpu.memory_space<vmem>>, vector<8x32xf32>
    tpu.vector_store %arg16[%c48, %c0_37], %151 {strides = array<i32>} : memref<80x32xf32, #tpu.memory_space<vmem>>, vector<8x32xf32>,
    %153 = vector.extract_strided_slice %15 {offsets = [56, 0], sizes = [8, 128], strides = [1, 1]} : vector<80x128xf32> to vector<8x128xf32>
    %cst_38 = arith.constant dense<0.000000e+00> : vector<8x128xf32>
    %154 = tpu.matmul %151, %10, %cst_38 {dimension_numbers = #tpu.dot_dimension_numbers<[1], [0], [0], [1], [0, 0, 1, 1], [], []>} : vector<8x32xf32>, vector<32x128xf32>, vector<8x128xf32> -> vector<8x128xf32>
    %155 = arith.addf %153, %154 : vector<8x128xf32>
    %156 = arith.negf %155 : vector<8x128xf32>
    %157 = math.exp %156 : vector<8x128xf32>
    %cst_39 = arith.constant 1.000000e+00 : f32
    %158 = vector.broadcast %cst_39 : f32 to vector<8x128xf32>
    %159 = arith.addf %158, %157 : vector<8x128xf32>
    %160 = arith.divf %158, %159 : vector<8x128xf32>
    %161 = math.tanh %155 : vector<8x128xf32>
    %162 = vector.extract_strided_slice %160 {offsets = [0, 0], sizes = [8, 32], strides = [1, 1]} : vector<8x128xf32> to vector<8x32xf32>
    %163 = vector.extract_strided_slice %160 {offsets = [0, 32], sizes = [8, 32], strides = [1, 1]} : vector<8x128xf32> to vector<8x32xf32>
    %164 = vector.extract_strided_slice %161 {offsets = [0, 64], sizes = [8, 32], strides = [1, 1]} : vector<8x128xf32> to vector<8x32xf32>
    %165 = vector.extract_strided_slice %160 {offsets = [0, 96], sizes = [8, 32], strides = [1, 1]} : vector<8x128xf32> to vector<8x32xf32>
    %166 = arith.mulf %163, %149 : vector<8x32xf32>
    %167 = arith.mulf %162, %164 : vector<8x32xf32>
    %168 = arith.addf %166, %167 : vector<8x32xf32>
    %169 = math.tanh %168 : vector<8x32xf32>
    %170 = arith.mulf %165, %169 : vector<8x32xf32>
    %c56 = arith.constant 56 : index
    %c0_40 = arith.constant 0 : index
    %171 = vector.load %arg16[%c56, %c0_40] : memref<80x32xf32, #tpu.memory_space<vmem>>, vector<8x32xf32>
    tpu.vector_store %arg16[%c56, %c0_40], %170 {strides = array<i32>} : memref<80x32xf32, #tpu.memory_space<vmem>>, vector<8x32xf32>,
    %172 = vector.extract_strided_slice %15 {offsets = [64, 0], sizes = [8, 128], strides = [1, 1]} : vector<80x128xf32> to vector<8x128xf32>
    %cst_41 = arith.constant dense<0.000000e+00> : vector<8x128xf32>
    %173 = tpu.matmul %170, %10, %cst_41 {dimension_numbers = #tpu.dot_dimension_numbers<[1], [0], [0], [1], [0, 0, 1, 1], [], []>} : vector<8x32xf32>, vector<32x128xf32>, vector<8x128xf32> -> vector<8x128xf32>
    %174 = arith.addf %172, %173 : vector<8x128xf32>
    %175 = arith.negf %174 : vector<8x128xf32>
    %176 = math.exp %175 : vector<8x128xf32>
    %cst_42 = arith.constant 1.000000e+00 : f32
    %177 = vector.broadcast %cst_42 : f32 to vector<8x128xf32>
    %178 = arith.addf %177, %176 : vector<8x128xf32>
    %179 = arith.divf %177, %178 : vector<8x128xf32>
    %180 = math.tanh %174 : vector<8x128xf32>
    %181 = vector.extract_strided_slice %179 {offsets = [0, 0], sizes = [8, 32], strides = [1, 1]} : vector<8x128xf32> to vector<8x32xf32>
    %182 = vector.extract_strided_slice %179 {offsets = [0, 32], sizes = [8, 32], strides = [1, 1]} : vector<8x128xf32> to vector<8x32xf32>
    %183 = vector.extract_strided_slice %180 {offsets = [0, 64], sizes = [8, 32], strides = [1, 1]} : vector<8x128xf32> to vector<8x32xf32>
    %184 = vector.extract_strided_slice %179 {offsets = [0, 96], sizes = [8, 32], strides = [1, 1]} : vector<8x128xf32> to vector<8x32xf32>
    %185 = arith.mulf %182, %168 : vector<8x32xf32>
    %186 = arith.mulf %181, %183 : vector<8x32xf32>
    %187 = arith.addf %185, %186 : vector<8x32xf32>
    %188 = math.tanh %187 : vector<8x32xf32>
    %189 = arith.mulf %184, %188 : vector<8x32xf32>
    %c64 = arith.constant 64 : index
    %c0_43 = arith.constant 0 : index
    %190 = vector.load %arg16[%c64, %c0_43] : memref<80x32xf32, #tpu.memory_space<vmem>>, vector<8x32xf32>
    tpu.vector_store %arg16[%c64, %c0_43], %189 {strides = array<i32>} : memref<80x32xf32, #tpu.memory_space<vmem>>, vector<8x32xf32>,
    %191 = vector.extract_strided_slice %15 {offsets = [72, 0], sizes = [8, 128], strides = [1, 1]} : vector<80x128xf32> to vector<8x128xf32>
    %cst_44 = arith.constant dense<0.000000e+00> : vector<8x128xf32>
    %192 = tpu.matmul %189, %10, %cst_44 {dimension_numbers = #tpu.dot_dimension_numbers<[1], [0], [0], [1], [0, 0, 1, 1], [], []>} : vector<8x32xf32>, vector<32x128xf32>, vector<8x128xf32> -> vector<8x128xf32>
    %193 = arith.addf %191, %192 : vector<8x128xf32>
    %194 = arith.negf %193 : vector<8x128xf32>
    %195 = math.exp %194 : vector<8x128xf32>
    %cst_45 = arith.constant 1.000000e+00 : f32
    %196 = vector.broadcast %cst_45 : f32 to vector<8x128xf32>
    %197 = arith.addf %196, %195 : vector<8x128xf32>
    %198 = arith.divf %196, %197 : vector<8x128xf32>
    %199 = math.tanh %193 : vector<8x128xf32>
    %200 = vector.extract_strided_slice %198 {offsets = [0, 0], sizes = [8, 32], strides = [1, 1]} : vector<8x128xf32> to vector<8x32xf32>
    %201 = vector.extract_strided_slice %198 {offsets = [0, 32], sizes = [8, 32], strides = [1, 1]} : vector<8x128xf32> to vector<8x32xf32>
    %202 = vector.extract_strided_slice %199 {offsets = [0, 64], sizes = [8, 32], strides = [1, 1]} : vector<8x128xf32> to vector<8x32xf32>
    %203 = vector.extract_strided_slice %198 {offsets = [0, 96], sizes = [8, 32], strides = [1, 1]} : vector<8x128xf32> to vector<8x32xf32>
    %204 = arith.mulf %201, %187 : vector<8x32xf32>
    %205 = arith.mulf %200, %202 : vector<8x32xf32>
    %206 = arith.addf %204, %205 : vector<8x32xf32>
    %207 = math.tanh %206 : vector<8x32xf32>
    %208 = arith.mulf %203, %207 : vector<8x32xf32>
    %c72 = arith.constant 72 : index
    %c0_46 = arith.constant 0 : index
    %209 = vector.load %arg16[%c72, %c0_46] : memref<80x32xf32, #tpu.memory_space<vmem>>, vector<8x32xf32>
    tpu.vector_store %arg16[%c72, %c0_46], %208 {strides = array<i32>} : memref<80x32xf32, #tpu.memory_space<vmem>>, vector<8x32xf32>,
    %c0_47 = arith.constant 0 : index
    %c0_48 = arith.constant 0 : index
    %210 = vector.load %arg7[%c0_47, %c0_48] : memref<32x128xf32, #tpu.memory_space<vmem>>, vector<32x128xf32>
    %c0_49 = arith.constant 0 : index
    %c0_50 = arith.constant 0 : index
    %211 = vector.load %arg8[%c0_49, %c0_50] : memref<32x128xf32, #tpu.memory_space<vmem>>, vector<32x128xf32>
    %c0_51 = arith.constant 0 : index
    %c0_52 = arith.constant 0 : index
    %212 = vector.load %arg9[%c0_51, %c0_52] : memref<1x128xf32, #tpu.memory_space<vmem>>, vector<1x128xf32>
    %c0_53 = arith.constant 0 : index
    %c0_54 = arith.constant 0 : index
    %213 = vector.load %arg16[%c0_53, %c0_54] : memref<80x32xf32, #tpu.memory_space<vmem>>, vector<80x32xf32>
    %cst_55 = arith.constant dense<0.000000e+00> : vector<80x128xf32>
    %214 = tpu.matmul %213, %210, %cst_55 {dimension_numbers = #tpu.dot_dimension_numbers<[1], [0], [0], [1], [0, 0, 1, 1], [], []>} : vector<80x32xf32>, vector<32x128xf32>, vector<80x128xf32> -> vector<80x128xf32>
    %215 = vector.broadcast %212 : vector<1x128xf32> to vector<80x128xf32>
    %216 = arith.addf %214, %215 : vector<80x128xf32>
    %c1 = arith.constant 1 : index
    %c0_56 = arith.constant 0 : index
    %c0_57 = arith.constant 0 : index
    %217 = vector.load %arg2[%c1, %c0_56, %c0_57] : memref<2x8x32xf32, #tpu.memory_space<vmem>>, vector<1x8x32xf32>
    %218 = vector.shape_cast %217 : vector<1x8x32xf32> to vector<8x32xf32>
    %c1_58 = arith.constant 1 : index
    %c0_59 = arith.constant 0 : index
    %c0_60 = arith.constant 0 : index
    %219 = vector.load %arg3[%c1_58, %c0_59, %c0_60] : memref<2x8x32xf32, #tpu.memory_space<vmem>>, vector<1x8x32xf32>
    %220 = vector.shape_cast %219 : vector<1x8x32xf32> to vector<8x32xf32>
    %221 = vector.extract_strided_slice %216 {offsets = [0, 0], sizes = [8, 128], strides = [1, 1]} : vector<80x128xf32> to vector<8x128xf32>
    %cst_61 = arith.constant dense<0.000000e+00> : vector<8x128xf32>
    %222 = tpu.matmul %218, %211, %cst_61 {dimension_numbers = #tpu.dot_dimension_numbers<[1], [0], [0], [1], [0, 0, 1, 1], [], []>} : vector<8x32xf32>, vector<32x128xf32>, vector<8x128xf32> -> vector<8x128xf32>
    %223 = arith.addf %221, %222 : vector<8x128xf32>
    %224 = arith.negf %223 : vector<8x128xf32>
    %225 = math.exp %224 : vector<8x128xf32>
    %cst_62 = arith.constant 1.000000e+00 : f32
    %226 = vector.broadcast %cst_62 : f32 to vector<8x128xf32>
    %227 = arith.addf %226, %225 : vector<8x128xf32>
    %228 = arith.divf %226, %227 : vector<8x128xf32>
    %229 = math.tanh %223 : vector<8x128xf32>
    %230 = vector.extract_strided_slice %228 {offsets = [0, 0], sizes = [8, 32], strides = [1, 1]} : vector<8x128xf32> to vector<8x32xf32>
    %231 = vector.extract_strided_slice %228 {offsets = [0, 32], sizes = [8, 32], strides = [1, 1]} : vector<8x128xf32> to vector<8x32xf32>
    %232 = vector.extract_strided_slice %229 {offsets = [0, 64], sizes = [8, 32], strides = [1, 1]} : vector<8x128xf32> to vector<8x32xf32>
    %233 = vector.extract_strided_slice %228 {offsets = [0, 96], sizes = [8, 32], strides = [1, 1]} : vector<8x128xf32> to vector<8x32xf32>
    %234 = arith.mulf %231, %220 : vector<8x32xf32>
    %235 = arith.mulf %230, %232 : vector<8x32xf32>
    %236 = arith.addf %234, %235 : vector<8x32xf32>
    %237 = math.tanh %236 : vector<8x32xf32>
    %238 = arith.mulf %233, %237 : vector<8x32xf32>
    %c0_i32_63 = arith.constant 0 : i32
    %239 = vector.broadcast %c0_i32_63 : i32 to vector<8x1xi32>
    %240 = arith.cmpi eq, %7, %239 : vector<8x1xi32>
    %241 = vector.shape_cast %240 : vector<8x1xi1> to vector<8x1xi1>
    %242 = vector.broadcast %241 : vector<8x1xi1> to vector<8x32xi1>
    %243 = arith.select %242, %238, %8 : vector<8x32xi1>, vector<8x32xf32>
    %244 = vector.extract_strided_slice %216 {offsets = [8, 0], sizes = [8, 128], strides = [1, 1]} : vector<80x128xf32> to vector<8x128xf32>
    %cst_64 = arith.constant dense<0.000000e+00> : vector<8x128xf32>
    %245 = tpu.matmul %238, %211, %cst_64 {dimension_numbers = #tpu.dot_dimension_numbers<[1], [0], [0], [1], [0, 0, 1, 1], [], []>} : vector<8x32xf32>, vector<32x128xf32>, vector<8x128xf32> -> vector<8x128xf32>
    %246 = arith.addf %244, %245 : vector<8x128xf32>
    %247 = arith.negf %246 : vector<8x128xf32>
    %248 = math.exp %247 : vector<8x128xf32>
    %cst_65 = arith.constant 1.000000e+00 : f32
    %249 = vector.broadcast %cst_65 : f32 to vector<8x128xf32>
    %250 = arith.addf %249, %248 : vector<8x128xf32>
    %251 = arith.divf %249, %250 : vector<8x128xf32>
    %252 = math.tanh %246 : vector<8x128xf32>
    %253 = vector.extract_strided_slice %251 {offsets = [0, 0], sizes = [8, 32], strides = [1, 1]} : vector<8x128xf32> to vector<8x32xf32>
    %254 = vector.extract_strided_slice %251 {offsets = [0, 32], sizes = [8, 32], strides = [1, 1]} : vector<8x128xf32> to vector<8x32xf32>
    %255 = vector.extract_strided_slice %252 {offsets = [0, 64], sizes = [8, 32], strides = [1, 1]} : vector<8x128xf32> to vector<8x32xf32>
    %256 = vector.extract_strided_slice %251 {offsets = [0, 96], sizes = [8, 32], strides = [1, 1]} : vector<8x128xf32> to vector<8x32xf32>
    %257 = arith.mulf %254, %236 : vector<8x32xf32>
    %258 = arith.mulf %253, %255 : vector<8x32xf32>
    %259 = arith.addf %257, %258 : vector<8x32xf32>
    %260 = math.tanh %259 : vector<8x32xf32>
    %261 = arith.mulf %256, %260 : vector<8x32xf32>
    %c1_i32 = arith.constant 1 : i32
    %262 = vector.broadcast %c1_i32 : i32 to vector<8x1xi32>
    %263 = arith.cmpi eq, %7, %262 : vector<8x1xi32>
    %264 = vector.shape_cast %263 : vector<8x1xi1> to vector<8x1xi1>
    %265 = vector.broadcast %264 : vector<8x1xi1> to vector<8x32xi1>
    %266 = arith.select %265, %261, %243 : vector<8x32xi1>, vector<8x32xf32>
    %267 = vector.extract_strided_slice %216 {offsets = [16, 0], sizes = [8, 128], strides = [1, 1]} : vector<80x128xf32> to vector<8x128xf32>
    %cst_66 = arith.constant dense<0.000000e+00> : vector<8x128xf32>
    %268 = tpu.matmul %261, %211, %cst_66 {dimension_numbers = #tpu.dot_dimension_numbers<[1], [0], [0], [1], [0, 0, 1, 1], [], []>} : vector<8x32xf32>, vector<32x128xf32>, vector<8x128xf32> -> vector<8x128xf32>
    %269 = arith.addf %267, %268 : vector<8x128xf32>
    %270 = arith.negf %269 : vector<8x128xf32>
    %271 = math.exp %270 : vector<8x128xf32>
    %cst_67 = arith.constant 1.000000e+00 : f32
    %272 = vector.broadcast %cst_67 : f32 to vector<8x128xf32>
    %273 = arith.addf %272, %271 : vector<8x128xf32>
    %274 = arith.divf %272, %273 : vector<8x128xf32>
    %275 = math.tanh %269 : vector<8x128xf32>
    %276 = vector.extract_strided_slice %274 {offsets = [0, 0], sizes = [8, 32], strides = [1, 1]} : vector<8x128xf32> to vector<8x32xf32>
    %277 = vector.extract_strided_slice %274 {offsets = [0, 32], sizes = [8, 32], strides = [1, 1]} : vector<8x128xf32> to vector<8x32xf32>
    %278 = vector.extract_strided_slice %275 {offsets = [0, 64], sizes = [8, 32], strides = [1, 1]} : vector<8x128xf32> to vector<8x32xf32>
    %279 = vector.extract_strided_slice %274 {offsets = [0, 96], sizes = [8, 32], strides = [1, 1]} : vector<8x128xf32> to vector<8x32xf32>
    %280 = arith.mulf %277, %259 : vector<8x32xf32>
    %281 = arith.mulf %276, %278 : vector<8x32xf32>
    %282 = arith.addf %280, %281 : vector<8x32xf32>
    %283 = math.tanh %282 : vector<8x32xf32>
    %284 = arith.mulf %279, %283 : vector<8x32xf32>
    %c2_i32_68 = arith.constant 2 : i32
    %285 = vector.broadcast %c2_i32_68 : i32 to vector<8x1xi32>
    %286 = arith.cmpi eq, %7, %285 : vector<8x1xi32>
    %287 = vector.shape_cast %286 : vector<8x1xi1> to vector<8x1xi1>
    %288 = vector.broadcast %287 : vector<8x1xi1> to vector<8x32xi1>
    %289 = arith.select %288, %284, %266 : vector<8x32xi1>, vector<8x32xf32>
    %290 = vector.extract_strided_slice %216 {offsets = [24, 0], sizes = [8, 128], strides = [1, 1]} : vector<80x128xf32> to vector<8x128xf32>
    %cst_69 = arith.constant dense<0.000000e+00> : vector<8x128xf32>
    %291 = tpu.matmul %284, %211, %cst_69 {dimension_numbers = #tpu.dot_dimension_numbers<[1], [0], [0], [1], [0, 0, 1, 1], [], []>} : vector<8x32xf32>, vector<32x128xf32>, vector<8x128xf32> -> vector<8x128xf32>
    %292 = arith.addf %290, %291 : vector<8x128xf32>
    %293 = arith.negf %292 : vector<8x128xf32>
    %294 = math.exp %293 : vector<8x128xf32>
    %cst_70 = arith.constant 1.000000e+00 : f32
    %295 = vector.broadcast %cst_70 : f32 to vector<8x128xf32>
    %296 = arith.addf %295, %294 : vector<8x128xf32>
    %297 = arith.divf %295, %296 : vector<8x128xf32>
    %298 = math.tanh %292 : vector<8x128xf32>
    %299 = vector.extract_strided_slice %297 {offsets = [0, 0], sizes = [8, 32], strides = [1, 1]} : vector<8x128xf32> to vector<8x32xf32>
    %300 = vector.extract_strided_slice %297 {offsets = [0, 32], sizes = [8, 32], strides = [1, 1]} : vector<8x128xf32> to vector<8x32xf32>
    %301 = vector.extract_strided_slice %298 {offsets = [0, 64], sizes = [8, 32], strides = [1, 1]} : vector<8x128xf32> to vector<8x32xf32>
    %302 = vector.extract_strided_slice %297 {offsets = [0, 96], sizes = [8, 32], strides = [1, 1]} : vector<8x128xf32> to vector<8x32xf32>
    %303 = arith.mulf %300, %282 : vector<8x32xf32>
    %304 = arith.mulf %299, %301 : vector<8x32xf32>
    %305 = arith.addf %303, %304 : vector<8x32xf32>
    %306 = math.tanh %305 : vector<8x32xf32>
    %307 = arith.mulf %302, %306 : vector<8x32xf32>
    %c3_i32 = arith.constant 3 : i32
    %308 = vector.broadcast %c3_i32 : i32 to vector<8x1xi32>
    %309 = arith.cmpi eq, %7, %308 : vector<8x1xi32>
    %310 = vector.shape_cast %309 : vector<8x1xi1> to vector<8x1xi1>
    %311 = vector.broadcast %310 : vector<8x1xi1> to vector<8x32xi1>
    %312 = arith.select %311, %307, %289 : vector<8x32xi1>, vector<8x32xf32>
    %313 = vector.extract_strided_slice %216 {offsets = [32, 0], sizes = [8, 128], strides = [1, 1]} : vector<80x128xf32> to vector<8x128xf32>
    %cst_71 = arith.constant dense<0.000000e+00> : vector<8x128xf32>
    %314 = tpu.matmul %307, %211, %cst_71 {dimension_numbers = #tpu.dot_dimension_numbers<[1], [0], [0], [1], [0, 0, 1, 1], [], []>} : vector<8x32xf32>, vector<32x128xf32>, vector<8x128xf32> -> vector<8x128xf32>
    %315 = arith.addf %313, %314 : vector<8x128xf32>
    %316 = arith.negf %315 : vector<8x128xf32>
    %317 = math.exp %316 : vector<8x128xf32>
    %cst_72 = arith.constant 1.000000e+00 : f32
    %318 = vector.broadcast %cst_72 : f32 to vector<8x128xf32>
    %319 = arith.addf %318, %317 : vector<8x128xf32>
    %320 = arith.divf %318, %319 : vector<8x128xf32>
    %321 = math.tanh %315 : vector<8x128xf32>
    %322 = vector.extract_strided_slice %320 {offsets = [0, 0], sizes = [8, 32], strides = [1, 1]} : vector<8x128xf32> to vector<8x32xf32>
    %323 = vector.extract_strided_slice %320 {offsets = [0, 32], sizes = [8, 32], strides = [1, 1]} : vector<8x128xf32> to vector<8x32xf32>
    %324 = vector.extract_strided_slice %321 {offsets = [0, 64], sizes = [8, 32], strides = [1, 1]} : vector<8x128xf32> to vector<8x32xf32>
    %325 = vector.extract_strided_slice %320 {offsets = [0, 96], sizes = [8, 32], strides = [1, 1]} : vector<8x128xf32> to vector<8x32xf32>
    %326 = arith.mulf %323, %305 : vector<8x32xf32>
    %327 = arith.mulf %322, %324 : vector<8x32xf32>
    %328 = arith.addf %326, %327 : vector<8x32xf32>
    %329 = math.tanh %328 : vector<8x32xf32>
    %330 = arith.mulf %325, %329 : vector<8x32xf32>
    %c4_i32 = arith.constant 4 : i32
    %331 = vector.broadcast %c4_i32 : i32 to vector<8x1xi32>
    %332 = arith.cmpi eq, %7, %331 : vector<8x1xi32>
    %333 = vector.shape_cast %332 : vector<8x1xi1> to vector<8x1xi1>
    %334 = vector.broadcast %333 : vector<8x1xi1> to vector<8x32xi1>
    %335 = arith.select %334, %330, %312 : vector<8x32xi1>, vector<8x32xf32>
    %336 = vector.extract_strided_slice %216 {offsets = [40, 0], sizes = [8, 128], strides = [1, 1]} : vector<80x128xf32> to vector<8x128xf32>
    %cst_73 = arith.constant dense<0.000000e+00> : vector<8x128xf32>
    %337 = tpu.matmul %330, %211, %cst_73 {dimension_numbers = #tpu.dot_dimension_numbers<[1], [0], [0], [1], [0, 0, 1, 1], [], []>} : vector<8x32xf32>, vector<32x128xf32>, vector<8x128xf32> -> vector<8x128xf32>
    %338 = arith.addf %336, %337 : vector<8x128xf32>
    %339 = arith.negf %338 : vector<8x128xf32>
    %340 = math.exp %339 : vector<8x128xf32>
    %cst_74 = arith.constant 1.000000e+00 : f32
    %341 = vector.broadcast %cst_74 : f32 to vector<8x128xf32>
    %342 = arith.addf %341, %340 : vector<8x128xf32>
    %343 = arith.divf %341, %342 : vector<8x128xf32>
    %344 = math.tanh %338 : vector<8x128xf32>
    %345 = vector.extract_strided_slice %343 {offsets = [0, 0], sizes = [8, 32], strides = [1, 1]} : vector<8x128xf32> to vector<8x32xf32>
    %346 = vector.extract_strided_slice %343 {offsets = [0, 32], sizes = [8, 32], strides = [1, 1]} : vector<8x128xf32> to vector<8x32xf32>
    %347 = vector.extract_strided_slice %344 {offsets = [0, 64], sizes = [8, 32], strides = [1, 1]} : vector<8x128xf32> to vector<8x32xf32>
    %348 = vector.extract_strided_slice %343 {offsets = [0, 96], sizes = [8, 32], strides = [1, 1]} : vector<8x128xf32> to vector<8x32xf32>
    %349 = arith.mulf %346, %328 : vector<8x32xf32>
    %350 = arith.mulf %345, %347 : vector<8x32xf32>
    %351 = arith.addf %349, %350 : vector<8x32xf32>
    %352 = math.tanh %351 : vector<8x32xf32>
    %353 = arith.mulf %348, %352 : vector<8x32xf32>
    %c5_i32 = arith.constant 5 : i32
    %354 = vector.broadcast %c5_i32 : i32 to vector<8x1xi32>
    %355 = arith.cmpi eq, %7, %354 : vector<8x1xi32>
    %356 = vector.shape_cast %355 : vector<8x1xi1> to vector<8x1xi1>
    %357 = vector.broadcast %356 : vector<8x1xi1> to vector<8x32xi1>
    %358 = arith.select %357, %353, %335 : vector<8x32xi1>, vector<8x32xf32>
    %359 = vector.extract_strided_slice %216 {offsets = [48, 0], sizes = [8, 128], strides = [1, 1]} : vector<80x128xf32> to vector<8x128xf32>
    %cst_75 = arith.constant dense<0.000000e+00> : vector<8x128xf32>
    %360 = tpu.matmul %353, %211, %cst_75 {dimension_numbers = #tpu.dot_dimension_numbers<[1], [0], [0], [1], [0, 0, 1, 1], [], []>} : vector<8x32xf32>, vector<32x128xf32>, vector<8x128xf32> -> vector<8x128xf32>
    %361 = arith.addf %359, %360 : vector<8x128xf32>
    %362 = arith.negf %361 : vector<8x128xf32>
    %363 = math.exp %362 : vector<8x128xf32>
    %cst_76 = arith.constant 1.000000e+00 : f32
    %364 = vector.broadcast %cst_76 : f32 to vector<8x128xf32>
    %365 = arith.addf %364, %363 : vector<8x128xf32>
    %366 = arith.divf %364, %365 : vector<8x128xf32>
    %367 = math.tanh %361 : vector<8x128xf32>
    %368 = vector.extract_strided_slice %366 {offsets = [0, 0], sizes = [8, 32], strides = [1, 1]} : vector<8x128xf32> to vector<8x32xf32>
    %369 = vector.extract_strided_slice %366 {offsets = [0, 32], sizes = [8, 32], strides = [1, 1]} : vector<8x128xf32> to vector<8x32xf32>
    %370 = vector.extract_strided_slice %367 {offsets = [0, 64], sizes = [8, 32], strides = [1, 1]} : vector<8x128xf32> to vector<8x32xf32>
    %371 = vector.extract_strided_slice %366 {offsets = [0, 96], sizes = [8, 32], strides = [1, 1]} : vector<8x128xf32> to vector<8x32xf32>
    %372 = arith.mulf %369, %351 : vector<8x32xf32>
    %373 = arith.mulf %368, %370 : vector<8x32xf32>
    %374 = arith.addf %372, %373 : vector<8x32xf32>
    %375 = math.tanh %374 : vector<8x32xf32>
    %376 = arith.mulf %371, %375 : vector<8x32xf32>
    %c6_i32 = arith.constant 6 : i32
    %377 = vector.broadcast %c6_i32 : i32 to vector<8x1xi32>
    %378 = arith.cmpi eq, %7, %377 : vector<8x1xi32>
    %379 = vector.shape_cast %378 : vector<8x1xi1> to vector<8x1xi1>
    %380 = vector.broadcast %379 : vector<8x1xi1> to vector<8x32xi1>
    %381 = arith.select %380, %376, %358 : vector<8x32xi1>, vector<8x32xf32>
    %382 = vector.extract_strided_slice %216 {offsets = [56, 0], sizes = [8, 128], strides = [1, 1]} : vector<80x128xf32> to vector<8x128xf32>
    %cst_77 = arith.constant dense<0.000000e+00> : vector<8x128xf32>
    %383 = tpu.matmul %376, %211, %cst_77 {dimension_numbers = #tpu.dot_dimension_numbers<[1], [0], [0], [1], [0, 0, 1, 1], [], []>} : vector<8x32xf32>, vector<32x128xf32>, vector<8x128xf32> -> vector<8x128xf32>
    %384 = arith.addf %382, %383 : vector<8x128xf32>
    %385 = arith.negf %384 : vector<8x128xf32>
    %386 = math.exp %385 : vector<8x128xf32>
    %cst_78 = arith.constant 1.000000e+00 : f32
    %387 = vector.broadcast %cst_78 : f32 to vector<8x128xf32>
    %388 = arith.addf %387, %386 : vector<8x128xf32>
    %389 = arith.divf %387, %388 : vector<8x128xf32>
    %390 = math.tanh %384 : vector<8x128xf32>
    %391 = vector.extract_strided_slice %389 {offsets = [0, 0], sizes = [8, 32], strides = [1, 1]} : vector<8x128xf32> to vector<8x32xf32>
    %392 = vector.extract_strided_slice %389 {offsets = [0, 32], sizes = [8, 32], strides = [1, 1]} : vector<8x128xf32> to vector<8x32xf32>
    %393 = vector.extract_strided_slice %390 {offsets = [0, 64], sizes = [8, 32], strides = [1, 1]} : vector<8x128xf32> to vector<8x32xf32>
    %394 = vector.extract_strided_slice %389 {offsets = [0, 96], sizes = [8, 32], strides = [1, 1]} : vector<8x128xf32> to vector<8x32xf32>
    %395 = arith.mulf %392, %374 : vector<8x32xf32>
    %396 = arith.mulf %391, %393 : vector<8x32xf32>
    %397 = arith.addf %395, %396 : vector<8x32xf32>
    %398 = math.tanh %397 : vector<8x32xf32>
    %399 = arith.mulf %394, %398 : vector<8x32xf32>
    %c7_i32 = arith.constant 7 : i32
    %400 = vector.broadcast %c7_i32 : i32 to vector<8x1xi32>
    %401 = arith.cmpi eq, %7, %400 : vector<8x1xi32>
    %402 = vector.shape_cast %401 : vector<8x1xi1> to vector<8x1xi1>
    %403 = vector.broadcast %402 : vector<8x1xi1> to vector<8x32xi1>
    %404 = arith.select %403, %399, %381 : vector<8x32xi1>, vector<8x32xf32>
    %405 = vector.extract_strided_slice %216 {offsets = [64, 0], sizes = [8, 128], strides = [1, 1]} : vector<80x128xf32> to vector<8x128xf32>
    %cst_79 = arith.constant dense<0.000000e+00> : vector<8x128xf32>
    %406 = tpu.matmul %399, %211, %cst_79 {dimension_numbers = #tpu.dot_dimension_numbers<[1], [0], [0], [1], [0, 0, 1, 1], [], []>} : vector<8x32xf32>, vector<32x128xf32>, vector<8x128xf32> -> vector<8x128xf32>
    %407 = arith.addf %405, %406 : vector<8x128xf32>
    %408 = arith.negf %407 : vector<8x128xf32>
    %409 = math.exp %408 : vector<8x128xf32>
    %cst_80 = arith.constant 1.000000e+00 : f32
    %410 = vector.broadcast %cst_80 : f32 to vector<8x128xf32>
    %411 = arith.addf %410, %409 : vector<8x128xf32>
    %412 = arith.divf %410, %411 : vector<8x128xf32>
    %413 = math.tanh %407 : vector<8x128xf32>
    %414 = vector.extract_strided_slice %412 {offsets = [0, 0], sizes = [8, 32], strides = [1, 1]} : vector<8x128xf32> to vector<8x32xf32>
    %415 = vector.extract_strided_slice %412 {offsets = [0, 32], sizes = [8, 32], strides = [1, 1]} : vector<8x128xf32> to vector<8x32xf32>
    %416 = vector.extract_strided_slice %413 {offsets = [0, 64], sizes = [8, 32], strides = [1, 1]} : vector<8x128xf32> to vector<8x32xf32>
    %417 = vector.extract_strided_slice %412 {offsets = [0, 96], sizes = [8, 32], strides = [1, 1]} : vector<8x128xf32> to vector<8x32xf32>
    %418 = arith.mulf %415, %397 : vector<8x32xf32>
    %419 = arith.mulf %414, %416 : vector<8x32xf32>
    %420 = arith.addf %418, %419 : vector<8x32xf32>
    %421 = math.tanh %420 : vector<8x32xf32>
    %422 = arith.mulf %417, %421 : vector<8x32xf32>
    %c8_i32 = arith.constant 8 : i32
    %423 = vector.broadcast %c8_i32 : i32 to vector<8x1xi32>
    %424 = arith.cmpi eq, %7, %423 : vector<8x1xi32>
    %425 = vector.shape_cast %424 : vector<8x1xi1> to vector<8x1xi1>
    %426 = vector.broadcast %425 : vector<8x1xi1> to vector<8x32xi1>
    %427 = arith.select %426, %422, %404 : vector<8x32xi1>, vector<8x32xf32>
    %428 = vector.extract_strided_slice %216 {offsets = [72, 0], sizes = [8, 128], strides = [1, 1]} : vector<80x128xf32> to vector<8x128xf32>
    %cst_81 = arith.constant dense<0.000000e+00> : vector<8x128xf32>
    %429 = tpu.matmul %422, %211, %cst_81 {dimension_numbers = #tpu.dot_dimension_numbers<[1], [0], [0], [1], [0, 0, 1, 1], [], []>} : vector<8x32xf32>, vector<32x128xf32>, vector<8x128xf32> -> vector<8x128xf32>
    %430 = arith.addf %428, %429 : vector<8x128xf32>
    %431 = arith.negf %430 : vector<8x128xf32>
    %432 = math.exp %431 : vector<8x128xf32>
    %cst_82 = arith.constant 1.000000e+00 : f32
    %433 = vector.broadcast %cst_82 : f32 to vector<8x128xf32>
    %434 = arith.addf %433, %432 : vector<8x128xf32>
    %435 = arith.divf %433, %434 : vector<8x128xf32>
    %436 = math.tanh %430 : vector<8x128xf32>
    %437 = vector.extract_strided_slice %435 {offsets = [0, 0], sizes = [8, 32], strides = [1, 1]} : vector<8x128xf32> to vector<8x32xf32>
    %438 = vector.extract_strided_slice %435 {offsets = [0, 32], sizes = [8, 32], strides = [1, 1]} : vector<8x128xf32> to vector<8x32xf32>
    %439 = vector.extract_strided_slice %436 {offsets = [0, 64], sizes = [8, 32], strides = [1, 1]} : vector<8x128xf32> to vector<8x32xf32>
    %440 = vector.extract_strided_slice %435 {offsets = [0, 96], sizes = [8, 32], strides = [1, 1]} : vector<8x128xf32> to vector<8x32xf32>
    %441 = arith.mulf %438, %420 : vector<8x32xf32>
    %442 = arith.mulf %437, %439 : vector<8x32xf32>
    %443 = arith.addf %441, %442 : vector<8x32xf32>
    %444 = math.tanh %443 : vector<8x32xf32>
    %445 = arith.mulf %440, %444 : vector<8x32xf32>
    %c9_i32 = arith.constant 9 : i32
    %446 = vector.broadcast %c9_i32 : i32 to vector<8x1xi32>
    %447 = arith.cmpi eq, %7, %446 : vector<8x1xi32>
    %448 = vector.shape_cast %447 : vector<8x1xi1> to vector<8x1xi1>
    %449 = vector.broadcast %448 : vector<8x1xi1> to vector<8x32xi1>
    %450 = arith.select %449, %445, %427 : vector<8x32xi1>, vector<8x32xf32>
    %c0_83 = arith.constant 0 : index
    %c0_84 = arith.constant 0 : index
    %451 = vector.load %arg15[%c0_83, %c0_84] : memref<8x32xf32, #tpu.memory_space<vmem>>, vector<8x32xf32>
    tpu.vector_store %arg15[%c0_83, %c0_84], %450 {strides = array<i32>} : memref<8x32xf32, #tpu.memory_space<vmem>>, vector<8x32xf32>,
    %c0_85 = arith.constant 0 : index
    %c0_86 = arith.constant 0 : index
    %452 = vector.load %arg10[%c0_85, %c0_86] : memref<32x128xf32, #tpu.memory_space<vmem>>, vector<32x128xf32>
    %cst_87 = arith.constant dense<0.000000e+00> : vector<8x128xf32>
    %453 = tpu.matmul %450, %452, %cst_87 {dimension_numbers = #tpu.dot_dimension_numbers<[1], [0], [0], [1], [0, 0, 1, 1], [], []>} : vector<8x32xf32>, vector<32x128xf32>, vector<8x128xf32> -> vector<8x128xf32>
    %c0_88 = arith.constant 0 : index
    %c0_89 = arith.constant 0 : index
    %454 = vector.load %arg11[%c0_88, %c0_89] : memref<1x128xf32, #tpu.memory_space<vmem>>, vector<1x128xf32>
    %455 = vector.broadcast %454 : vector<1x128xf32> to vector<8x128xf32>
    %456 = arith.addf %453, %455 : vector<8x128xf32>
    %cst_90 = arith.constant 0.000000e+00 : f32
    %457 = vector.broadcast %cst_90 : f32 to vector<8x128xf32>
    %458 = arith.maximumf %456, %457 : vector<8x128xf32>
    %c0_91 = arith.constant 0 : index
    %c0_92 = arith.constant 0 : index
    %459 = vector.load %arg12[%c0_91, %c0_92] : memref<128x128xf32, #tpu.memory_space<vmem>>, vector<128x128xf32>
    %cst_93 = arith.constant dense<0.000000e+00> : vector<8x128xf32>
    %460 = tpu.matmul %458, %459, %cst_93 {dimension_numbers = #tpu.dot_dimension_numbers<[1], [0], [0], [1], [0, 0, 1, 1], [], []>} : vector<8x128xf32>, vector<128x128xf32>, vector<8x128xf32> -> vector<8x128xf32>
    %c0_94 = arith.constant 0 : index
    %c0_95 = arith.constant 0 : index
    %461 = vector.load %arg13[%c0_94, %c0_95] : memref<1x128xf32, #tpu.memory_space<vmem>>, vector<1x128xf32>
    %462 = vector.broadcast %461 : vector<1x128xf32> to vector<8x128xf32>
    %463 = arith.addf %460, %462 : vector<8x128xf32>
    %c0_96 = arith.constant 0 : index
    %c0_97 = arith.constant 0 : index
    %464 = vector.load %arg14[%c0_96, %c0_97] : memref<8x128xf32, #tpu.memory_space<vmem>>, vector<8x128xf32>
    tpu.vector_store %arg14[%c0_96, %c0_97], %463 {strides = array<i32>} : memref<8x128xf32, #tpu.memory_space<vmem>>, vector<8x128xf32>,
    return
  }
}

</mosaic_0001>

<llo_original>
// kernel: tpu_custom_call.1
$region0: #{tpu_custom_call.1}
  #allocation0 [shape = 'u32[]', space=smem, size = 0x4, offset = 0x4, fixed_abs, tag = 'smem constant byte address 0x4 - core index']
  #allocation1 [shape = 'u32[144,128]{1,0:T(1,128)}', space=vmem, size = 0x12000, scoped, tag = 'internal scratch']
  #allocation2 [shape = 'f32[80,32]{1,0:T(8,128)}', space=vmem, size = 0xa000, scoped, tag = 'scratch operand']
  %s0 = inlined_call_operand.vmem [shape: f32[80,32], index: 0, kind: input, shape index: {}]
  %s1 = inlined_call_operand.vmem [shape: s32[8,1], index: 1, kind: input, shape index: {}]
  %s2 = inlined_call_operand.hbm [shape: f32[2,8,32], index: 2, kind: input, shape index: {}]
  %s3 = inlined_call_operand.hbm [shape: f32[2,8,32], index: 3, kind: input, shape index: {}]
  %s4 = inlined_call_operand.vmem [shape: f32[32,128], index: 4, kind: input, shape index: {}]
  %s5 = inlined_call_operand.hbm [shape: f32[32,128], index: 5, kind: input, shape index: {}]
  %s6 = inlined_call_operand.vmem [shape: f32[1,128], index: 6, kind: input, shape index: {}]
  %s7 = inlined_call_operand.hbm [shape: f32[32,128], index: 7, kind: input, shape index: {}]
  %s8 = inlined_call_operand.hbm [shape: f32[32,128], index: 8, kind: input, shape index: {}]
  %s9 = inlined_call_operand.vmem [shape: f32[1,128], index: 9, kind: input, shape index: {}]
  %s10 = inlined_call_operand.hbm [shape: f32[32,128], index: 10, kind: input, shape index: {}]
  %s11 = inlined_call_operand.vmem [shape: f32[1,128], index: 11, kind: input, shape index: {}]
  %s12 = inlined_call_operand.vmem [shape: f32[128,128], index: 12, kind: input, shape index: {}]
  %s13 = inlined_call_operand.vmem [shape: f32[1,128], index: 13, kind: input, shape index: {}]
  %s14 = inlined_call_operand.hbm [shape: f32[8,128], index: 14, kind: output, shape index: {0}]
  %s15 = inlined_call_operand.hbm [shape: f32[8,32], index: 15, kind: output, shape index: {1}]
  %16 = xla_tuple %s14, %s15
  %s17 = sld [smem:[#allocation0]]
  $region98: #{tpu_custom_call.1} parent=0
    _
  %s19 = ssub.s32 1, %s17
  %s20 = scalar_select 0, %s19, %s17
  $region1: #{tpu_custom_call.1} parent=0
    #allocation3 [shape = 'u8[8192]{0}', space=vmem, size = 0x2000, scoped, tag = 'input window, operand 2, single buffered']
    #allocation4 [shape = 's32[1]{0}', space=sflag, size = 0x4, scoped, tag = 'scoped memory for tpu_custom_call.1']
    #allocation5 [shape = 's32[1]{0}', space=sflag, size = 0x4, scoped, tag = 'scoped memory for tpu_custom_call.1']
    #allocation6 [shape = 'u8[8192]{0}', space=vmem, size = 0x2000, scoped, tag = 'input window, operand 3, single buffered']
    #allocation7 [shape = 's32[1]{0}', space=sflag, size = 0x4, scoped, tag = 'scoped memory for tpu_custom_call.1']
    #allocation8 [shape = 'u8[16384]{0}', space=vmem, size = 0x4000, scoped, tag = 'input window, operand 5, single buffered']
    #allocation9 [shape = 'u8[16384]{0}', space=vmem, size = 0x4000, scoped, tag = 'input window, operand 7, single buffered']
    #allocation10 [shape = 's32[1]{0}', space=sflag, size = 0x4, scoped, tag = 'scoped memory for tpu_custom_call.1']
    #allocation11 [shape = 'u8[16384]{0}', space=vmem, size = 0x4000, scoped, tag = 'input window, operand 8, single buffered']
    #allocation12 [shape = 'u8[16384]{0}', space=vmem, size = 0x4000, scoped, tag = 'input window, operand 10, single buffered']
    #allocation13 [shape = 's32[1]{0}', space=sflag, size = 0x4, scoped, tag = 'scoped memory for tpu_custom_call.1']
    #allocation14 [shape = 'u8[4096]{0}', space=vmem, size = 0x1000, scoped, tag = 'output window, operand 0, single buffered']
    #allocation15 [shape = 'u8[4096]{0}', space=vmem, size = 0x1000, scoped, tag = 'output window, operand 1, single buffered']
    #allocation16 [shape = 's32[1]{0}', space=sflag, size = 0x4, scoped, tag = 'scoped memory for tpu_custom_call.1']
    %21 = vsyncpa [#allocation4], 0
    %22 = vsyncpa [#allocation7], 0
    %23 = vsyncpa [#allocation10], 0
    %24 = vsyncpa [#allocation13], 0
    %25 = vsyncpa [#allocation5], 0
    %26 = vsyncpa [#allocation16], 0
    // Predicated region
    $region2: #{tpu_custom_call.1} parent=1 // pred_check
      _
    $region3: #{tpu_custom_call.1} parent=1 // pred_check_branch
      %28 = sbr.rel (0) target = $region5
    $region4: #{tpu_custom_call.1} parent=1 // pred_region
      _
    $region5: #{tpu_custom_call.1} parent=1 // pred_fallthru
      _
    // Predicated region
    $region6: #{tpu_custom_call.1} parent=1 // pred_check
      _
    $region7: #{tpu_custom_call.1} parent=1 // pred_check_branch
      %30 = sbr.rel (0) target = $region9
    $region8: #{tpu_custom_call.1} parent=1 // pred_region
      _
    $region9: #{tpu_custom_call.1} parent=1 // pred_fallthru
      _
    // Predicated region
    $region10: #{tpu_custom_call.1} parent=1 // pred_check
      _
    $region11: #{tpu_custom_call.1} parent=1 // pred_check_branch
      %32 = sbr.rel (0) target = $region13
    $region12: #{tpu_custom_call.1} parent=1 // pred_region
      %s34 = ssub.s32 256, 256
      %35 = vsyncadd [#allocation4], %s34
      %s36 = sshll.u32 [#allocation3], 4
      %s37 = int_to_ptr.vmem [resolvable:$true] %s36
      %42 = dma.hbm_to_vmem [thread:$0]  %s2, 256, %s37, [#allocation4], 128, 128, 8
    $region13: #{tpu_custom_call.1} parent=1 // pred_fallthru
      _
    // Predicated region
    $region14: #{tpu_custom_call.1} parent=1 // pred_check
      _
    $region15: #{tpu_custom_call.1} parent=1 // pred_check_branch
      %44 = sbr.rel (0) target = $region17
    $region16: #{tpu_custom_call.1} parent=1 // pred_region
      %s46 = ssub.s32 256, 256
      %47 = vsyncadd [#allocation7], %s46
      %s48 = sshll.u32 [#allocation6], 4
      %s49 = int_to_ptr.vmem [resolvable:$true] %s48
      %54 = dma.hbm_to_vmem [thread:$0]  %s3, 256, %s49, [#allocation7], 128, 128, 8
    $region17: #{tpu_custom_call.1} parent=1 // pred_fallthru
      _
    // Predicated region
    $region18: #{tpu_custom_call.1} parent=1 // pred_check
      _
    $region19: #{tpu_custom_call.1} parent=1 // pred_check_branch
      %56 = sbr.rel (0) target = $region21
    $region20: #{tpu_custom_call.1} parent=1 // pred_region
      _
    $region21: #{tpu_custom_call.1} parent=1 // pred_fallthru
      _
    // Predicated region
    $region22: #{tpu_custom_call.1} parent=1 // pred_check
      _
    $region23: #{tpu_custom_call.1} parent=1 // pred_check_branch
      %58 = sbr.rel (0) target = $region25
    $region24: #{tpu_custom_call.1} parent=1 // pred_region
      %s60 = ssub.s32 512, 512
      %61 = vsyncadd [#allocation7], %s60
      %s62 = sshll.u32 [#allocation8], 4
      %s63 = int_to_ptr.vmem [resolvable:$true] %s62
      %68 = dma.hbm_to_vmem [thread:$0]  %s5, 512, %s63, [#allocation7], 128, 128, 8
    $region25: #{tpu_custom_call.1} parent=1 // pred_fallthru
      _
    // Predicated region
    $region26: #{tpu_custom_call.1} parent=1 // pred_check
      _
    $region27: #{tpu_custom_call.1} parent=1 // pred_check_branch
      %70 = sbr.rel (0) target = $region29
    $region28: #{tpu_custom_call.1} parent=1 // pred_region
      _
    $region29: #{tpu_custom_call.1} parent=1 // pred_fallthru
      _
    // Predicated region
    $region30: #{tpu_custom_call.1} parent=1 // pred_check
      _
    $region31: #{tpu_custom_call.1} parent=1 // pred_check_branch
      %72 = sbr.rel (0) target = $region33
    $region32: #{tpu_custom_call.1} parent=1 // pred_region
      %s74 = ssub.s32 512, 512
      %75 = vsyncadd [#allocation10], %s74
      %s76 = sshll.u32 [#allocation9], 4
      %s77 = int_to_ptr.vmem [resolvable:$true] %s76
      %82 = dma.hbm_to_vmem [thread:$0]  %s7, 512, %s77, [#allocation10], 128, 128, 8
    $region33: #{tpu_custom_call.1} parent=1 // pred_fallthru
      _
    // Predicated region
    $region34: #{tpu_custom_call.1} parent=1 // pred_check
      _
    $region35: #{tpu_custom_call.1} parent=1 // pred_check_branch
      %84 = sbr.rel (0) target = $region37
    $region36: #{tpu_custom_call.1} parent=1 // pred_region
      %s86 = ssub.s32 512, 512
      %87 = vsyncadd [#allocation10], %s86
      %s88 = sshll.u32 [#allocation11], 4
      %s89 = int_to_ptr.vmem [resolvable:$true] %s88
      %94 = dma.hbm_to_vmem [thread:$0]  %s8, 512, %s89, [#allocation10], 128, 128, 8
    $region37: #{tpu_custom_call.1} parent=1 // pred_fallthru
      _
    // Predicated region
    $region38: #{tpu_custom_call.1} parent=1 // pred_check
      _
    $region39: #{tpu_custom_call.1} parent=1 // pred_check_branch
      %96 = sbr.rel (0) target = $region41
    $region40: #{tpu_custom_call.1} parent=1 // pred_region
      _
    $region41: #{tpu_custom_call.1} parent=1 // pred_fallthru
      _
    // Predicated region
    $region42: #{tpu_custom_call.1} parent=1 // pred_check
      _
    $region43: #{tpu_custom_call.1} parent=1 // pred_check_branch
      %98 = sbr.rel (0) target = $region45
    $region44: #{tpu_custom_call.1} parent=1 // pred_region
      %s100 = ssub.s32 512, 512
      %101 = vsyncadd [#allocation13], %s100
      %s102 = sshll.u32 [#allocation12], 4
      %s103 = int_to_ptr.vmem [resolvable:$true] %s102
      %108 = dma.hbm_to_vmem [thread:$0]  %s10, 512, %s103, [#allocation13], 128, 128, 8
    $region45: #{tpu_custom_call.1} parent=1 // pred_fallthru
      _
    // Predicated region
    $region46: #{tpu_custom_call.1} parent=1 // pred_check
      _
    $region47: #{tpu_custom_call.1} parent=1 // pred_check_branch
      %110 = sbr.rel (0) target = $region49
    $region48: #{tpu_custom_call.1} parent=1 // pred_region
      _
    $region49: #{tpu_custom_call.1} parent=1 // pred_fallthru
      _
    // Predicated region
    $region50: #{tpu_custom_call.1} parent=1 // pred_check
      _
    $region51: #{tpu_custom_call.1} parent=1 // pred_check_branch
      %112 = sbr.rel (0) target = $region53
    $region52: #{tpu_custom_call.1} parent=1 // pred_region
      _
    $region53: #{tpu_custom_call.1} parent=1 // pred_fallthru
      _
    // Predicated region
    $region54: #{tpu_custom_call.1} parent=1 // pred_check
      _
    $region55: #{tpu_custom_call.1} parent=1 // pred_check_branch
      %114 = sbr.rel (0) target = $region57
    $region56: #{tpu_custom_call.1} parent=1 // pred_region
      _
    $region57: #{tpu_custom_call.1} parent=1 // pred_fallthru
      _
    // Predicated region
    $region58: #{tpu_custom_call.1} parent=1 // pred_check
      _
    $region59: #{tpu_custom_call.1} parent=1 // pred_check_branch
      %116 = sbr.rel (0) target = $region61
    $region60: #{tpu_custom_call.1} parent=1 // pred_region
      %117 = dma.done [#allocation4], 256
    $region61: #{tpu_custom_call.1} parent=1 // pred_fallthru
      _
    // Predicated region
    $region62: #{tpu_custom_call.1} parent=1 // pred_check
      _
    $region63: #{tpu_custom_call.1} parent=1 // pred_check_branch
      %119 = sbr.rel (0) target = $region65
    $region64: #{tpu_custom_call.1} parent=1 // pred_region
      %120 = dma.done [#allocation7], 256
    $region65: #{tpu_custom_call.1} parent=1 // pred_fallthru
      _
    // Predicated region
    $region66: #{tpu_custom_call.1} parent=1 // pred_check
      _
    $region67: #{tpu_custom_call.1} parent=1 // pred_check_branch
      %122 = sbr.rel (0) target = $region69
    $region68: #{tpu_custom_call.1} parent=1 // pred_region
      %123 = dma.done [#allocation7], 512
    $region69: #{tpu_custom_call.1} parent=1 // pred_fallthru
      _
    // Predicated region
    $region70: #{tpu_custom_call.1} parent=1 // pred_check
      _
    $region71: #{tpu_custom_call.1} parent=1 // pred_check_branch
      %125 = sbr.rel (0) target = $region73
    $region72: #{tpu_custom_call.1} parent=1 // pred_region
      %126 = dma.done [#allocation10], 512
    $region73: #{tpu_custom_call.1} parent=1 // pred_fallthru
      _
    // Predicated region
    $region74: #{tpu_custom_call.1} parent=1 // pred_check
      _
    $region75: #{tpu_custom_call.1} parent=1 // pred_check_branch
      %128 = sbr.rel (0) target = $region77
    $region76: #{tpu_custom_call.1} parent=1 // pred_region
      %129 = dma.done [#allocation10], 512
    $region77: #{tpu_custom_call.1} parent=1 // pred_fallthru
      _
    // Predicated region
    $region78: #{tpu_custom_call.1} parent=1 // pred_check
      _
    $region79: #{tpu_custom_call.1} parent=1 // pred_check_branch
      %131 = sbr.rel (0) target = $region81
    $region80: #{tpu_custom_call.1} parent=1 // pred_region
      %132 = dma.done [#allocation13], 512
    $region81: #{tpu_custom_call.1} parent=1 // pred_fallthru
      _
    %v133 = vld [vmem:[%s1] sm:$0xff]
    %v134 = vsub.s32 %v133, 2
    %vm135 = vcmp.lt.s32.totalorder %v134, 0
    %v136 = vadd.s32 %v134, 10
    %v137 = vsel %vm135, %v136, %v134
    %v138 = vld [vmem:[%s4] sm:$0xff]
    %v139 = vld [vmem:[%s4 + $0x8] sm:$0xff]
    %v140 = vld [vmem:[%s4 + $0x10] sm:$0xff]
    %v141 = vld [vmem:[%s4 + $0x18] sm:$0xff]
    %v142 = vld [vmem:[#allocation8] sm:$0xff]
    %v143 = vld [vmem:[#allocation8 + $0x8] sm:$0xff]
    %v144 = vld [vmem:[#allocation8 + $0x10] sm:$0xff]
    %v145 = vld [vmem:[#allocation8 + $0x18] sm:$0xff]
    %v146 = vld [vmem:[%s6] sm:$0x1]
    %v147 = vld [vmem:[%s0] sm:$0xff]
    %v148 = vld [vmem:[%s0 + $0x8] sm:$0xff]
    %v149 = vld [vmem:[%s0 + $0x10] sm:$0xff]
    %v150 = vld [vmem:[%s0 + $0x18] sm:$0xff]
    %v151 = vld [vmem:[%s0 + $0x20] sm:$0xff]
    %v152 = vld [vmem:[%s0 + $0x28] sm:$0xff]
    %v153 = vld [vmem:[%s0 + $0x30] sm:$0xff]
    %v154 = vld [vmem:[%s0 + $0x38] sm:$0xff]
    %v155 = vld [vmem:[%s0 + $0x40] sm:$0xff]
    %v156 = vld [vmem:[%s0 + $0x48] sm:$0xff]
    %v158 = vlaneseq
    %v159 = vshrl.u32 %v158, 7
    %v160 = vsub.s32 0, %v159
    %v161 = vrot.slane %v146, %v160
    %vm163 = vcmask 261120
    %v165 = vsel %vm163, %v147, 0
    %v168 = vsel %vm163, %v148, 0
    %v171 = vsel %vm163, %v149, 0
    %v174 = vsel %vm163, %v150, 0
    %v177 = vsel %vm163, %v151, 0
    %v180 = vsel %vm163, %v152, 0
    %v183 = vsel %vm163, %v153, 0
    %v186 = vsel %vm163, %v154, 0
    %v189 = vsel %vm163, %v155, 0
    %v192 = vsel %vm163, %v156, 0
    %194 = vmatprep.subr.mxu0 0.0
    %195 = vmatpush1.msra.mxu0 %v138
    %196 = vmatprep.subr.mxu0 0.0
    %197 = vmatpush1.msra.mxu0 %v139
    %198 = vmatprep.subr.mxu0 0.0
    %199 = vmatpush1.msra.mxu0 %v140
    %200 = vmatprep.subr.mxu0 0.0
    %201 = vmatpush1.msra.mxu0 %v141
    %202 = vmatprep.subr.mxu0 0.0
    %203 = vmatpush1.msra.mxu0 0.0
    %204 = vmatprep.subr.mxu0 0.0
    %205 = vmatpush1.msra.mxu0 0.0
    %206 = vmatprep.subr.mxu0 0.0
    %207 = vmatpush1.msra.mxu0 0.0
    %208 = vmatprep.subr.mxu0 0.0
    %209 = vmatpush1.msra.mxu0 0.0
    %210 = vmatprep.subr.mxu0 0.0
    %211 = vmatpush1.msra.mxu0 0.0
    %212 = vmatprep.subr.mxu0 0.0
    %213 = vmatpush1.msra.mxu0 0.0
    %214 = vmatprep.subr.mxu0 0.0
    %215 = vmatpush1.msra.mxu0 0.0
    %216 = vmatprep.subr.mxu0 0.0
    %217 = vmatpush1.msra.mxu0 0.0
    %218 = vmatprep.subr.mxu0 0.0
    %219 = vmatpush1.msra.mxu0 0.0
    %220 = vmatprep.subr.mxu0 0.0
    %221 = vmatpush1.msra.mxu0 0.0
    %222 = vmatprep.subr.mxu0 0.0
    %223 = vmatpush1.msra.mxu0 0.0
    %224 = vmatprep.subr.mxu0 0.0
    %225 = vmatpush1.msra.mxu0 0.0
    %226 = vmatprep.subr.mxu0 0.0
    %227 = vmatpush1.msra.mxu0 0.0
    %228 = vmatprep.subr.mxu0 0.0
    %229 = vmatpush1.msra.mxu0 0.0
    %230 = vmatprep.subr.mxu0 0.0
    %231 = vmatpush1.msra.mxu0 0.0
    %232 = vmatprep.subr.mxu0 0.0
    %233 = vmatpush1.msra.mxu0 0.0
    %234 = vmatprep.subr.mxu0 0.0
    %235 = vmatpush1.msra.mxu0 0.0
    %236 = vmatprep.subr.mxu0 0.0
    %237 = vmatpush1.msra.mxu0 0.0
    %238 = vmatprep.subr.mxu0 0.0
    %239 = vmatpush1.msra.mxu0 0.0
    %240 = vmatprep.subr.mxu0 0.0
    %241 = vmatpush1.msra.mxu0 0.0
    %242 = vmatprep.subr.mxu0 0.0
    %243 = vmatpush1.msra.mxu0 0.0
    %244 = vmatprep.subr.mxu0 0.0
    %245 = vmatpush1.msra.mxu0 0.0
    %246 = vmatprep.subr.mxu0 0.0
    %247 = vmatpush1.msra.mxu0 0.0
    %248 = vmatprep.subr.mxu0 0.0
    %249 = vmatpush1.msra.mxu0 0.0
    %250 = vmatprep.subr.mxu0 0.0
    %251 = vmatpush1.msra.mxu0 0.0
    %252 = vmatprep.subr.mxu0 0.0
    %253 = vmatpush1.msra.mxu0 0.0
    %254 = vmatprep.subr.mxu0 0.0
    %255 = vmatpush1.msra.mxu0 0.0
    %256 = vmatprep.subr.mxu0 0.0
    %257 = vmatpush1.msra.mxu0 0.0
    %258 = vmatprep.mubr.f32.mxu0 0.0
    %259 = vmatmul.mubr.f32.gmra.mrb[0].mxu0 %v165
    %v260 = vpop.f32.mrb[0].mxu0
    %v261 = vadd.f32 %v161, %v260
    %v262 = vpop.f32.mrb[0].mxu0
    %263 = vmatprep.mubr.f32.mxu0 0.0
    %264 = vmatmul.mubr.f32.gmra.mrb[0].mxu0 %v168
    %v265 = vpop.f32.mrb[0].mxu0
    %v266 = vadd.f32 %v161, %v265
    %v267 = vpop.f32.mrb[0].mxu0
    %268 = vmatprep.mubr.f32.mxu0 0.0
    %269 = vmatmul.mubr.f32.gmra.mrb[0].mxu0 %v171
    %v270 = vpop.f32.mrb[0].mxu0
    %v271 = vadd.f32 %v161, %v270
    %v272 = vpop.f32.mrb[0].mxu0
    %273 = vmatprep.mubr.f32.mxu0 0.0
    %274 = vmatmul.mubr.f32.gmra.mrb[0].mxu0 %v174
    %v275 = vpop.f32.mrb[0].mxu0
    %v276 = vadd.f32 %v161, %v275
    %v277 = vpop.f32.mrb[0].mxu0
    %278 = vmatprep.mubr.f32.mxu0 0.0
    %279 = vmatmul.mubr.f32.gmra.mrb[0].mxu0 %v177
    %v280 = vpop.f32.mrb[0].mxu0
    %v281 = vadd.f32 %v161, %v280
    %v282 = vpop.f32.mrb[0].mxu0
    %283 = vmatprep.mubr.f32.mxu0 0.0
    %284 = vmatmul.mubr.f32.gmra.mrb[0].mxu0 %v180
    %v285 = vpop.f32.mrb[0].mxu0
    %v286 = vadd.f32 %v161, %v285
    %v287 = vpop.f32.mrb[0].mxu0
    %288 = vmatprep.mubr.f32.mxu0 0.0
    %289 = vmatmul.mubr.f32.gmra.mrb[0].mxu0 %v183
    %v290 = vpop.f32.mrb[0].mxu0
    %v291 = vadd.f32 %v161, %v290
    %v292 = vpop.f32.mrb[0].mxu0
    %293 = vmatprep.mubr.f32.mxu0 0.0
    %294 = vmatmul.mubr.f32.gmra.mrb[0].mxu0 %v186
    %v295 = vpop.f32.mrb[0].mxu0
    %v296 = vadd.f32 %v161, %v295
    %v297 = vpop.f32.mrb[0].mxu0
    %298 = vmatprep.mubr.f32.mxu0 0.0
    %299 = vmatmul.mubr.f32.gmra.mrb[0].mxu0 %v189
    %v300 = vpop.f32.mrb[0].mxu0
    %v301 = vadd.f32 %v161, %v300
    %v302 = vpop.f32.mrb[0].mxu0
    %303 = vmatprep.mubr.f32.mxu0 0.0
    %304 = vmatmul.mubr.f32.gmra.mrb[0].mxu0 %v192
    %v305 = vpop.f32.mrb[0].mxu0
    %v306 = vadd.f32 %v161, %v305
    %v307 = vpop.f32.mrb[0].mxu0
    %308 = vdwg.mxu0
    %v309 = vld [vmem:[#allocation3] sm:$0xff]
    %v310 = vld [vmem:[#allocation6] sm:$0xff]
    %v312 = vsel %vm163, %v309, 0
    %314 = vmatprep.subr.mxu0 0.0
    %315 = vmatpush1.msra.mxu0 %v142
    %316 = vmatprep.subr.mxu0 0.0
    %317 = vmatpush1.msra.mxu0 %v143
    %318 = vmatprep.subr.mxu0 0.0
    %319 = vmatpush1.msra.mxu0 %v144
    %320 = vmatprep.subr.mxu0 0.0
    %321 = vmatpush1.msra.mxu0 %v145
    %322 = vmatprep.subr.mxu0 0.0
    %323 = vmatpush1.msra.mxu0 0.0
    %324 = vmatprep.subr.mxu0 0.0
    %325 = vmatpush1.msra.mxu0 0.0
    %326 = vmatprep.subr.mxu0 0.0
    %327 = vmatpush1.msra.mxu0 0.0
    %328 = vmatprep.subr.mxu0 0.0
    %329 = vmatpush1.msra.mxu0 0.0
    %330 = vmatprep.subr.mxu0 0.0
    %331 = vmatpush1.msra.mxu0 0.0
    %332 = vmatprep.subr.mxu0 0.0
    %333 = vmatpush1.msra.mxu0 0.0
    %334 = vmatprep.subr.mxu0 0.0
    %335 = vmatpush1.msra.mxu0 0.0
    %336 = vmatprep.subr.mxu0 0.0
    %337 = vmatpush1.msra.mxu0 0.0
    %338 = vmatprep.subr.mxu0 0.0
    %339 = vmatpush1.msra.mxu0 0.0
    %340 = vmatprep.subr.mxu0 0.0
    %341 = vmatpush1.msra.mxu0 0.0
    %342 = vmatprep.subr.mxu0 0.0
    %343 = vmatpush1.msra.mxu0 0.0
    %344 = vmatprep.subr.mxu0 0.0
    %345 = vmatpush1.msra.mxu0 0.0
    %346 = vmatprep.subr.mxu0 0.0
    %347 = vmatpush1.msra.mxu0 0.0
    %348 = vmatprep.subr.mxu0 0.0
    %349 = vmatpush1.msra.mxu0 0.0
    %350 = vmatprep.subr.mxu0 0.0
    %351 = vmatpush1.msra.mxu0 0.0
    %352 = vmatprep.subr.mxu0 0.0
    %353 = vmatpush1.msra.mxu0 0.0
    %354 = vmatprep.subr.mxu0 0.0
    %355 = vmatpush1.msra.mxu0 0.0
    %356 = vmatprep.subr.mxu0 0.0
    %357 = vmatpush1.msra.mxu0 0.0
    %358 = vmatprep.subr.mxu0 0.0
    %359 = vmatpush1.msra.mxu0 0.0
    %360 = vmatprep.subr.mxu0 0.0
    %361 = vmatpush1.msra.mxu0 0.0
    %362 = vmatprep.subr.mxu0 0.0
    %363 = vmatpush1.msra.mxu0 0.0
    %364 = vmatprep.subr.mxu0 0.0
    %365 = vmatpush1.msra.mxu0 0.0
    %366 = vmatprep.subr.mxu0 0.0
    %367 = vmatpush1.msra.mxu0 0.0
    %368 = vmatprep.subr.mxu0 0.0
    %369 = vmatpush1.msra.mxu0 0.0
    %370 = vmatprep.subr.mxu0 0.0
    %371 = vmatpush1.msra.mxu0 0.0
    %372 = vmatprep.subr.mxu0 0.0
    %373 = vmatpush1.msra.mxu0 0.0
    %374 = vmatprep.subr.mxu0 0.0
    %375 = vmatpush1.msra.mxu0 0.0
    %376 = vmatprep.subr.mxu0 0.0
    %377 = vmatpush1.msra.mxu0 0.0
    %378 = vmatprep.mubr.f32.mxu0 0.0
    %379 = vmatmul.mubr.f32.gmra.mrb[0].mxu0 %v312
    %v380 = vpop.f32.mrb[0].mxu0
    %v381 = vadd.f32 0.0, %v380
    %v382 = vpop.f32.mrb[0].mxu0
    %383 = vdwg.mxu0
    %v384 = vadd.f32 %v261, %v381
    %v385 = vxor.u32 %v384, 2147483648
    %v386 = vmul.f32 %v385, 1.442695
    %v387 = vpow.pop %v386
    %v388 = vadd.f32 %v387, 1.0
    %v389 = vrcp.pop %v388
    %v390 = vmul.f32 1.0, %v389
    %v391 = vtanh.pop %v384
    %393 = vrot.lane.b32.xlu0 %v310, 32
    %v394 = vpop.permute.xlu0 %393
    %v396 = vmul.f32 %v390, %v394
    %398 = vrot.lane.b32.xlu0 %v391, 64
    %v399 = vpop.permute.xlu0 %398
    %v401 = vmul.f32 %v390, %v399
    %403 = vrot.lane.b32.xlu0 %v401, 32
    %v404 = vpop.permute.xlu0 %403
    %v406 = vadd.f32 %v396, %v404
    %v407 = vtanh.pop %v406
    %409 = vrot.lane.b32.xlu0 %v407, 64
    %v410 = vpop.permute.xlu0 %409
    %v412 = vmul.f32 %v390, %v410
    %414 = vrot.lane.b32.xlu0 %v412, 32
    %v415 = vpop.permute.xlu0 %414
    %417 = vst.msk [vmem:[#allocation2] sm:$0xff] %vm163, %v415
    %v418 = vsel %vm163, %v415, 0
    %420 = vmatprep.subr.mxu0 0.0
    %421 = vmatpush1.msra.mxu0 %v142
    %422 = vmatprep.subr.mxu0 0.0
    %423 = vmatpush1.msra.mxu0 %v143
    %424 = vmatprep.subr.mxu0 0.0
    %425 = vmatpush1.msra.mxu0 %v144
    %426 = vmatprep.subr.mxu0 0.0
    %427 = vmatpush1.msra.mxu0 %v145
    %428 = vmatprep.subr.mxu0 0.0
    %429 = vmatpush1.msra.mxu0 0.0
    %430 = vmatprep.subr.mxu0 0.0
    %431 = vmatpush1.msra.mxu0 0.0
    %432 = vmatprep.subr.mxu0 0.0
    %433 = vmatpush1.msra.mxu0 0.0
    %434 = vmatprep.subr.mxu0 0.0
    %435 = vmatpush1.msra.mxu0 0.0
    %436 = vmatprep.subr.mxu0 0.0
    %437 = vmatpush1.msra.mxu0 0.0
    %438 = vmatprep.subr.mxu0 0.0
    %439 = vmatpush1.msra.mxu0 0.0
    %440 = vmatprep.subr.mxu0 0.0
    %441 = vmatpush1.msra.mxu0 0.0
    %442 = vmatprep.subr.mxu0 0.0
    %443 = vmatpush1.msra.mxu0 0.0
    %444 = vmatprep.subr.mxu0 0.0
    %445 = vmatpush1.msra.mxu0 0.0
    %446 = vmatprep.subr.mxu0 0.0
    %447 = vmatpush1.msra.mxu0 0.0
    %448 = vmatprep.subr.mxu0 0.0
    %449 = vmatpush1.msra.mxu0 0.0
    %450 = vmatprep.subr.mxu0 0.0
    %451 = vmatpush1.msra.mxu0 0.0
    %452 = vmatprep.subr.mxu0 0.0
    %453 = vmatpush1.msra.mxu0 0.0
    %454 = vmatprep.subr.mxu0 0.0
    %455 = vmatpush1.msra.mxu0 0.0
    %456 = vmatprep.subr.mxu0 0.0
    %457 = vmatpush1.msra.mxu0 0.0
    %458 = vmatprep.subr.mxu0 0.0
    %459 = vmatpush1.msra.mxu0 0.0
    %460 = vmatprep.subr.mxu0 0.0
    %461 = vmatpush1.msra.mxu0 0.0
    %462 = vmatprep.subr.mxu0 0.0
    %463 = vmatpush1.msra.mxu0 0.0
    %464 = vmatprep.subr.mxu0 0.0
    %465 = vmatpush1.msra.mxu0 0.0
    %466 = vmatprep.subr.mxu0 0.0
    %467 = vmatpush1.msra.mxu0 0.0
    %468 = vmatprep.subr.mxu0 0.0
    %469 = vmatpush1.msra.mxu0 0.0
    %470 = vmatprep.subr.mxu0 0.0
    %471 = vmatpush1.msra.mxu0 0.0
    %472 = vmatprep.subr.mxu0 0.0
    %473 = vmatpush1.msra.mxu0 0.0
    %474 = vmatprep.subr.mxu0 0.0
    %475 = vmatpush1.msra.mxu0 0.0
    %476 = vmatprep.subr.mxu0 0.0
    %477 = vmatpush1.msra.mxu0 0.0
    %478 = vmatprep.subr.mxu0 0.0
    %479 = vmatpush1.msra.mxu0 0.0
    %480 = vmatprep.subr.mxu0 0.0
    %481 = vmatpush1.msra.mxu0 0.0
    %482 = vmatprep.subr.mxu0 0.0
    %483 = vmatpush1.msra.mxu0 0.0
    %484 = vmatprep.mubr.f32.mxu0 0.0
    %485 = vmatmul.mubr.f32.gmra.mrb[0].mxu0 %v418
    %v486 = vpop.f32.mrb[0].mxu0
    %v487 = vadd.f32 0.0, %v486
    %v488 = vpop.f32.mrb[0].mxu0
    %489 = vdwg.mxu0
    %v490 = vadd.f32 %v266, %v487
    %v491 = vxor.u32 %v490, 2147483648
    %v492 = vmul.f32 %v491, 1.442695
    %v493 = vpow.pop %v492
    %v494 = vadd.f32 %v493, 1.0
    %v495 = vrcp.pop %v494
    %v496 = vmul.f32 1.0, %v495
    %v497 = vtanh.pop %v490
    %v498 = vmul.f32 %v496, %v406
    %500 = vrot.lane.b32.xlu0 %v497, 64
    %v501 = vpop.permute.xlu0 %500
    %v503 = vmul.f32 %v496, %v501
    %505 = vrot.lane.b32.xlu0 %v503, 32
    %v506 = vpop.permute.xlu0 %505
    %v508 = vadd.f32 %v498, %v506
    %v509 = vtanh.pop %v508
    %511 = vrot.lane.b32.xlu0 %v509, 64
    %v512 = vpop.permute.xlu0 %511
    %v514 = vmul.f32 %v496, %v512
    %516 = vrot.lane.b32.xlu0 %v514, 32
    %v517 = vpop.permute.xlu0 %516
    %519 = vst.msk [vmem:[#allocation2 + $0x8] sm:$0xff] %vm163, %v517
    %v520 = vsel %vm163, %v517, 0
    %522 = vmatprep.subr.mxu0 0.0
    %523 = vmatpush1.msra.mxu0 %v142
    %524 = vmatprep.subr.mxu0 0.0
    %525 = vmatpush1.msra.mxu0 %v143
    %526 = vmatprep.subr.mxu0 0.0
    %527 = vmatpush1.msra.mxu0 %v144
    %528 = vmatprep.subr.mxu0 0.0
    %529 = vmatpush1.msra.mxu0 %v145
    %530 = vmatprep.subr.mxu0 0.0
    %531 = vmatpush1.msra.mxu0 0.0
    %532 = vmatprep.subr.mxu0 0.0
    %533 = vmatpush1.msra.mxu0 0.0
    %534 = vmatprep.subr.mxu0 0.0
    %535 = vmatpush1.msra.mxu0 0.0
    %536 = vmatprep.subr.mxu0 0.0
    %537 = vmatpush1.msra.mxu0 0.0
    %538 = vmatprep.subr.mxu0 0.0
    %539 = vmatpush1.msra.mxu0 0.0
    %540 = vmatprep.subr.mxu0 0.0
    %541 = vmatpush1.msra.mxu0 0.0
    %542 = vmatprep.subr.mxu0 0.0
    %543 = vmatpush1.msra.mxu0 0.0
    %544 = vmatprep.subr.mxu0 0.0
    %545 = vmatpush1.msra.mxu0 0.0
    %546 = vmatprep.subr.mxu0 0.0
    %547 = vmatpush1.msra.mxu0 0.0
    %548 = vmatprep.subr.mxu0 0.0
    %549 = vmatpush1.msra.mxu0 0.0
    %550 = vmatprep.subr.mxu0 0.0
    %551 = vmatpush1.msra.mxu0 0.0
    %552 = vmatprep.subr.mxu0 0.0
    %553 = vmatpush1.msra.mxu0 0.0
    %554 = vmatprep.subr.mxu0 0.0
    %555 = vmatpush1.msra.mxu0 0.0
    %556 = vmatprep.subr.mxu0 0.0
    %557 = vmatpush1.msra.mxu0 0.0
    %558 = vmatprep.subr.mxu0 0.0
    %559 = vmatpush1.msra.mxu0 0.0
    %560 = vmatprep.subr.mxu0 0.0
    %561 = vmatpush1.msra.mxu0 0.0
    %562 = vmatprep.subr.mxu0 0.0
    %563 = vmatpush1.msra.mxu0 0.0
    %564 = vmatprep.subr.mxu0 0.0
    %565 = vmatpush1.msra.mxu0 0.0
    %566 = vmatprep.subr.mxu0 0.0
    %567 = vmatpush1.msra.mxu0 0.0
    %568 = vmatprep.subr.mxu0 0.0
    %569 = vmatpush1.msra.mxu0 0.0
    %570 = vmatprep.subr.mxu0 0.0
    %571 = vmatpush1.msra.mxu0 0.0
    %572 = vmatprep.subr.mxu0 0.0
    %573 = vmatpush1.msra.mxu0 0.0
    %574 = vmatprep.subr.mxu0 0.0
    %575 = vmatpush1.msra.mxu0 0.0
    %576 = vmatprep.subr.mxu0 0.0
    %577 = vmatpush1.msra.mxu0 0.0
    %578 = vmatprep.subr.mxu0 0.0
    %579 = vmatpush1.msra.mxu0 0.0
    %580 = vmatprep.subr.mxu0 0.0
    %581 = vmatpush1.msra.mxu0 0.0
    %582 = vmatprep.subr.mxu0 0.0
    %583 = vmatpush1.msra.mxu0 0.0
    %584 = vmatprep.subr.mxu0 0.0
    %585 = vmatpush1.msra.mxu0 0.0
    %586 = vmatprep.mubr.f32.mxu0 0.0
    %587 = vmatmul.mubr.f32.gmra.mrb[0].mxu0 %v520
    %v588 = vpop.f32.mrb[0].mxu0
    %v589 = vadd.f32 0.0, %v588
    %v590 = vpop.f32.mrb[0].mxu0
    %591 = vdwg.mxu0
    %v592 = vadd.f32 %v271, %v589
    %v593 = vxor.u32 %v592, 2147483648
    %v594 = vmul.f32 %v593, 1.442695
    %v595 = vpow.pop %v594
    %v596 = vadd.f32 %v595, 1.0
    %v597 = vrcp.pop %v596
    %v598 = vmul.f32 1.0, %v597
    %v599 = vtanh.pop %v592
    %v600 = vmul.f32 %v598, %v508
    %602 = vrot.lane.b32.xlu0 %v599, 64
    %v603 = vpop.permute.xlu0 %602
    %v605 = vmul.f32 %v598, %v603
    %607 = vrot.lane.b32.xlu0 %v605, 32
    %v608 = vpop.permute.xlu0 %607
    %v610 = vadd.f32 %v600, %v608
    %v611 = vtanh.pop %v610
    %613 = vrot.lane.b32.xlu0 %v611, 64
    %v614 = vpop.permute.xlu0 %613
    %v616 = vmul.f32 %v598, %v614
    %618 = vrot.lane.b32.xlu0 %v616, 32
    %v619 = vpop.permute.xlu0 %618
    %621 = vst.msk [vmem:[#allocation2 + $0x10] sm:$0xff] %vm163, %v619
    %v622 = vsel %vm163, %v619, 0
    %624 = vmatprep.subr.mxu0 0.0
    %625 = vmatpush1.msra.mxu0 %v142
    %626 = vmatprep.subr.mxu0 0.0
    %627 = vmatpush1.msra.mxu0 %v143
    %628 = vmatprep.subr.mxu0 0.0
    %629 = vmatpush1.msra.mxu0 %v144
    %630 = vmatprep.subr.mxu0 0.0
    %631 = vmatpush1.msra.mxu0 %v145
    %632 = vmatprep.subr.mxu0 0.0
    %633 = vmatpush1.msra.mxu0 0.0
    %634 = vmatprep.subr.mxu0 0.0
    %635 = vmatpush1.msra.mxu0 0.0
    %636 = vmatprep.subr.mxu0 0.0
    %637 = vmatpush1.msra.mxu0 0.0
    %638 = vmatprep.subr.mxu0 0.0
    %639 = vmatpush1.msra.mxu0 0.0
    %640 = vmatprep.subr.mxu0 0.0
    %641 = vmatpush1.msra.mxu0 0.0
    %642 = vmatprep.subr.mxu0 0.0
    %643 = vmatpush1.msra.mxu0 0.0
    %644 = vmatprep.subr.mxu0 0.0
    %645 = vmatpush1.msra.mxu0 0.0
    %646 = vmatprep.subr.mxu0 0.0
    %647 = vmatpush1.msra.mxu0 0.0
    %648 = vmatprep.subr.mxu0 0.0
    %649 = vmatpush1.msra.mxu0 0.0
    %650 = vmatprep.subr.mxu0 0.0
    %651 = vmatpush1.msra.mxu0 0.0
    %652 = vmatprep.subr.mxu0 0.0
    %653 = vmatpush1.msra.mxu0 0.0
    %654 = vmatprep.subr.mxu0 0.0
    %655 = vmatpush1.msra.mxu0 0.0
    %656 = vmatprep.subr.mxu0 0.0
    %657 = vmatpush1.msra.mxu0 0.0
    %658 = vmatprep.subr.mxu0 0.0
    %659 = vmatpush1.msra.mxu0 0.0
    %660 = vmatprep.subr.mxu0 0.0
    %661 = vmatpush1.msra.mxu0 0.0
    %662 = vmatprep.subr.mxu0 0.0
    %663 = vmatpush1.msra.mxu0 0.0
    %664 = vmatprep.subr.mxu0 0.0
    %665 = vmatpush1.msra.mxu0 0.0
    %666 = vmatprep.subr.mxu0 0.0
    %667 = vmatpush1.msra.mxu0 0.0
    %668 = vmatprep.subr.mxu0 0.0
    %669 = vmatpush1.msra.mxu0 0.0
    %670 = vmatprep.subr.mxu0 0.0
    %671 = vmatpush1.msra.mxu0 0.0
    %672 = vmatprep.subr.mxu0 0.0
    %673 = vmatpush1.msra.mxu0 0.0
    %674 = vmatprep.subr.mxu0 0.0
    %675 = vmatpush1.msra.mxu0 0.0
    %676 = vmatprep.subr.mxu0 0.0
    %677 = vmatpush1.msra.mxu0 0.0
    %678 = vmatprep.subr.mxu0 0.0
    %679 = vmatpush1.msra.mxu0 0.0
    %680 = vmatprep.subr.mxu0 0.0
    %681 = vmatpush1.msra.mxu0 0.0
    %682 = vmatprep.subr.mxu0 0.0
    %683 = vmatpush1.msra.mxu0 0.0
    %684 = vmatprep.subr.mxu0 0.0
    %685 = vmatpush1.msra.mxu0 0.0
    %686 = vmatprep.subr.mxu0 0.0
    %687 = vmatpush1.msra.mxu0 0.0
    %688 = vmatprep.mubr.f32.mxu0 0.0
    %689 = vmatmul.mubr.f32.gmra.mrb[0].mxu0 %v622
    %v690 = vpop.f32.mrb[0].mxu0
    %v691 = vadd.f32 0.0, %v690
    %v692 = vpop.f32.mrb[0].mxu0
    %693 = vdwg.mxu0
    %v694 = vadd.f32 %v276, %v691
    %v695 = vxor.u32 %v694, 2147483648
    %v696 = vmul.f32 %v695, 1.442695
    %v697 = vpow.pop %v696
    %v698 = vadd.f32 %v697, 1.0
    %v699 = vrcp.pop %v698
    %v700 = vmul.f32 1.0, %v699
    %v701 = vtanh.pop %v694
    %v702 = vmul.f32 %v700, %v610
    %704 = vrot.lane.b32.xlu0 %v701, 64
    %v705 = vpop.permute.xlu0 %704
    %v707 = vmul.f32 %v700, %v705
    %709 = vrot.lane.b32.xlu0 %v707, 32
    %v710 = vpop.permute.xlu0 %709
    %v712 = vadd.f32 %v702, %v710
    %v713 = vtanh.pop %v712
    %715 = vrot.lane.b32.xlu0 %v713, 64
    %v716 = vpop.permute.xlu0 %715
    %v718 = vmul.f32 %v700, %v716
    %720 = vrot.lane.b32.xlu0 %v718, 32
    %v721 = vpop.permute.xlu0 %720
    %723 = vst.msk [vmem:[#allocation2 + $0x18] sm:$0xff] %vm163, %v721
    %v724 = vsel %vm163, %v721, 0
    %726 = vmatprep.subr.mxu0 0.0
    %727 = vmatpush1.msra.mxu0 %v142
    %728 = vmatprep.subr.mxu0 0.0
    %729 = vmatpush1.msra.mxu0 %v143
    %730 = vmatprep.subr.mxu0 0.0
    %731 = vmatpush1.msra.mxu0 %v144
    %732 = vmatprep.subr.mxu0 0.0
    %733 = vmatpush1.msra.mxu0 %v145
    %734 = vmatprep.subr.mxu0 0.0
    %735 = vmatpush1.msra.mxu0 0.0
    %736 = vmatprep.subr.mxu0 0.0
    %737 = vmatpush1.msra.mxu0 0.0
    %738 = vmatprep.subr.mxu0 0.0
    %739 = vmatpush1.msra.mxu0 0.0
    %740 = vmatprep.subr.mxu0 0.0
    %741 = vmatpush1.msra.mxu0 0.0
    %742 = vmatprep.subr.mxu0 0.0
    %743 = vmatpush1.msra.mxu0 0.0
    %744 = vmatprep.subr.mxu0 0.0
    %745 = vmatpush1.msra.mxu0 0.0
    %746 = vmatprep.subr.mxu0 0.0
    %747 = vmatpush1.msra.mxu0 0.0
    %748 = vmatprep.subr.mxu0 0.0
    %749 = vmatpush1.msra.mxu0 0.0
    %750 = vmatprep.subr.mxu0 0.0
    %751 = vmatpush1.msra.mxu0 0.0
    %752 = vmatprep.subr.mxu0 0.0
    %753 = vmatpush1.msra.mxu0 0.0
    %754 = vmatprep.subr.mxu0 0.0
    %755 = vmatpush1.msra.mxu0 0.0
    %756 = vmatprep.subr.mxu0 0.0
    %757 = vmatpush1.msra.mxu0 0.0
    %758 = vmatprep.subr.mxu0 0.0
    %759 = vmatpush1.msra.mxu0 0.0
    %760 = vmatprep.subr.mxu0 0.0
    %761 = vmatpush1.msra.mxu0 0.0
    %762 = vmatprep.subr.mxu0 0.0
    %763 = vmatpush1.msra.mxu0 0.0
    %764 = vmatprep.subr.mxu0 0.0
    %765 = vmatpush1.msra.mxu0 0.0
    %766 = vmatprep.subr.mxu0 0.0
    %767 = vmatpush1.msra.mxu0 0.0
    %768 = vmatprep.subr.mxu0 0.0
    %769 = vmatpush1.msra.mxu0 0.0
    %770 = vmatprep.subr.mxu0 0.0
    %771 = vmatpush1.msra.mxu0 0.0
    %772 = vmatprep.subr.mxu0 0.0
    %773 = vmatpush1.msra.mxu0 0.0
    %774 = vmatprep.subr.mxu0 0.0
    %775 = vmatpush1.msra.mxu0 0.0
    %776 = vmatprep.subr.mxu0 0.0
    %777 = vmatpush1.msra.mxu0 0.0
    %778 = vmatprep.subr.mxu0 0.0
    %779 = vmatpush1.msra.mxu0 0.0
    %780 = vmatprep.subr.mxu0 0.0
    %781 = vmatpush1.msra.mxu0 0.0
    %782 = vmatprep.subr.mxu0 0.0
    %783 = vmatpush1.msra.mxu0 0.0
    %784 = vmatprep.subr.mxu0 0.0
    %785 = vmatpush1.msra.mxu0 0.0
    %786 = vmatprep.subr.mxu0 0.0
    %787 = vmatpush1.msra.mxu0 0.0
    %788 = vmatprep.subr.mxu0 0.0
    %789 = vmatpush1.msra.mxu0 0.0
    %790 = vmatprep.mubr.f32.mxu0 0.0
    %791 = vmatmul.mubr.f32.gmra.mrb[0].mxu0 %v724
    %v792 = vpop.f32.mrb[0].mxu0
    %v793 = vadd.f32 0.0, %v792
    %v794 = vpop.f32.mrb[0].mxu0
    %795 = vdwg.mxu0
    %v796 = vadd.f32 %v281, %v793
    %v797 = vxor.u32 %v796, 2147483648
    %v798 = vmul.f32 %v797, 1.442695
    %v799 = vpow.pop %v798
    %v800 = vadd.f32 %v799, 1.0
    %v801 = vrcp.pop %v800
    %v802 = vmul.f32 1.0, %v801
    %v803 = vtanh.pop %v796
    %v804 = vmul.f32 %v802, %v712
    %806 = vrot.lane.b32.xlu0 %v803, 64
    %v807 = vpop.permute.xlu0 %806
    %v809 = vmul.f32 %v802, %v807
    %811 = vrot.lane.b32.xlu0 %v809, 32
    %v812 = vpop.permute.xlu0 %811
    %v814 = vadd.f32 %v804, %v812
    %v815 = vtanh.pop %v814
    %817 = vrot.lane.b32.xlu0 %v815, 64
    %v818 = vpop.permute.xlu0 %817
    %v820 = vmul.f32 %v802, %v818
    %822 = vrot.lane.b32.xlu0 %v820, 32
    %v823 = vpop.permute.xlu0 %822
    %825 = vst.msk [vmem:[#allocation2 + $0x20] sm:$0xff] %vm163, %v823
    %v826 = vsel %vm163, %v823, 0
    %828 = vmatprep.subr.mxu0 0.0
    %829 = vmatpush1.msra.mxu0 %v142
    %830 = vmatprep.subr.mxu0 0.0
    %831 = vmatpush1.msra.mxu0 %v143
    %832 = vmatprep.subr.mxu0 0.0
    %833 = vmatpush1.msra.mxu0 %v144
    %834 = vmatprep.subr.mxu0 0.0
    %835 = vmatpush1.msra.mxu0 %v145
    %836 = vmatprep.subr.mxu0 0.0
    %837 = vmatpush1.msra.mxu0 0.0
    %838 = vmatprep.subr.mxu0 0.0
    %839 = vmatpush1.msra.mxu0 0.0
    %840 = vmatprep.subr.mxu0 0.0
    %841 = vmatpush1.msra.mxu0 0.0
    %842 = vmatprep.subr.mxu0 0.0
    %843 = vmatpush1.msra.mxu0 0.0
    %844 = vmatprep.subr.mxu0 0.0
    %845 = vmatpush1.msra.mxu0 0.0
    %846 = vmatprep.subr.mxu0 0.0
    %847 = vmatpush1.msra.mxu0 0.0
    %848 = vmatprep.subr.mxu0 0.0
    %849 = vmatpush1.msra.mxu0 0.0
    %850 = vmatprep.subr.mxu0 0.0
    %851 = vmatpush1.msra.mxu0 0.0
    %852 = vmatprep.subr.mxu0 0.0
    %853 = vmatpush1.msra.mxu0 0.0
    %854 = vmatprep.subr.mxu0 0.0
    %855 = vmatpush1.msra.mxu0 0.0
    %856 = vmatprep.subr.mxu0 0.0
    %857 = vmatpush1.msra.mxu0 0.0
    %858 = vmatprep.subr.mxu0 0.0
    %859 = vmatpush1.msra.mxu0 0.0
    %860 = vmatprep.subr.mxu0 0.0
    %861 = vmatpush1.msra.mxu0 0.0
    %862 = vmatprep.subr.mxu0 0.0
    %863 = vmatpush1.msra.mxu0 0.0
    %864 = vmatprep.subr.mxu0 0.0
    %865 = vmatpush1.msra.mxu0 0.0
    %866 = vmatprep.subr.mxu0 0.0
    %867 = vmatpush1.msra.mxu0 0.0
    %868 = vmatprep.subr.mxu0 0.0
    %869 = vmatpush1.msra.mxu0 0.0
    %870 = vmatprep.subr.mxu0 0.0
    %871 = vmatpush1.msra.mxu0 0.0
    %872 = vmatprep.subr.mxu0 0.0
    %873 = vmatpush1.msra.mxu0 0.0
    %874 = vmatprep.subr.mxu0 0.0
    %875 = vmatpush1.msra.mxu0 0.0
    %876 = vmatprep.subr.mxu0 0.0
    %877 = vmatpush1.msra.mxu0 0.0
    %878 = vmatprep.subr.mxu0 0.0
    %879 = vmatpush1.msra.mxu0 0.0
    %880 = vmatprep.subr.mxu0 0.0
    %881 = vmatpush1.msra.mxu0 0.0
    %882 = vmatprep.subr.mxu0 0.0
    %883 = vmatpush1.msra.mxu0 0.0
    %884 = vmatprep.subr.mxu0 0.0
    %885 = vmatpush1.msra.mxu0 0.0
    %886 = vmatprep.subr.mxu0 0.0
    %887 = vmatpush1.msra.mxu0 0.0
    %888 = vmatprep.subr.mxu0 0.0
    %889 = vmatpush1.msra.mxu0 0.0
    %890 = vmatprep.subr.mxu0 0.0
    %891 = vmatpush1.msra.mxu0 0.0
    %892 = vmatprep.mubr.f32.mxu0 0.0
    %893 = vmatmul.mubr.f32.gmra.mrb[0].mxu0 %v826
    %v894 = vpop.f32.mrb[0].mxu0
    %v895 = vadd.f32 0.0, %v894
    %v896 = vpop.f32.mrb[0].mxu0
    %897 = vdwg.mxu0
    %v898 = vadd.f32 %v286, %v895
    %v899 = vxor.u32 %v898, 2147483648
    %v900 = vmul.f32 %v899, 1.442695
    %v901 = vpow.pop %v900
    %v902 = vadd.f32 %v901, 1.0
    %v903 = vrcp.pop %v902
    %v904 = vmul.f32 1.0, %v903
    %v905 = vtanh.pop %v898
    %v906 = vmul.f32 %v904, %v814
    %908 = vrot.lane.b32.xlu0 %v905, 64
    %v909 = vpop.permute.xlu0 %908
    %v911 = vmul.f32 %v904, %v909
    %913 = vrot.lane.b32.xlu0 %v911, 32
    %v914 = vpop.permute.xlu0 %913
    %v916 = vadd.f32 %v906, %v914
    %v917 = vtanh.pop %v916
    %919 = vrot.lane.b32.xlu0 %v917, 64
    %v920 = vpop.permute.xlu0 %919
    %v922 = vmul.f32 %v904, %v920
    %924 = vrot.lane.b32.xlu0 %v922, 32
    %v925 = vpop.permute.xlu0 %924
    %927 = vst.msk [vmem:[#allocation2 + $0x28] sm:$0xff] %vm163, %v925
    %v928 = vsel %vm163, %v925, 0
    %930 = vmatprep.subr.mxu0 0.0
    %931 = vmatpush1.msra.mxu0 %v142
    %932 = vmatprep.subr.mxu0 0.0
    %933 = vmatpush1.msra.mxu0 %v143
    %934 = vmatprep.subr.mxu0 0.0
    %935 = vmatpush1.msra.mxu0 %v144
    %936 = vmatprep.subr.mxu0 0.0
    %937 = vmatpush1.msra.mxu0 %v145
    %938 = vmatprep.subr.mxu0 0.0
    %939 = vmatpush1.msra.mxu0 0.0
    %940 = vmatprep.subr.mxu0 0.0
    %941 = vmatpush1.msra.mxu0 0.0
    %942 = vmatprep.subr.mxu0 0.0
    %943 = vmatpush1.msra.mxu0 0.0
    %944 = vmatprep.subr.mxu0 0.0
    %945 = vmatpush1.msra.mxu0 0.0
    %946 = vmatprep.subr.mxu0 0.0
    %947 = vmatpush1.msra.mxu0 0.0
    %948 = vmatprep.subr.mxu0 0.0
    %949 = vmatpush1.msra.mxu0 0.0
    %950 = vmatprep.subr.mxu0 0.0
    %951 = vmatpush1.msra.mxu0 0.0
    %952 = vmatprep.subr.mxu0 0.0
    %953 = vmatpush1.msra.mxu0 0.0
    %954 = vmatprep.subr.mxu0 0.0
    %955 = vmatpush1.msra.mxu0 0.0
    %956 = vmatprep.subr.mxu0 0.0
    %957 = vmatpush1.msra.mxu0 0.0
    %958 = vmatprep.subr.mxu0 0.0
    %959 = vmatpush1.msra.mxu0 0.0
    %960 = vmatprep.subr.mxu0 0.0
    %961 = vmatpush1.msra.mxu0 0.0
    %962 = vmatprep.subr.mxu0 0.0
    %963 = vmatpush1.msra.mxu0 0.0
    %964 = vmatprep.subr.mxu0 0.0
    %965 = vmatpush1.msra.mxu0 0.0
    %966 = vmatprep.subr.mxu0 0.0
    %967 = vmatpush1.msra.mxu0 0.0
    %968 = vmatprep.subr.mxu0 0.0
    %969 = vmatpush1.msra.mxu0 0.0
    %970 = vmatprep.subr.mxu0 0.0
    %971 = vmatpush1.msra.mxu0 0.0
    %972 = vmatprep.subr.mxu0 0.0
    %973 = vmatpush1.msra.mxu0 0.0
    %974 = vmatprep.subr.mxu0 0.0
    %975 = vmatpush1.msra.mxu0 0.0
    %976 = vmatprep.subr.mxu0 0.0
    %977 = vmatpush1.msra.mxu0 0.0
    %978 = vmatprep.subr.mxu0 0.0
    %979 = vmatpush1.msra.mxu0 0.0
    %980 = vmatprep.subr.mxu0 0.0
    %981 = vmatpush1.msra.mxu0 0.0
    %982 = vmatprep.subr.mxu0 0.0
    %983 = vmatpush1.msra.mxu0 0.0
    %984 = vmatprep.subr.mxu0 0.0
    %985 = vmatpush1.msra.mxu0 0.0
    %986 = vmatprep.subr.mxu0 0.0
    %987 = vmatpush1.msra.mxu0 0.0
    %988 = vmatprep.subr.mxu0 0.0
    %989 = vmatpush1.msra.mxu0 0.0
    %990 = vmatprep.subr.mxu0 0.0
    %991 = vmatpush1.msra.mxu0 0.0
    %992 = vmatprep.subr.mxu0 0.0
    %993 = vmatpush1.msra.mxu0 0.0
    %994 = vmatprep.mubr.f32.mxu0 0.0
    %995 = vmatmul.mubr.f32.gmra.mrb[0].mxu0 %v928
    %v996 = vpop.f32.mrb[0].mxu0
    %v997 = vadd.f32 0.0, %v996
    %v998 = vpop.f32.mrb[0].mxu0
    %999 = vdwg.mxu0
    %v1000 = vadd.f32 %v291, %v997
    %v1001 = vxor.u32 %v1000, 2147483648
    %v1002 = vmul.f32 %v1001, 1.442695
    %v1003 = vpow.pop %v1002
    %v1004 = vadd.f32 %v1003, 1.0
    %v1005 = vrcp.pop %v1004
    %v1006 = vmul.f32 1.0, %v1005
    %v1007 = vtanh.pop %v1000
    %v1008 = vmul.f32 %v1006, %v916
    %1010 = vrot.lane.b32.xlu0 %v1007, 64
    %v1011 = vpop.permute.xlu0 %1010
    %v1013 = vmul.f32 %v1006, %v1011
    %1015 = vrot.lane.b32.xlu0 %v1013, 32
    %v1016 = vpop.permute.xlu0 %1015
    %v1018 = vadd.f32 %v1008, %v1016
    %v1019 = vtanh.pop %v1018
    %1021 = vrot.lane.b32.xlu0 %v1019, 64
    %v1022 = vpop.permute.xlu0 %1021
    %v1024 = vmul.f32 %v1006, %v1022
    %1026 = vrot.lane.b32.xlu0 %v1024, 32
    %v1027 = vpop.permute.xlu0 %1026
    %1029 = vst.msk [vmem:[#allocation2 + $0x30] sm:$0xff] %vm163, %v1027
    %v1030 = vsel %vm163, %v1027, 0
    %1032 = vmatprep.subr.mxu0 0.0
    %1033 = vmatpush1.msra.mxu0 %v142
    %1034 = vmatprep.subr.mxu0 0.0
    %1035 = vmatpush1.msra.mxu0 %v143
    %1036 = vmatprep.subr.mxu0 0.0
    %1037 = vmatpush1.msra.mxu0 %v144
    %1038 = vmatprep.subr.mxu0 0.0
    %1039 = vmatpush1.msra.mxu0 %v145
    %1040 = vmatprep.subr.mxu0 0.0
    %1041 = vmatpush1.msra.mxu0 0.0
    %1042 = vmatprep.subr.mxu0 0.0
    %1043 = vmatpush1.msra.mxu0 0.0
    %1044 = vmatprep.subr.mxu0 0.0
    %1045 = vmatpush1.msra.mxu0 0.0
    %1046 = vmatprep.subr.mxu0 0.0
    %1047 = vmatpush1.msra.mxu0 0.0
    %1048 = vmatprep.subr.mxu0 0.0
    %1049 = vmatpush1.msra.mxu0 0.0
    %1050 = vmatprep.subr.mxu0 0.0
    %1051 = vmatpush1.msra.mxu0 0.0
    %1052 = vmatprep.subr.mxu0 0.0
    %1053 = vmatpush1.msra.mxu0 0.0
    %1054 = vmatprep.subr.mxu0 0.0
    %1055 = vmatpush1.msra.mxu0 0.0
    %1056 = vmatprep.subr.mxu0 0.0
    %1057 = vmatpush1.msra.mxu0 0.0
    %1058 = vmatprep.subr.mxu0 0.0
    %1059 = vmatpush1.msra.mxu0 0.0
    %1060 = vmatprep.subr.mxu0 0.0
    %1061 = vmatpush1.msra.mxu0 0.0
    %1062 = vmatprep.subr.mxu0 0.0
    %1063 = vmatpush1.msra.mxu0 0.0
    %1064 = vmatprep.subr.mxu0 0.0
    %1065 = vmatpush1.msra.mxu0 0.0
    %1066 = vmatprep.subr.mxu0 0.0
    %1067 = vmatpush1.msra.mxu0 0.0
    %1068 = vmatprep.subr.mxu0 0.0
    %1069 = vmatpush1.msra.mxu0 0.0
    %1070 = vmatprep.subr.mxu0 0.0
    %1071 = vmatpush1.msra.mxu0 0.0
    %1072 = vmatprep.subr.mxu0 0.0
    %1073 = vmatpush1.msra.mxu0 0.0
    %1074 = vmatprep.subr.mxu0 0.0
    %1075 = vmatpush1.msra.mxu0 0.0
    %1076 = vmatprep.subr.mxu0 0.0
    %1077 = vmatpush1.msra.mxu0 0.0
    %1078 = vmatprep.subr.mxu0 0.0
    %1079 = vmatpush1.msra.mxu0 0.0
    %1080 = vmatprep.subr.mxu0 0.0
    %1081 = vmatpush1.msra.mxu0 0.0
    %1082 = vmatprep.subr.mxu0 0.0
    %1083 = vmatpush1.msra.mxu0 0.0
    %1084 = vmatprep.subr.mxu0 0.0
    %1085 = vmatpush1.msra.mxu0 0.0
    %1086 = vmatprep.subr.mxu0 0.0
    %1087 = vmatpush1.msra.mxu0 0.0
    %1088 = vmatprep.subr.mxu0 0.0
    %1089 = vmatpush1.msra.mxu0 0.0
    %1090 = vmatprep.subr.mxu0 0.0
    %1091 = vmatpush1.msra.mxu0 0.0
    %1092 = vmatprep.subr.mxu0 0.0
    %1093 = vmatpush1.msra.mxu0 0.0
    %1094 = vmatprep.subr.mxu0 0.0
    %1095 = vmatpush1.msra.mxu0 0.0
    %1096 = vmatprep.mubr.f32.mxu0 0.0
    %1097 = vmatmul.mubr.f32.gmra.mrb[0].mxu0 %v1030
    %v1098 = vpop.f32.mrb[0].mxu0
    %v1099 = vadd.f32 0.0, %v1098
    %v1100 = vpop.f32.mrb[0].mxu0
    %1101 = vdwg.mxu0
    %v1102 = vadd.f32 %v296, %v1099
    %v1103 = vxor.u32 %v1102, 2147483648
    %v1104 = vmul.f32 %v1103, 1.442695
    %v1105 = vpow.pop %v1104
    %v1106 = vadd.f32 %v1105, 1.0
    %v1107 = vrcp.pop %v1106
    %v1108 = vmul.f32 1.0, %v1107
    %v1109 = vtanh.pop %v1102
    %v1110 = vmul.f32 %v1108, %v1018
    %1112 = vrot.lane.b32.xlu0 %v1109, 64
    %v1113 = vpop.permute.xlu0 %1112
    %v1115 = vmul.f32 %v1108, %v1113
    %1117 = vrot.lane.b32.xlu0 %v1115, 32
    %v1118 = vpop.permute.xlu0 %1117
    %v1120 = vadd.f32 %v1110, %v1118
    %v1121 = vtanh.pop %v1120
    %1123 = vrot.lane.b32.xlu0 %v1121, 64
    %v1124 = vpop.permute.xlu0 %1123
    %v1126 = vmul.f32 %v1108, %v1124
    %1128 = vrot.lane.b32.xlu0 %v1126, 32
    %v1129 = vpop.permute.xlu0 %1128
    %1131 = vst.msk [vmem:[#allocation2 + $0x38] sm:$0xff] %vm163, %v1129
    %v1132 = vsel %vm163, %v1129, 0
    %1134 = vmatprep.subr.mxu0 0.0
    %1135 = vmatpush1.msra.mxu0 %v142
    %1136 = vmatprep.subr.mxu0 0.0
    %1137 = vmatpush1.msra.mxu0 %v143
    %1138 = vmatprep.subr.mxu0 0.0
    %1139 = vmatpush1.msra.mxu0 %v144
    %1140 = vmatprep.subr.mxu0 0.0
    %1141 = vmatpush1.msra.mxu0 %v145
    %1142 = vmatprep.subr.mxu0 0.0
    %1143 = vmatpush1.msra.mxu0 0.0
    %1144 = vmatprep.subr.mxu0 0.0
    %1145 = vmatpush1.msra.mxu0 0.0
    %1146 = vmatprep.subr.mxu0 0.0
    %1147 = vmatpush1.msra.mxu0 0.0
    %1148 = vmatprep.subr.mxu0 0.0
    %1149 = vmatpush1.msra.mxu0 0.0
    %1150 = vmatprep.subr.mxu0 0.0
    %1151 = vmatpush1.msra.mxu0 0.0
    %1152 = vmatprep.subr.mxu0 0.0
    %1153 = vmatpush1.msra.mxu0 0.0
    %1154 = vmatprep.subr.mxu0 0.0
    %1155 = vmatpush1.msra.mxu0 0.0
    %1156 = vmatprep.subr.mxu0 0.0
    %1157 = vmatpush1.msra.mxu0 0.0
    %1158 = vmatprep.subr.mxu0 0.0
    %1159 = vmatpush1.msra.mxu0 0.0
    %1160 = vmatprep.subr.mxu0 0.0
    %1161 = vmatpush1.msra.mxu0 0.0
    %1162 = vmatprep.subr.mxu0 0.0
    %1163 = vmatpush1.msra.mxu0 0.0
    %1164 = vmatprep.subr.mxu0 0.0
    %1165 = vmatpush1.msra.mxu0 0.0
    %1166 = vmatprep.subr.mxu0 0.0
    %1167 = vmatpush1.msra.mxu0 0.0
    %1168 = vmatprep.subr.mxu0 0.0
    %1169 = vmatpush1.msra.mxu0 0.0
    %1170 = vmatprep.subr.mxu0 0.0
    %1171 = vmatpush1.msra.mxu0 0.0
    %1172 = vmatprep.subr.mxu0 0.0
    %1173 = vmatpush1.msra.mxu0 0.0
    %1174 = vmatprep.subr.mxu0 0.0
    %1175 = vmatpush1.msra.mxu0 0.0
    %1176 = vmatprep.subr.mxu0 0.0
    %1177 = vmatpush1.msra.mxu0 0.0
    %1178 = vmatprep.subr.mxu0 0.0
    %1179 = vmatpush1.msra.mxu0 0.0
    %1180 = vmatprep.subr.mxu0 0.0
    %1181 = vmatpush1.msra.mxu0 0.0
    %1182 = vmatprep.subr.mxu0 0.0
    %1183 = vmatpush1.msra.mxu0 0.0
    %1184 = vmatprep.subr.mxu0 0.0
    %1185 = vmatpush1.msra.mxu0 0.0
    %1186 = vmatprep.subr.mxu0 0.0
    %1187 = vmatpush1.msra.mxu0 0.0
    %1188 = vmatprep.subr.mxu0 0.0
    %1189 = vmatpush1.msra.mxu0 0.0
    %1190 = vmatprep.subr.mxu0 0.0
    %1191 = vmatpush1.msra.mxu0 0.0
    %1192 = vmatprep.subr.mxu0 0.0
    %1193 = vmatpush1.msra.mxu0 0.0
    %1194 = vmatprep.subr.mxu0 0.0
    %1195 = vmatpush1.msra.mxu0 0.0
    %1196 = vmatprep.subr.mxu0 0.0
    %1197 = vmatpush1.msra.mxu0 0.0
    %1198 = vmatprep.mubr.f32.mxu0 0.0
    %1199 = vmatmul.mubr.f32.gmra.mrb[0].mxu0 %v1132
    %v1200 = vpop.f32.mrb[0].mxu0
    %v1201 = vadd.f32 0.0, %v1200
    %v1202 = vpop.f32.mrb[0].mxu0
    %1203 = vdwg.mxu0
    %v1204 = vadd.f32 %v301, %v1201
    %v1205 = vxor.u32 %v1204, 2147483648
    %v1206 = vmul.f32 %v1205, 1.442695
    %v1207 = vpow.pop %v1206
    %v1208 = vadd.f32 %v1207, 1.0
    %v1209 = vrcp.pop %v1208
    %v1210 = vmul.f32 1.0, %v1209
    %v1211 = vtanh.pop %v1204
    %v1212 = vmul.f32 %v1210, %v1120
    %1214 = vrot.lane.b32.xlu0 %v1211, 64
    %v1215 = vpop.permute.xlu0 %1214
    %v1217 = vmul.f32 %v1210, %v1215
    %1219 = vrot.lane.b32.xlu0 %v1217, 32
    %v1220 = vpop.permute.xlu0 %1219
    %v1222 = vadd.f32 %v1212, %v1220
    %v1223 = vtanh.pop %v1222
    %1225 = vrot.lane.b32.xlu0 %v1223, 64
    %v1226 = vpop.permute.xlu0 %1225
    %v1228 = vmul.f32 %v1210, %v1226
    %1230 = vrot.lane.b32.xlu0 %v1228, 32
    %v1231 = vpop.permute.xlu0 %1230
    %1233 = vst.msk [vmem:[#allocation2 + $0x40] sm:$0xff] %vm163, %v1231
    %v1234 = vsel %vm163, %v1231, 0
    %1236 = vmatprep.subr.mxu0 0.0
    %1237 = vmatpush1.msra.mxu0 %v142
    %1238 = vmatprep.subr.mxu0 0.0
    %1239 = vmatpush1.msra.mxu0 %v143
    %1240 = vmatprep.subr.mxu0 0.0
    %1241 = vmatpush1.msra.mxu0 %v144
    %1242 = vmatprep.subr.mxu0 0.0
    %1243 = vmatpush1.msra.mxu0 %v145
    %1244 = vmatprep.subr.mxu0 0.0
    %1245 = vmatpush1.msra.mxu0 0.0
    %1246 = vmatprep.subr.mxu0 0.0
    %1247 = vmatpush1.msra.mxu0 0.0
    %1248 = vmatprep.subr.mxu0 0.0
    %1249 = vmatpush1.msra.mxu0 0.0
    %1250 = vmatprep.subr.mxu0 0.0
    %1251 = vmatpush1.msra.mxu0 0.0
    %1252 = vmatprep.subr.mxu0 0.0
    %1253 = vmatpush1.msra.mxu0 0.0
    %1254 = vmatprep.subr.mxu0 0.0
    %1255 = vmatpush1.msra.mxu0 0.0
    %1256 = vmatprep.subr.mxu0 0.0
    %1257 = vmatpush1.msra.mxu0 0.0
    %1258 = vmatprep.subr.mxu0 0.0
    %1259 = vmatpush1.msra.mxu0 0.0
    %1260 = vmatprep.subr.mxu0 0.0
    %1261 = vmatpush1.msra.mxu0 0.0
    %1262 = vmatprep.subr.mxu0 0.0
    %1263 = vmatpush1.msra.mxu0 0.0
    %1264 = vmatprep.subr.mxu0 0.0
    %1265 = vmatpush1.msra.mxu0 0.0
    %1266 = vmatprep.subr.mxu0 0.0
    %1267 = vmatpush1.msra.mxu0 0.0
    %1268 = vmatprep.subr.mxu0 0.0
    %1269 = vmatpush1.msra.mxu0 0.0
    %1270 = vmatprep.subr.mxu0 0.0
    %1271 = vmatpush1.msra.mxu0 0.0
    %1272 = vmatprep.subr.mxu0 0.0
    %1273 = vmatpush1.msra.mxu0 0.0
    %1274 = vmatprep.subr.mxu0 0.0
    %1275 = vmatpush1.msra.mxu0 0.0
    %1276 = vmatprep.subr.mxu0 0.0
    %1277 = vmatpush1.msra.mxu0 0.0
    %1278 = vmatprep.subr.mxu0 0.0
    %1279 = vmatpush1.msra.mxu0 0.0
    %1280 = vmatprep.subr.mxu0 0.0
    %1281 = vmatpush1.msra.mxu0 0.0
    %1282 = vmatprep.subr.mxu0 0.0
    %1283 = vmatpush1.msra.mxu0 0.0
    %1284 = vmatprep.subr.mxu0 0.0
    %1285 = vmatpush1.msra.mxu0 0.0
    %1286 = vmatprep.subr.mxu0 0.0
    %1287 = vmatpush1.msra.mxu0 0.0
    %1288 = vmatprep.subr.mxu0 0.0
    %1289 = vmatpush1.msra.mxu0 0.0
    %1290 = vmatprep.subr.mxu0 0.0
    %1291 = vmatpush1.msra.mxu0 0.0
    %1292 = vmatprep.subr.mxu0 0.0
    %1293 = vmatpush1.msra.mxu0 0.0
    %1294 = vmatprep.subr.mxu0 0.0
    %1295 = vmatpush1.msra.mxu0 0.0
    %1296 = vmatprep.subr.mxu0 0.0
    %1297 = vmatpush1.msra.mxu0 0.0
    %1298 = vmatprep.subr.mxu0 0.0
    %1299 = vmatpush1.msra.mxu0 0.0
    %1300 = vmatprep.mubr.f32.mxu0 0.0
    %1301 = vmatmul.mubr.f32.gmra.mrb[0].mxu0 %v1234
    %v1302 = vpop.f32.mrb[0].mxu0
    %v1303 = vadd.f32 0.0, %v1302
    %v1304 = vpop.f32.mrb[0].mxu0
    %1305 = vdwg.mxu0
    %v1306 = vadd.f32 %v306, %v1303
    %v1307 = vxor.u32 %v1306, 2147483648
    %v1308 = vmul.f32 %v1307, 1.442695
    %v1309 = vpow.pop %v1308
    %v1310 = vadd.f32 %v1309, 1.0
    %v1311 = vrcp.pop %v1310
    %v1312 = vmul.f32 1.0, %v1311
    %v1313 = vtanh.pop %v1306
    %v1314 = vmul.f32 %v1312, %v1222
    %1316 = vrot.lane.b32.xlu0 %v1313, 64
    %v1317 = vpop.permute.xlu0 %1316
    %v1319 = vmul.f32 %v1312, %v1317
    %1321 = vrot.lane.b32.xlu0 %v1319, 32
    %v1322 = vpop.permute.xlu0 %1321
    %v1324 = vadd.f32 %v1314, %v1322
    %v1325 = vtanh.pop %v1324
    %1327 = vrot.lane.b32.xlu0 %v1325, 64
    %v1328 = vpop.permute.xlu0 %1327
    %v1330 = vmul.f32 %v1312, %v1328
    %1332 = vrot.lane.b32.xlu0 %v1330, 32
    %v1333 = vpop.permute.xlu0 %1332
    %1335 = vst.msk [vmem:[#allocation2 + $0x48] sm:$0xff] %vm163, %v1333
    %v1336 = vld [vmem:[#allocation9] sm:$0xff]
    %v1337 = vld [vmem:[#allocation9 + $0x8] sm:$0xff]
    %v1338 = vld [vmem:[#allocation9 + $0x10] sm:$0xff]
    %v1339 = vld [vmem:[#allocation9 + $0x18] sm:$0xff]
    %v1340 = vld [vmem:[#allocation11] sm:$0xff]
    %v1341 = vld [vmem:[#allocation11 + $0x8] sm:$0xff]
    %v1342 = vld [vmem:[#allocation11 + $0x10] sm:$0xff]
    %v1343 = vld [vmem:[#allocation11 + $0x18] sm:$0xff]
    %v1344 = vld [vmem:[%s9] sm:$0x1]
    %v1345 = vld [vmem:[#allocation2] sm:$0xff]
    %v1346 = vld [vmem:[#allocation2 + $0x8] sm:$0xff]
    %v1347 = vld [vmem:[#allocation2 + $0x10] sm:$0xff]
    %v1348 = vld [vmem:[#allocation2 + $0x18] sm:$0xff]
    %v1349 = vld [vmem:[#allocation2 + $0x20] sm:$0xff]
    %v1350 = vld [vmem:[#allocation2 + $0x28] sm:$0xff]
    %v1351 = vld [vmem:[#allocation2 + $0x30] sm:$0xff]
    %v1352 = vld [vmem:[#allocation2 + $0x38] sm:$0xff]
    %v1353 = vld [vmem:[#allocation2 + $0x40] sm:$0xff]
    %v1354 = vld [vmem:[#allocation2 + $0x48] sm:$0xff]
    %v1356 = vlaneseq
    %v1357 = vshrl.u32 %v1356, 7
    %v1358 = vsub.s32 0, %v1357
    %v1359 = vrot.slane %v1344, %v1358
    %v1362 = vsel %vm163, %v1345, 0
    %v1365 = vsel %vm163, %v1346, 0
    %v1368 = vsel %vm163, %v1347, 0
    %v1371 = vsel %vm163, %v1348, 0
    %v1374 = vsel %vm163, %v1349, 0
    %v1377 = vsel %vm163, %v1350, 0
    %v1380 = vsel %vm163, %v1351, 0
    %v1383 = vsel %vm163, %v1352, 0
    %v1386 = vsel %vm163, %v1353, 0
    %v1389 = vsel %vm163, %v1354, 0
    %1391 = vmatprep.subr.mxu0 0.0
    %1392 = vmatpush1.msra.mxu0 %v1336
    %1393 = vmatprep.subr.mxu0 0.0
    %1394 = vmatpush1.msra.mxu0 %v1337
    %1395 = vmatprep.subr.mxu0 0.0
    %1396 = vmatpush1.msra.mxu0 %v1338
    %1397 = vmatprep.subr.mxu0 0.0
    %1398 = vmatpush1.msra.mxu0 %v1339
    %1399 = vmatprep.subr.mxu0 0.0
    %1400 = vmatpush1.msra.mxu0 0.0
    %1401 = vmatprep.subr.mxu0 0.0
    %1402 = vmatpush1.msra.mxu0 0.0
    %1403 = vmatprep.subr.mxu0 0.0
    %1404 = vmatpush1.msra.mxu0 0.0
    %1405 = vmatprep.subr.mxu0 0.0
    %1406 = vmatpush1.msra.mxu0 0.0
    %1407 = vmatprep.subr.mxu0 0.0
    %1408 = vmatpush1.msra.mxu0 0.0
    %1409 = vmatprep.subr.mxu0 0.0
    %1410 = vmatpush1.msra.mxu0 0.0
    %1411 = vmatprep.subr.mxu0 0.0
    %1412 = vmatpush1.msra.mxu0 0.0
    %1413 = vmatprep.subr.mxu0 0.0
    %1414 = vmatpush1.msra.mxu0 0.0
    %1415 = vmatprep.subr.mxu0 0.0
    %1416 = vmatpush1.msra.mxu0 0.0
    %1417 = vmatprep.subr.mxu0 0.0
    %1418 = vmatpush1.msra.mxu0 0.0
    %1419 = vmatprep.subr.mxu0 0.0
    %1420 = vmatpush1.msra.mxu0 0.0
    %1421 = vmatprep.subr.mxu0 0.0
    %1422 = vmatpush1.msra.mxu0 0.0
    %1423 = vmatprep.subr.mxu0 0.0
    %1424 = vmatpush1.msra.mxu0 0.0
    %1425 = vmatprep.subr.mxu0 0.0
    %1426 = vmatpush1.msra.mxu0 0.0
    %1427 = vmatprep.subr.mxu0 0.0
    %1428 = vmatpush1.msra.mxu0 0.0
    %1429 = vmatprep.subr.mxu0 0.0
    %1430 = vmatpush1.msra.mxu0 0.0
    %1431 = vmatprep.subr.mxu0 0.0
    %1432 = vmatpush1.msra.mxu0 0.0
    %1433 = vmatprep.subr.mxu0 0.0
    %1434 = vmatpush1.msra.mxu0 0.0
    %1435 = vmatprep.subr.mxu0 0.0
    %1436 = vmatpush1.msra.mxu0 0.0
    %1437 = vmatprep.subr.mxu0 0.0
    %1438 = vmatpush1.msra.mxu0 0.0
    %1439 = vmatprep.subr.mxu0 0.0
    %1440 = vmatpush1.msra.mxu0 0.0
    %1441 = vmatprep.subr.mxu0 0.0
    %1442 = vmatpush1.msra.mxu0 0.0
    %1443 = vmatprep.subr.mxu0 0.0
    %1444 = vmatpush1.msra.mxu0 0.0
    %1445 = vmatprep.subr.mxu0 0.0
    %1446 = vmatpush1.msra.mxu0 0.0
    %1447 = vmatprep.subr.mxu0 0.0
    %1448 = vmatpush1.msra.mxu0 0.0
    %1449 = vmatprep.subr.mxu0 0.0
    %1450 = vmatpush1.msra.mxu0 0.0
    %1451 = vmatprep.subr.mxu0 0.0
    %1452 = vmatpush1.msra.mxu0 0.0
    %1453 = vmatprep.subr.mxu0 0.0
    %1454 = vmatpush1.msra.mxu0 0.0
    %1455 = vmatprep.mubr.f32.mxu0 0.0
    %1456 = vmatmul.mubr.f32.gmra.mrb[0].mxu0 %v1362
    %v1457 = vpop.f32.mrb[0].mxu0
    %v1458 = vadd.f32 %v1359, %v1457
    %v1459 = vpop.f32.mrb[0].mxu0
    %1460 = vmatprep.mubr.f32.mxu0 0.0
    %1461 = vmatmul.mubr.f32.gmra.mrb[0].mxu0 %v1365
    %v1462 = vpop.f32.mrb[0].mxu0
    %v1463 = vadd.f32 %v1359, %v1462
    %v1464 = vpop.f32.mrb[0].mxu0
    %1465 = vmatprep.mubr.f32.mxu0 0.0
    %1466 = vmatmul.mubr.f32.gmra.mrb[0].mxu0 %v1368
    %v1467 = vpop.f32.mrb[0].mxu0
    %v1468 = vadd.f32 %v1359, %v1467
    %v1469 = vpop.f32.mrb[0].mxu0
    %1470 = vmatprep.mubr.f32.mxu0 0.0
    %1471 = vmatmul.mubr.f32.gmra.mrb[0].mxu0 %v1371
    %v1472 = vpop.f32.mrb[0].mxu0
    %v1473 = vadd.f32 %v1359, %v1472
    %v1474 = vpop.f32.mrb[0].mxu0
    %1475 = vmatprep.mubr.f32.mxu0 0.0
    %1476 = vmatmul.mubr.f32.gmra.mrb[0].mxu0 %v1374
    %v1477 = vpop.f32.mrb[0].mxu0
    %v1478 = vadd.f32 %v1359, %v1477
    %v1479 = vpop.f32.mrb[0].mxu0
    %1480 = vmatprep.mubr.f32.mxu0 0.0
    %1481 = vmatmul.mubr.f32.gmra.mrb[0].mxu0 %v1377
    %v1482 = vpop.f32.mrb[0].mxu0
    %v1483 = vadd.f32 %v1359, %v1482
    %v1484 = vpop.f32.mrb[0].mxu0
    %1485 = vmatprep.mubr.f32.mxu0 0.0
    %1486 = vmatmul.mubr.f32.gmra.mrb[0].mxu0 %v1380
    %v1487 = vpop.f32.mrb[0].mxu0
    %v1488 = vadd.f32 %v1359, %v1487
    %v1489 = vpop.f32.mrb[0].mxu0
    %1490 = vmatprep.mubr.f32.mxu0 0.0
    %1491 = vmatmul.mubr.f32.gmra.mrb[0].mxu0 %v1383
    %v1492 = vpop.f32.mrb[0].mxu0
    %v1493 = vadd.f32 %v1359, %v1492
    %v1494 = vpop.f32.mrb[0].mxu0
    %1495 = vmatprep.mubr.f32.mxu0 0.0
    %1496 = vmatmul.mubr.f32.gmra.mrb[0].mxu0 %v1386
    %v1497 = vpop.f32.mrb[0].mxu0
    %v1498 = vadd.f32 %v1359, %v1497
    %v1499 = vpop.f32.mrb[0].mxu0
    %1500 = vmatprep.mubr.f32.mxu0 0.0
    %1501 = vmatmul.mubr.f32.gmra.mrb[0].mxu0 %v1389
    %v1502 = vpop.f32.mrb[0].mxu0
    %v1503 = vadd.f32 %v1359, %v1502
    %v1504 = vpop.f32.mrb[0].mxu0
    %1505 = vdwg.mxu0
    %s1506 = scalar_lea.vmem [#allocation3], 8
    %v1507 = vld [vmem:[%s1506] sm:$0xff]
    %s1508 = scalar_lea.vmem [#allocation6], 8
    %v1509 = vld [vmem:[%s1508] sm:$0xff]
    %v1511 = vsel %vm163, %v1507, 0
    %1513 = vmatprep.subr.mxu0 0.0
    %1514 = vmatpush1.msra.mxu0 %v1340
    %1515 = vmatprep.subr.mxu0 0.0
    %1516 = vmatpush1.msra.mxu0 %v1341
    %1517 = vmatprep.subr.mxu0 0.0
    %1518 = vmatpush1.msra.mxu0 %v1342
    %1519 = vmatprep.subr.mxu0 0.0
    %1520 = vmatpush1.msra.mxu0 %v1343
    %1521 = vmatprep.subr.mxu0 0.0
    %1522 = vmatpush1.msra.mxu0 0.0
    %1523 = vmatprep.subr.mxu0 0.0
    %1524 = vmatpush1.msra.mxu0 0.0
    %1525 = vmatprep.subr.mxu0 0.0
    %1526 = vmatpush1.msra.mxu0 0.0
    %1527 = vmatprep.subr.mxu0 0.0
    %1528 = vmatpush1.msra.mxu0 0.0
    %1529 = vmatprep.subr.mxu0 0.0
    %1530 = vmatpush1.msra.mxu0 0.0
    %1531 = vmatprep.subr.mxu0 0.0
    %1532 = vmatpush1.msra.mxu0 0.0
    %1533 = vmatprep.subr.mxu0 0.0
    %1534 = vmatpush1.msra.mxu0 0.0
    %1535 = vmatprep.subr.mxu0 0.0
    %1536 = vmatpush1.msra.mxu0 0.0
    %1537 = vmatprep.subr.mxu0 0.0
    %1538 = vmatpush1.msra.mxu0 0.0
    %1539 = vmatprep.subr.mxu0 0.0
    %1540 = vmatpush1.msra.mxu0 0.0
    %1541 = vmatprep.subr.mxu0 0.0
    %1542 = vmatpush1.msra.mxu0 0.0
    %1543 = vmatprep.subr.mxu0 0.0
    %1544 = vmatpush1.msra.mxu0 0.0
    %1545 = vmatprep.subr.mxu0 0.0
    %1546 = vmatpush1.msra.mxu0 0.0
    %1547 = vmatprep.subr.mxu0 0.0
    %1548 = vmatpush1.msra.mxu0 0.0
    %1549 = vmatprep.subr.mxu0 0.0
    %1550 = vmatpush1.msra.mxu0 0.0
    %1551 = vmatprep.subr.mxu0 0.0
    %1552 = vmatpush1.msra.mxu0 0.0
    %1553 = vmatprep.subr.mxu0 0.0
    %1554 = vmatpush1.msra.mxu0 0.0
    %1555 = vmatprep.subr.mxu0 0.0
    %1556 = vmatpush1.msra.mxu0 0.0
    %1557 = vmatprep.subr.mxu0 0.0
    %1558 = vmatpush1.msra.mxu0 0.0
    %1559 = vmatprep.subr.mxu0 0.0
    %1560 = vmatpush1.msra.mxu0 0.0
    %1561 = vmatprep.subr.mxu0 0.0
    %1562 = vmatpush1.msra.mxu0 0.0
    %1563 = vmatprep.subr.mxu0 0.0
    %1564 = vmatpush1.msra.mxu0 0.0
    %1565 = vmatprep.subr.mxu0 0.0
    %1566 = vmatpush1.msra.mxu0 0.0
    %1567 = vmatprep.subr.mxu0 0.0
    %1568 = vmatpush1.msra.mxu0 0.0
    %1569 = vmatprep.subr.mxu0 0.0
    %1570 = vmatpush1.msra.mxu0 0.0
    %1571 = vmatprep.subr.mxu0 0.0
    %1572 = vmatpush1.msra.mxu0 0.0
    %1573 = vmatprep.subr.mxu0 0.0
    %1574 = vmatpush1.msra.mxu0 0.0
    %1575 = vmatprep.subr.mxu0 0.0
    %1576 = vmatpush1.msra.mxu0 0.0
    %1577 = vmatprep.mubr.f32.mxu0 0.0
    %1578 = vmatmul.mubr.f32.gmra.mrb[0].mxu0 %v1511
    %v1579 = vpop.f32.mrb[0].mxu0
    %v1580 = vadd.f32 0.0, %v1579
    %v1581 = vpop.f32.mrb[0].mxu0
    %1582 = vdwg.mxu0
    %v1583 = vadd.f32 %v1458, %v1580
    %v1584 = vxor.u32 %v1583, 2147483648
    %v1585 = vmul.f32 %v1584, 1.442695
    %v1586 = vpow.pop %v1585
    %v1587 = vadd.f32 %v1586, 1.0
    %v1588 = vrcp.pop %v1587
    %v1589 = vmul.f32 1.0, %v1588
    %v1590 = vtanh.pop %v1583
    %1592 = vrot.lane.b32.xlu0 %v1509, 32
    %v1593 = vpop.permute.xlu0 %1592
    %v1595 = vmul.f32 %v1589, %v1593
    %1597 = vrot.lane.b32.xlu0 %v1590, 64
    %v1598 = vpop.permute.xlu0 %1597
    %v1600 = vmul.f32 %v1589, %v1598
    %1602 = vrot.lane.b32.xlu0 %v1600, 32
    %v1603 = vpop.permute.xlu0 %1602
    %v1605 = vadd.f32 %v1595, %v1603
    %v1606 = vtanh.pop %v1605
    %1608 = vrot.lane.b32.xlu0 %v1606, 64
    %v1609 = vpop.permute.xlu0 %1608
    %v1611 = vmul.f32 %v1589, %v1609
    %vm1612 = vcmp.eq.s32.totalorder %v137, 0
    %v1613 = vsel %vm1612, 1, 0
    %1614 = vset.pattern.permute.xlu0 0
    %1615 = vperm.xlu0 %1614, %v1613
    %v1616 = vpop.permute.xlu0 %1615
    %vm1617 = vcmp.eq.s32.totalorder %v1616, 1
    %v1618 = vsel %vm1617, %v1611, 0.0
    %1620 = vrot.lane.b32.xlu0 %v1611, 32
    %v1621 = vpop.permute.xlu0 %1620
    %v1622 = vsel %vm163, %v1621, 0
    %1624 = vmatprep.subr.mxu0 0.0
    %1625 = vmatpush1.msra.mxu0 %v1340
    %1626 = vmatprep.subr.mxu0 0.0
    %1627 = vmatpush1.msra.mxu0 %v1341
    %1628 = vmatprep.subr.mxu0 0.0
    %1629 = vmatpush1.msra.mxu0 %v1342
    %1630 = vmatprep.subr.mxu0 0.0
    %1631 = vmatpush1.msra.mxu0 %v1343
    %1632 = vmatprep.subr.mxu0 0.0
    %1633 = vmatpush1.msra.mxu0 0.0
    %1634 = vmatprep.subr.mxu0 0.0
    %1635 = vmatpush1.msra.mxu0 0.0
    %1636 = vmatprep.subr.mxu0 0.0
    %1637 = vmatpush1.msra.mxu0 0.0
    %1638 = vmatprep.subr.mxu0 0.0
    %1639 = vmatpush1.msra.mxu0 0.0
    %1640 = vmatprep.subr.mxu0 0.0
    %1641 = vmatpush1.msra.mxu0 0.0
    %1642 = vmatprep.subr.mxu0 0.0
    %1643 = vmatpush1.msra.mxu0 0.0
    %1644 = vmatprep.subr.mxu0 0.0
    %1645 = vmatpush1.msra.mxu0 0.0
    %1646 = vmatprep.subr.mxu0 0.0
    %1647 = vmatpush1.msra.mxu0 0.0
    %1648 = vmatprep.subr.mxu0 0.0
    %1649 = vmatpush1.msra.mxu0 0.0
    %1650 = vmatprep.subr.mxu0 0.0
    %1651 = vmatpush1.msra.mxu0 0.0
    %1652 = vmatprep.subr.mxu0 0.0
    %1653 = vmatpush1.msra.mxu0 0.0
    %1654 = vmatprep.subr.mxu0 0.0
    %1655 = vmatpush1.msra.mxu0 0.0
    %1656 = vmatprep.subr.mxu0 0.0
    %1657 = vmatpush1.msra.mxu0 0.0
    %1658 = vmatprep.subr.mxu0 0.0
    %1659 = vmatpush1.msra.mxu0 0.0
    %1660 = vmatprep.subr.mxu0 0.0
    %1661 = vmatpush1.msra.mxu0 0.0
    %1662 = vmatprep.subr.mxu0 0.0
    %1663 = vmatpush1.msra.mxu0 0.0
    %1664 = vmatprep.subr.mxu0 0.0
    %1665 = vmatpush1.msra.mxu0 0.0
    %1666 = vmatprep.subr.mxu0 0.0
    %1667 = vmatpush1.msra.mxu0 0.0
    %1668 = vmatprep.subr.mxu0 0.0
    %1669 = vmatpush1.msra.mxu0 0.0
    %1670 = vmatprep.subr.mxu0 0.0
    %1671 = vmatpush1.msra.mxu0 0.0
    %1672 = vmatprep.subr.mxu0 0.0
    %1673 = vmatpush1.msra.mxu0 0.0
    %1674 = vmatprep.subr.mxu0 0.0
    %1675 = vmatpush1.msra.mxu0 0.0
    %1676 = vmatprep.subr.mxu0 0.0
    %1677 = vmatpush1.msra.mxu0 0.0
    %1678 = vmatprep.subr.mxu0 0.0
    %1679 = vmatpush1.msra.mxu0 0.0
    %1680 = vmatprep.subr.mxu0 0.0
    %1681 = vmatpush1.msra.mxu0 0.0
    %1682 = vmatprep.subr.mxu0 0.0
    %1683 = vmatpush1.msra.mxu0 0.0
    %1684 = vmatprep.subr.mxu0 0.0
    %1685 = vmatpush1.msra.mxu0 0.0
    %1686 = vmatprep.subr.mxu0 0.0
    %1687 = vmatpush1.msra.mxu0 0.0
    %1688 = vmatprep.mubr.f32.mxu0 0.0
    %1689 = vmatmul.mubr.f32.gmra.mrb[0].mxu0 %v1622
    %v1690 = vpop.f32.mrb[0].mxu0
    %v1691 = vadd.f32 0.0, %v1690
    %v1692 = vpop.f32.mrb[0].mxu0
    %1693 = vdwg.mxu0
    %v1694 = vadd.f32 %v1463, %v1691
    %v1695 = vxor.u32 %v1694, 2147483648
    %v1696 = vmul.f32 %v1695, 1.442695
    %v1697 = vpow.pop %v1696
    %v1698 = vadd.f32 %v1697, 1.0
    %v1699 = vrcp.pop %v1698
    %v1700 = vmul.f32 1.0, %v1699
    %v1701 = vtanh.pop %v1694
    %v1702 = vmul.f32 %v1700, %v1605
    %1704 = vrot.lane.b32.xlu0 %v1701, 64
    %v1705 = vpop.permute.xlu0 %1704
    %v1707 = vmul.f32 %v1700, %v1705
    %1709 = vrot.lane.b32.xlu0 %v1707, 32
    %v1710 = vpop.permute.xlu0 %1709
    %v1712 = vadd.f32 %v1702, %v1710
    %v1713 = vtanh.pop %v1712
    %1715 = vrot.lane.b32.xlu0 %v1713, 64
    %v1716 = vpop.permute.xlu0 %1715
    %v1718 = vmul.f32 %v1700, %v1716
    %vm1719 = vcmp.eq.s32.totalorder %v137, 1
    %v1720 = vsel %vm1719, 1, 0
    %1721 = vset.pattern.permute.xlu0 0
    %1722 = vperm.xlu0 %1721, %v1720
    %v1723 = vpop.permute.xlu0 %1722
    %vm1724 = vcmp.eq.s32.totalorder %v1723, 1
    %v1725 = vsel %vm1724, %v1718, %v1618
    %1727 = vrot.lane.b32.xlu0 %v1718, 32
    %v1728 = vpop.permute.xlu0 %1727
    %v1729 = vsel %vm163, %v1728, 0
    %1731 = vmatprep.subr.mxu0 0.0
    %1732 = vmatpush1.msra.mxu0 %v1340
    %1733 = vmatprep.subr.mxu0 0.0
    %1734 = vmatpush1.msra.mxu0 %v1341
    %1735 = vmatprep.subr.mxu0 0.0
    %1736 = vmatpush1.msra.mxu0 %v1342
    %1737 = vmatprep.subr.mxu0 0.0
    %1738 = vmatpush1.msra.mxu0 %v1343
    %1739 = vmatprep.subr.mxu0 0.0
    %1740 = vmatpush1.msra.mxu0 0.0
    %1741 = vmatprep.subr.mxu0 0.0
    %1742 = vmatpush1.msra.mxu0 0.0
    %1743 = vmatprep.subr.mxu0 0.0
    %1744 = vmatpush1.msra.mxu0 0.0
    %1745 = vmatprep.subr.mxu0 0.0
    %1746 = vmatpush1.msra.mxu0 0.0
    %1747 = vmatprep.subr.mxu0 0.0
    %1748 = vmatpush1.msra.mxu0 0.0
    %1749 = vmatprep.subr.mxu0 0.0
    %1750 = vmatpush1.msra.mxu0 0.0
    %1751 = vmatprep.subr.mxu0 0.0
    %1752 = vmatpush1.msra.mxu0 0.0
    %1753 = vmatprep.subr.mxu0 0.0
    %1754 = vmatpush1.msra.mxu0 0.0
    %1755 = vmatprep.subr.mxu0 0.0
    %1756 = vmatpush1.msra.mxu0 0.0
    %1757 = vmatprep.subr.mxu0 0.0
    %1758 = vmatpush1.msra.mxu0 0.0
    %1759 = vmatprep.subr.mxu0 0.0
    %1760 = vmatpush1.msra.mxu0 0.0
    %1761 = vmatprep.subr.mxu0 0.0
    %1762 = vmatpush1.msra.mxu0 0.0
    %1763 = vmatprep.subr.mxu0 0.0
    %1764 = vmatpush1.msra.mxu0 0.0
    %1765 = vmatprep.subr.mxu0 0.0
    %1766 = vmatpush1.msra.mxu0 0.0
    %1767 = vmatprep.subr.mxu0 0.0
    %1768 = vmatpush1.msra.mxu0 0.0
    %1769 = vmatprep.subr.mxu0 0.0
    %1770 = vmatpush1.msra.mxu0 0.0
    %1771 = vmatprep.subr.mxu0 0.0
    %1772 = vmatpush1.msra.mxu0 0.0
    %1773 = vmatprep.subr.mxu0 0.0
    %1774 = vmatpush1.msra.mxu0 0.0
    %1775 = vmatprep.subr.mxu0 0.0
    %1776 = vmatpush1.msra.mxu0 0.0
    %1777 = vmatprep.subr.mxu0 0.0
    %1778 = vmatpush1.msra.mxu0 0.0
    %1779 = vmatprep.subr.mxu0 0.0
    %1780 = vmatpush1.msra.mxu0 0.0
    %1781 = vmatprep.subr.mxu0 0.0
    %1782 = vmatpush1.msra.mxu0 0.0
    %1783 = vmatprep.subr.mxu0 0.0
    %1784 = vmatpush1.msra.mxu0 0.0
    %1785 = vmatprep.subr.mxu0 0.0
    %1786 = vmatpush1.msra.mxu0 0.0
    %1787 = vmatprep.subr.mxu0 0.0
    %1788 = vmatpush1.msra.mxu0 0.0
    %1789 = vmatprep.subr.mxu0 0.0
    %1790 = vmatpush1.msra.mxu0 0.0
    %1791 = vmatprep.subr.mxu0 0.0
    %1792 = vmatpush1.msra.mxu0 0.0
    %1793 = vmatprep.subr.mxu0 0.0
    %1794 = vmatpush1.msra.mxu0 0.0
    %1795 = vmatprep.mubr.f32.mxu0 0.0
    %1796 = vmatmul.mubr.f32.gmra.mrb[0].mxu0 %v1729
    %v1797 = vpop.f32.mrb[0].mxu0
    %v1798 = vadd.f32 0.0, %v1797
    %v1799 = vpop.f32.mrb[0].mxu0
    %1800 = vdwg.mxu0
    %v1801 = vadd.f32 %v1468, %v1798
    %v1802 = vxor.u32 %v1801, 2147483648
    %v1803 = vmul.f32 %v1802, 1.442695
    %v1804 = vpow.pop %v1803
    %v1805 = vadd.f32 %v1804, 1.0
    %v1806 = vrcp.pop %v1805
    %v1807 = vmul.f32 1.0, %v1806
    %v1808 = vtanh.pop %v1801
    %v1809 = vmul.f32 %v1807, %v1712
    %1811 = vrot.lane.b32.xlu0 %v1808, 64
    %v1812 = vpop.permute.xlu0 %1811
    %v1814 = vmul.f32 %v1807, %v1812
    %1816 = vrot.lane.b32.xlu0 %v1814, 32
    %v1817 = vpop.permute.xlu0 %1816
    %v1819 = vadd.f32 %v1809, %v1817
    %v1820 = vtanh.pop %v1819
    %1822 = vrot.lane.b32.xlu0 %v1820, 64
    %v1823 = vpop.permute.xlu0 %1822
    %v1825 = vmul.f32 %v1807, %v1823
    %vm1826 = vcmp.eq.s32.totalorder %v137, 2
    %v1827 = vsel %vm1826, 1, 0
    %1828 = vset.pattern.permute.xlu0 0
    %1829 = vperm.xlu0 %1828, %v1827
    %v1830 = vpop.permute.xlu0 %1829
    %vm1831 = vcmp.eq.s32.totalorder %v1830, 1
    %v1832 = vsel %vm1831, %v1825, %v1725
    %1834 = vrot.lane.b32.xlu0 %v1825, 32
    %v1835 = vpop.permute.xlu0 %1834
    %v1836 = vsel %vm163, %v1835, 0
    %1838 = vmatprep.subr.mxu0 0.0
    %1839 = vmatpush1.msra.mxu0 %v1340
    %1840 = vmatprep.subr.mxu0 0.0
    %1841 = vmatpush1.msra.mxu0 %v1341
    %1842 = vmatprep.subr.mxu0 0.0
    %1843 = vmatpush1.msra.mxu0 %v1342
    %1844 = vmatprep.subr.mxu0 0.0
    %1845 = vmatpush1.msra.mxu0 %v1343
    %1846 = vmatprep.subr.mxu0 0.0
    %1847 = vmatpush1.msra.mxu0 0.0
    %1848 = vmatprep.subr.mxu0 0.0
    %1849 = vmatpush1.msra.mxu0 0.0
    %1850 = vmatprep.subr.mxu0 0.0
    %1851 = vmatpush1.msra.mxu0 0.0
    %1852 = vmatprep.subr.mxu0 0.0
    %1853 = vmatpush1.msra.mxu0 0.0
    %1854 = vmatprep.subr.mxu0 0.0
    %1855 = vmatpush1.msra.mxu0 0.0
    %1856 = vmatprep.subr.mxu0 0.0
    %1857 = vmatpush1.msra.mxu0 0.0
    %1858 = vmatprep.subr.mxu0 0.0
    %1859 = vmatpush1.msra.mxu0 0.0
    %1860 = vmatprep.subr.mxu0 0.0
    %1861 = vmatpush1.msra.mxu0 0.0
    %1862 = vmatprep.subr.mxu0 0.0
    %1863 = vmatpush1.msra.mxu0 0.0
    %1864 = vmatprep.subr.mxu0 0.0
    %1865 = vmatpush1.msra.mxu0 0.0
    %1866 = vmatprep.subr.mxu0 0.0
    %1867 = vmatpush1.msra.mxu0 0.0
    %1868 = vmatprep.subr.mxu0 0.0
    %1869 = vmatpush1.msra.mxu0 0.0
    %1870 = vmatprep.subr.mxu0 0.0
    %1871 = vmatpush1.msra.mxu0 0.0
    %1872 = vmatprep.subr.mxu0 0.0
    %1873 = vmatpush1.msra.mxu0 0.0
    %1874 = vmatprep.subr.mxu0 0.0
    %1875 = vmatpush1.msra.mxu0 0.0
    %1876 = vmatprep.subr.mxu0 0.0
    %1877 = vmatpush1.msra.mxu0 0.0
    %1878 = vmatprep.subr.mxu0 0.0
    %1879 = vmatpush1.msra.mxu0 0.0
    %1880 = vmatprep.subr.mxu0 0.0
    %1881 = vmatpush1.msra.mxu0 0.0
    %1882 = vmatprep.subr.mxu0 0.0
    %1883 = vmatpush1.msra.mxu0 0.0
    %1884 = vmatprep.subr.mxu0 0.0
    %1885 = vmatpush1.msra.mxu0 0.0
    %1886 = vmatprep.subr.mxu0 0.0
    %1887 = vmatpush1.msra.mxu0 0.0
    %1888 = vmatprep.subr.mxu0 0.0
    %1889 = vmatpush1.msra.mxu0 0.0
    %1890 = vmatprep.subr.mxu0 0.0
    %1891 = vmatpush1.msra.mxu0 0.0
    %1892 = vmatprep.subr.mxu0 0.0
    %1893 = vmatpush1.msra.mxu0 0.0
    %1894 = vmatprep.subr.mxu0 0.0
    %1895 = vmatpush1.msra.mxu0 0.0
    %1896 = vmatprep.subr.mxu0 0.0
    %1897 = vmatpush1.msra.mxu0 0.0
    %1898 = vmatprep.subr.mxu0 0.0
    %1899 = vmatpush1.msra.mxu0 0.0
    %1900 = vmatprep.subr.mxu0 0.0
    %1901 = vmatpush1.msra.mxu0 0.0
    %1902 = vmatprep.mubr.f32.mxu0 0.0
    %1903 = vmatmul.mubr.f32.gmra.mrb[0].mxu0 %v1836
    %v1904 = vpop.f32.mrb[0].mxu0
    %v1905 = vadd.f32 0.0, %v1904
    %v1906 = vpop.f32.mrb[0].mxu0
    %1907 = vdwg.mxu0
    %v1908 = vadd.f32 %v1473, %v1905
    %v1909 = vxor.u32 %v1908, 2147483648
    %v1910 = vmul.f32 %v1909, 1.442695
    %v1911 = vpow.pop %v1910
    %v1912 = vadd.f32 %v1911, 1.0
    %v1913 = vrcp.pop %v1912
    %v1914 = vmul.f32 1.0, %v1913
    %v1915 = vtanh.pop %v1908
    %v1916 = vmul.f32 %v1914, %v1819
    %1918 = vrot.lane.b32.xlu0 %v1915, 64
    %v1919 = vpop.permute.xlu0 %1918
    %v1921 = vmul.f32 %v1914, %v1919
    %1923 = vrot.lane.b32.xlu0 %v1921, 32
    %v1924 = vpop.permute.xlu0 %1923
    %v1926 = vadd.f32 %v1916, %v1924
    %v1927 = vtanh.pop %v1926
    %1929 = vrot.lane.b32.xlu0 %v1927, 64
    %v1930 = vpop.permute.xlu0 %1929
    %v1932 = vmul.f32 %v1914, %v1930
    %vm1933 = vcmp.eq.s32.totalorder %v137, 3
    %v1934 = vsel %vm1933, 1, 0
    %1935 = vset.pattern.permute.xlu0 0
    %1936 = vperm.xlu0 %1935, %v1934
    %v1937 = vpop.permute.xlu0 %1936
    %vm1938 = vcmp.eq.s32.totalorder %v1937, 1
    %v1939 = vsel %vm1938, %v1932, %v1832
    %1941 = vrot.lane.b32.xlu0 %v1932, 32
    %v1942 = vpop.permute.xlu0 %1941
    %v1943 = vsel %vm163, %v1942, 0
    %1945 = vmatprep.subr.mxu0 0.0
    %1946 = vmatpush1.msra.mxu0 %v1340
    %1947 = vmatprep.subr.mxu0 0.0
    %1948 = vmatpush1.msra.mxu0 %v1341
    %1949 = vmatprep.subr.mxu0 0.0
    %1950 = vmatpush1.msra.mxu0 %v1342
    %1951 = vmatprep.subr.mxu0 0.0
    %1952 = vmatpush1.msra.mxu0 %v1343
    %1953 = vmatprep.subr.mxu0 0.0
    %1954 = vmatpush1.msra.mxu0 0.0
    %1955 = vmatprep.subr.mxu0 0.0
    %1956 = vmatpush1.msra.mxu0 0.0
    %1957 = vmatprep.subr.mxu0 0.0
    %1958 = vmatpush1.msra.mxu0 0.0
    %1959 = vmatprep.subr.mxu0 0.0
    %1960 = vmatpush1.msra.mxu0 0.0
    %1961 = vmatprep.subr.mxu0 0.0
    %1962 = vmatpush1.msra.mxu0 0.0
    %1963 = vmatprep.subr.mxu0 0.0
    %1964 = vmatpush1.msra.mxu0 0.0
    %1965 = vmatprep.subr.mxu0 0.0
    %1966 = vmatpush1.msra.mxu0 0.0
    %1967 = vmatprep.subr.mxu0 0.0
    %1968 = vmatpush1.msra.mxu0 0.0
    %1969 = vmatprep.subr.mxu0 0.0
    %1970 = vmatpush1.msra.mxu0 0.0
    %1971 = vmatprep.subr.mxu0 0.0
    %1972 = vmatpush1.msra.mxu0 0.0
    %1973 = vmatprep.subr.mxu0 0.0
    %1974 = vmatpush1.msra.mxu0 0.0
    %1975 = vmatprep.subr.mxu0 0.0
    %1976 = vmatpush1.msra.mxu0 0.0
    %1977 = vmatprep.subr.mxu0 0.0
    %1978 = vmatpush1.msra.mxu0 0.0
    %1979 = vmatprep.subr.mxu0 0.0
    %1980 = vmatpush1.msra.mxu0 0.0
    %1981 = vmatprep.subr.mxu0 0.0
    %1982 = vmatpush1.msra.mxu0 0.0
    %1983 = vmatprep.subr.mxu0 0.0
    %1984 = vmatpush1.msra.mxu0 0.0
    %1985 = vmatprep.subr.mxu0 0.0
    %1986 = vmatpush1.msra.mxu0 0.0
    %1987 = vmatprep.subr.mxu0 0.0
    %1988 = vmatpush1.msra.mxu0 0.0
    %1989 = vmatprep.subr.mxu0 0.0
    %1990 = vmatpush1.msra.mxu0 0.0
    %1991 = vmatprep.subr.mxu0 0.0
    %1992 = vmatpush1.msra.mxu0 0.0
    %1993 = vmatprep.subr.mxu0 0.0
    %1994 = vmatpush1.msra.mxu0 0.0
    %1995 = vmatprep.subr.mxu0 0.0
    %1996 = vmatpush1.msra.mxu0 0.0
    %1997 = vmatprep.subr.mxu0 0.0
    %1998 = vmatpush1.msra.mxu0 0.0
    %1999 = vmatprep.subr.mxu0 0.0
    %2000 = vmatpush1.msra.mxu0 0.0
    %2001 = vmatprep.subr.mxu0 0.0
    %2002 = vmatpush1.msra.mxu0 0.0
    %2003 = vmatprep.subr.mxu0 0.0
    %2004 = vmatpush1.msra.mxu0 0.0
    %2005 = vmatprep.subr.mxu0 0.0
    %2006 = vmatpush1.msra.mxu0 0.0
    %2007 = vmatprep.subr.mxu0 0.0
    %2008 = vmatpush1.msra.mxu0 0.0
    %2009 = vmatprep.mubr.f32.mxu0 0.0
    %2010 = vmatmul.mubr.f32.gmra.mrb[0].mxu0 %v1943
    %v2011 = vpop.f32.mrb[0].mxu0
    %v2012 = vadd.f32 0.0, %v2011
    %v2013 = vpop.f32.mrb[0].mxu0
    %2014 = vdwg.mxu0
    %v2015 = vadd.f32 %v1478, %v2012
    %v2016 = vxor.u32 %v2015, 2147483648
    %v2017 = vmul.f32 %v2016, 1.442695
    %v2018 = vpow.pop %v2017
    %v2019 = vadd.f32 %v2018, 1.0
    %v2020 = vrcp.pop %v2019
    %v2021 = vmul.f32 1.0, %v2020
    %v2022 = vtanh.pop %v2015
    %v2023 = vmul.f32 %v2021, %v1926
    %2025 = vrot.lane.b32.xlu0 %v2022, 64
    %v2026 = vpop.permute.xlu0 %2025
    %v2028 = vmul.f32 %v2021, %v2026
    %2030 = vrot.lane.b32.xlu0 %v2028, 32
    %v2031 = vpop.permute.xlu0 %2030
    %v2033 = vadd.f32 %v2023, %v2031
    %v2034 = vtanh.pop %v2033
    %2036 = vrot.lane.b32.xlu0 %v2034, 64
    %v2037 = vpop.permute.xlu0 %2036
    %v2039 = vmul.f32 %v2021, %v2037
    %vm2040 = vcmp.eq.s32.totalorder %v137, 4
    %v2041 = vsel %vm2040, 1, 0
    %2042 = vset.pattern.permute.xlu0 0
    %2043 = vperm.xlu0 %2042, %v2041
    %v2044 = vpop.permute.xlu0 %2043
    %vm2045 = vcmp.eq.s32.totalorder %v2044, 1
    %v2046 = vsel %vm2045, %v2039, %v1939
    %2048 = vrot.lane.b32.xlu0 %v2039, 32
    %v2049 = vpop.permute.xlu0 %2048
    %v2050 = vsel %vm163, %v2049, 0
    %2052 = vmatprep.subr.mxu0 0.0
    %2053 = vmatpush1.msra.mxu0 %v1340
    %2054 = vmatprep.subr.mxu0 0.0
    %2055 = vmatpush1.msra.mxu0 %v1341
    %2056 = vmatprep.subr.mxu0 0.0
    %2057 = vmatpush1.msra.mxu0 %v1342
    %2058 = vmatprep.subr.mxu0 0.0
    %2059 = vmatpush1.msra.mxu0 %v1343
    %2060 = vmatprep.subr.mxu0 0.0
    %2061 = vmatpush1.msra.mxu0 0.0
    %2062 = vmatprep.subr.mxu0 0.0
    %2063 = vmatpush1.msra.mxu0 0.0
    %2064 = vmatprep.subr.mxu0 0.0
    %2065 = vmatpush1.msra.mxu0 0.0
    %2066 = vmatprep.subr.mxu0 0.0
    %2067 = vmatpush1.msra.mxu0 0.0
    %2068 = vmatprep.subr.mxu0 0.0
    %2069 = vmatpush1.msra.mxu0 0.0
    %2070 = vmatprep.subr.mxu0 0.0
    %2071 = vmatpush1.msra.mxu0 0.0
    %2072 = vmatprep.subr.mxu0 0.0
    %2073 = vmatpush1.msra.mxu0 0.0
    %2074 = vmatprep.subr.mxu0 0.0
    %2075 = vmatpush1.msra.mxu0 0.0
    %2076 = vmatprep.subr.mxu0 0.0
    %2077 = vmatpush1.msra.mxu0 0.0
    %2078 = vmatprep.subr.mxu0 0.0
    %2079 = vmatpush1.msra.mxu0 0.0
    %2080 = vmatprep.subr.mxu0 0.0
    %2081 = vmatpush1.msra.mxu0 0.0
    %2082 = vmatprep.subr.mxu0 0.0
    %2083 = vmatpush1.msra.mxu0 0.0
    %2084 = vmatprep.subr.mxu0 0.0
    %2085 = vmatpush1.msra.mxu0 0.0
    %2086 = vmatprep.subr.mxu0 0.0
    %2087 = vmatpush1.msra.mxu0 0.0
    %2088 = vmatprep.subr.mxu0 0.0
    %2089 = vmatpush1.msra.mxu0 0.0
    %2090 = vmatprep.subr.mxu0 0.0
    %2091 = vmatpush1.msra.mxu0 0.0
    %2092 = vmatprep.subr.mxu0 0.0
    %2093 = vmatpush1.msra.mxu0 0.0
    %2094 = vmatprep.subr.mxu0 0.0
    %2095 = vmatpush1.msra.mxu0 0.0
    %2096 = vmatprep.subr.mxu0 0.0
    %2097 = vmatpush1.msra.mxu0 0.0
    %2098 = vmatprep.subr.mxu0 0.0
    %2099 = vmatpush1.msra.mxu0 0.0
    %2100 = vmatprep.subr.mxu0 0.0
    %2101 = vmatpush1.msra.mxu0 0.0
    %2102 = vmatprep.subr.mxu0 0.0
    %2103 = vmatpush1.msra.mxu0 0.0
    %2104 = vmatprep.subr.mxu0 0.0
    %2105 = vmatpush1.msra.mxu0 0.0
    %2106 = vmatprep.subr.mxu0 0.0
    %2107 = vmatpush1.msra.mxu0 0.0
    %2108 = vmatprep.subr.mxu0 0.0
    %2109 = vmatpush1.msra.mxu0 0.0
    %2110 = vmatprep.subr.mxu0 0.0
    %2111 = vmatpush1.msra.mxu0 0.0
    %2112 = vmatprep.subr.mxu0 0.0
    %2113 = vmatpush1.msra.mxu0 0.0
    %2114 = vmatprep.subr.mxu0 0.0
    %2115 = vmatpush1.msra.mxu0 0.0
    %2116 = vmatprep.mubr.f32.mxu0 0.0
    %2117 = vmatmul.mubr.f32.gmra.mrb[0].mxu0 %v2050
    %v2118 = vpop.f32.mrb[0].mxu0
    %v2119 = vadd.f32 0.0, %v2118
    %v2120 = vpop.f32.mrb[0].mxu0
    %2121 = vdwg.mxu0
    %v2122 = vadd.f32 %v1483, %v2119
    %v2123 = vxor.u32 %v2122, 2147483648
    %v2124 = vmul.f32 %v2123, 1.442695
    %v2125 = vpow.pop %v2124
    %v2126 = vadd.f32 %v2125, 1.0
    %v2127 = vrcp.pop %v2126
    %v2128 = vmul.f32 1.0, %v2127
    %v2129 = vtanh.pop %v2122
    %v2130 = vmul.f32 %v2128, %v2033
    %2132 = vrot.lane.b32.xlu0 %v2129, 64
    %v2133 = vpop.permute.xlu0 %2132
    %v2135 = vmul.f32 %v2128, %v2133
    %2137 = vrot.lane.b32.xlu0 %v2135, 32
    %v2138 = vpop.permute.xlu0 %2137
    %v2140 = vadd.f32 %v2130, %v2138
    %v2141 = vtanh.pop %v2140
    %2143 = vrot.lane.b32.xlu0 %v2141, 64
    %v2144 = vpop.permute.xlu0 %2143
    %v2146 = vmul.f32 %v2128, %v2144
    %vm2147 = vcmp.eq.s32.totalorder %v137, 5
    %v2148 = vsel %vm2147, 1, 0
    %2149 = vset.pattern.permute.xlu0 0
    %2150 = vperm.xlu0 %2149, %v2148
    %v2151 = vpop.permute.xlu0 %2150
    %vm2152 = vcmp.eq.s32.totalorder %v2151, 1
    %v2153 = vsel %vm2152, %v2146, %v2046
    %2155 = vrot.lane.b32.xlu0 %v2146, 32
    %v2156 = vpop.permute.xlu0 %2155
    %v2157 = vsel %vm163, %v2156, 0
    %2159 = vmatprep.subr.mxu0 0.0
    %2160 = vmatpush1.msra.mxu0 %v1340
    %2161 = vmatprep.subr.mxu0 0.0
    %2162 = vmatpush1.msra.mxu0 %v1341
    %2163 = vmatprep.subr.mxu0 0.0
    %2164 = vmatpush1.msra.mxu0 %v1342
    %2165 = vmatprep.subr.mxu0 0.0
    %2166 = vmatpush1.msra.mxu0 %v1343
    %2167 = vmatprep.subr.mxu0 0.0
    %2168 = vmatpush1.msra.mxu0 0.0
    %2169 = vmatprep.subr.mxu0 0.0
    %2170 = vmatpush1.msra.mxu0 0.0
    %2171 = vmatprep.subr.mxu0 0.0
    %2172 = vmatpush1.msra.mxu0 0.0
    %2173 = vmatprep.subr.mxu0 0.0
    %2174 = vmatpush1.msra.mxu0 0.0
    %2175 = vmatprep.subr.mxu0 0.0
    %2176 = vmatpush1.msra.mxu0 0.0
    %2177 = vmatprep.subr.mxu0 0.0
    %2178 = vmatpush1.msra.mxu0 0.0
    %2179 = vmatprep.subr.mxu0 0.0
    %2180 = vmatpush1.msra.mxu0 0.0
    %2181 = vmatprep.subr.mxu0 0.0
    %2182 = vmatpush1.msra.mxu0 0.0
    %2183 = vmatprep.subr.mxu0 0.0
    %2184 = vmatpush1.msra.mxu0 0.0
    %2185 = vmatprep.subr.mxu0 0.0
    %2186 = vmatpush1.msra.mxu0 0.0
    %2187 = vmatprep.subr.mxu0 0.0
    %2188 = vmatpush1.msra.mxu0 0.0
    %2189 = vmatprep.subr.mxu0 0.0
    %2190 = vmatpush1.msra.mxu0 0.0
    %2191 = vmatprep.subr.mxu0 0.0
    %2192 = vmatpush1.msra.mxu0 0.0
    %2193 = vmatprep.subr.mxu0 0.0
    %2194 = vmatpush1.msra.mxu0 0.0
    %2195 = vmatprep.subr.mxu0 0.0
    %2196 = vmatpush1.msra.mxu0 0.0
    %2197 = vmatprep.subr.mxu0 0.0
    %2198 = vmatpush1.msra.mxu0 0.0
    %2199 = vmatprep.subr.mxu0 0.0
    %2200 = vmatpush1.msra.mxu0 0.0
    %2201 = vmatprep.subr.mxu0 0.0
    %2202 = vmatpush1.msra.mxu0 0.0
    %2203 = vmatprep.subr.mxu0 0.0
    %2204 = vmatpush1.msra.mxu0 0.0
    %2205 = vmatprep.subr.mxu0 0.0
    %2206 = vmatpush1.msra.mxu0 0.0
    %2207 = vmatprep.subr.mxu0 0.0
    %2208 = vmatpush1.msra.mxu0 0.0
    %2209 = vmatprep.subr.mxu0 0.0
    %2210 = vmatpush1.msra.mxu0 0.0
    %2211 = vmatprep.subr.mxu0 0.0
    %2212 = vmatpush1.msra.mxu0 0.0
    %2213 = vmatprep.subr.mxu0 0.0
    %2214 = vmatpush1.msra.mxu0 0.0
    %2215 = vmatprep.subr.mxu0 0.0
    %2216 = vmatpush1.msra.mxu0 0.0
    %2217 = vmatprep.subr.mxu0 0.0
    %2218 = vmatpush1.msra.mxu0 0.0
    %2219 = vmatprep.subr.mxu0 0.0
    %2220 = vmatpush1.msra.mxu0 0.0
    %2221 = vmatprep.subr.mxu0 0.0
    %2222 = vmatpush1.msra.mxu0 0.0
    %2223 = vmatprep.mubr.f32.mxu0 0.0
    %2224 = vmatmul.mubr.f32.gmra.mrb[0].mxu0 %v2157
    %v2225 = vpop.f32.mrb[0].mxu0
    %v2226 = vadd.f32 0.0, %v2225
    %v2227 = vpop.f32.mrb[0].mxu0
    %2228 = vdwg.mxu0
    %v2229 = vadd.f32 %v1488, %v2226
    %v2230 = vxor.u32 %v2229, 2147483648
    %v2231 = vmul.f32 %v2230, 1.442695
    %v2232 = vpow.pop %v2231
    %v2233 = vadd.f32 %v2232, 1.0
    %v2234 = vrcp.pop %v2233
    %v2235 = vmul.f32 1.0, %v2234
    %v2236 = vtanh.pop %v2229
    %v2237 = vmul.f32 %v2235, %v2140
    %2239 = vrot.lane.b32.xlu0 %v2236, 64
    %v2240 = vpop.permute.xlu0 %2239
    %v2242 = vmul.f32 %v2235, %v2240
    %2244 = vrot.lane.b32.xlu0 %v2242, 32
    %v2245 = vpop.permute.xlu0 %2244
    %v2247 = vadd.f32 %v2237, %v2245
    %v2248 = vtanh.pop %v2247
    %2250 = vrot.lane.b32.xlu0 %v2248, 64
    %v2251 = vpop.permute.xlu0 %2250
    %v2253 = vmul.f32 %v2235, %v2251
    %vm2254 = vcmp.eq.s32.totalorder %v137, 6
    %v2255 = vsel %vm2254, 1, 0
    %2256 = vset.pattern.permute.xlu0 0
    %2257 = vperm.xlu0 %2256, %v2255
    %v2258 = vpop.permute.xlu0 %2257
    %vm2259 = vcmp.eq.s32.totalorder %v2258, 1
    %v2260 = vsel %vm2259, %v2253, %v2153
    %2262 = vrot.lane.b32.xlu0 %v2253, 32
    %v2263 = vpop.permute.xlu0 %2262
    %v2264 = vsel %vm163, %v2263, 0
    %2266 = vmatprep.subr.mxu0 0.0
    %2267 = vmatpush1.msra.mxu0 %v1340
    %2268 = vmatprep.subr.mxu0 0.0
    %2269 = vmatpush1.msra.mxu0 %v1341
    %2270 = vmatprep.subr.mxu0 0.0
    %2271 = vmatpush1.msra.mxu0 %v1342
    %2272 = vmatprep.subr.mxu0 0.0
    %2273 = vmatpush1.msra.mxu0 %v1343
    %2274 = vmatprep.subr.mxu0 0.0
    %2275 = vmatpush1.msra.mxu0 0.0
    %2276 = vmatprep.subr.mxu0 0.0
    %2277 = vmatpush1.msra.mxu0 0.0
    %2278 = vmatprep.subr.mxu0 0.0
    %2279 = vmatpush1.msra.mxu0 0.0
    %2280 = vmatprep.subr.mxu0 0.0
    %2281 = vmatpush1.msra.mxu0 0.0
    %2282 = vmatprep.subr.mxu0 0.0
    %2283 = vmatpush1.msra.mxu0 0.0
    %2284 = vmatprep.subr.mxu0 0.0
    %2285 = vmatpush1.msra.mxu0 0.0
    %2286 = vmatprep.subr.mxu0 0.0
    %2287 = vmatpush1.msra.mxu0 0.0
    %2288 = vmatprep.subr.mxu0 0.0
    %2289 = vmatpush1.msra.mxu0 0.0
    %2290 = vmatprep.subr.mxu0 0.0
    %2291 = vmatpush1.msra.mxu0 0.0
    %2292 = vmatprep.subr.mxu0 0.0
    %2293 = vmatpush1.msra.mxu0 0.0
    %2294 = vmatprep.subr.mxu0 0.0
    %2295 = vmatpush1.msra.mxu0 0.0
    %2296 = vmatprep.subr.mxu0 0.0
    %2297 = vmatpush1.msra.mxu0 0.0
    %2298 = vmatprep.subr.mxu0 0.0
    %2299 = vmatpush1.msra.mxu0 0.0
    %2300 = vmatprep.subr.mxu0 0.0
    %2301 = vmatpush1.msra.mxu0 0.0
    %2302 = vmatprep.subr.mxu0 0.0
    %2303 = vmatpush1.msra.mxu0 0.0
    %2304 = vmatprep.subr.mxu0 0.0
    %2305 = vmatpush1.msra.mxu0 0.0
    %2306 = vmatprep.subr.mxu0 0.0
    %2307 = vmatpush1.msra.mxu0 0.0
    %2308 = vmatprep.subr.mxu0 0.0
    %2309 = vmatpush1.msra.mxu0 0.0
    %2310 = vmatprep.subr.mxu0 0.0
    %2311 = vmatpush1.msra.mxu0 0.0
    %2312 = vmatprep.subr.mxu0 0.0
    %2313 = vmatpush1.msra.mxu0 0.0
    %2314 = vmatprep.subr.mxu0 0.0
    %2315 = vmatpush1.msra.mxu0 0.0
    %2316 = vmatprep.subr.mxu0 0.0
    %2317 = vmatpush1.msra.mxu0 0.0
    %2318 = vmatprep.subr.mxu0 0.0
    %2319 = vmatpush1.msra.mxu0 0.0
    %2320 = vmatprep.subr.mxu0 0.0
    %2321 = vmatpush1.msra.mxu0 0.0
    %2322 = vmatprep.subr.mxu0 0.0
    %2323 = vmatpush1.msra.mxu0 0.0
    %2324 = vmatprep.subr.mxu0 0.0
    %2325 = vmatpush1.msra.mxu0 0.0
    %2326 = vmatprep.subr.mxu0 0.0
    %2327 = vmatpush1.msra.mxu0 0.0
    %2328 = vmatprep.subr.mxu0 0.0
    %2329 = vmatpush1.msra.mxu0 0.0
    %2330 = vmatprep.mubr.f32.mxu0 0.0
    %2331 = vmatmul.mubr.f32.gmra.mrb[0].mxu0 %v2264
    %v2332 = vpop.f32.mrb[0].mxu0
    %v2333 = vadd.f32 0.0, %v2332
    %v2334 = vpop.f32.mrb[0].mxu0
    %2335 = vdwg.mxu0
    %v2336 = vadd.f32 %v1493, %v2333
    %v2337 = vxor.u32 %v2336, 2147483648
    %v2338 = vmul.f32 %v2337, 1.442695
    %v2339 = vpow.pop %v2338
    %v2340 = vadd.f32 %v2339, 1.0
    %v2341 = vrcp.pop %v2340
    %v2342 = vmul.f32 1.0, %v2341
    %v2343 = vtanh.pop %v2336
    %v2344 = vmul.f32 %v2342, %v2247
    %2346 = vrot.lane.b32.xlu0 %v2343, 64
    %v2347 = vpop.permute.xlu0 %2346
    %v2349 = vmul.f32 %v2342, %v2347
    %2351 = vrot.lane.b32.xlu0 %v2349, 32
    %v2352 = vpop.permute.xlu0 %2351
    %v2354 = vadd.f32 %v2344, %v2352
    %v2355 = vtanh.pop %v2354
    %2357 = vrot.lane.b32.xlu0 %v2355, 64
    %v2358 = vpop.permute.xlu0 %2357
    %v2360 = vmul.f32 %v2342, %v2358
    %vm2361 = vcmp.eq.s32.totalorder %v137, 7
    %v2362 = vsel %vm2361, 1, 0
    %2363 = vset.pattern.permute.xlu0 0
    %2364 = vperm.xlu0 %2363, %v2362
    %v2365 = vpop.permute.xlu0 %2364
    %vm2366 = vcmp.eq.s32.totalorder %v2365, 1
    %v2367 = vsel %vm2366, %v2360, %v2260
    %2369 = vrot.lane.b32.xlu0 %v2360, 32
    %v2370 = vpop.permute.xlu0 %2369
    %v2371 = vsel %vm163, %v2370, 0
    %2373 = vmatprep.subr.mxu0 0.0
    %2374 = vmatpush1.msra.mxu0 %v1340
    %2375 = vmatprep.subr.mxu0 0.0
    %2376 = vmatpush1.msra.mxu0 %v1341
    %2377 = vmatprep.subr.mxu0 0.0
    %2378 = vmatpush1.msra.mxu0 %v1342
    %2379 = vmatprep.subr.mxu0 0.0
    %2380 = vmatpush1.msra.mxu0 %v1343
    %2381 = vmatprep.subr.mxu0 0.0
    %2382 = vmatpush1.msra.mxu0 0.0
    %2383 = vmatprep.subr.mxu0 0.0
    %2384 = vmatpush1.msra.mxu0 0.0
    %2385 = vmatprep.subr.mxu0 0.0
    %2386 = vmatpush1.msra.mxu0 0.0
    %2387 = vmatprep.subr.mxu0 0.0
    %2388 = vmatpush1.msra.mxu0 0.0
    %2389 = vmatprep.subr.mxu0 0.0
    %2390 = vmatpush1.msra.mxu0 0.0
    %2391 = vmatprep.subr.mxu0 0.0
    %2392 = vmatpush1.msra.mxu0 0.0
    %2393 = vmatprep.subr.mxu0 0.0
    %2394 = vmatpush1.msra.mxu0 0.0
    %2395 = vmatprep.subr.mxu0 0.0
    %2396 = vmatpush1.msra.mxu0 0.0
    %2397 = vmatprep.subr.mxu0 0.0
    %2398 = vmatpush1.msra.mxu0 0.0
    %2399 = vmatprep.subr.mxu0 0.0
    %2400 = vmatpush1.msra.mxu0 0.0
    %2401 = vmatprep.subr.mxu0 0.0
    %2402 = vmatpush1.msra.mxu0 0.0
    %2403 = vmatprep.subr.mxu0 0.0
    %2404 = vmatpush1.msra.mxu0 0.0
    %2405 = vmatprep.subr.mxu0 0.0
    %2406 = vmatpush1.msra.mxu0 0.0
    %2407 = vmatprep.subr.mxu0 0.0
    %2408 = vmatpush1.msra.mxu0 0.0
    %2409 = vmatprep.subr.mxu0 0.0
    %2410 = vmatpush1.msra.mxu0 0.0
    %2411 = vmatprep.subr.mxu0 0.0
    %2412 = vmatpush1.msra.mxu0 0.0
    %2413 = vmatprep.subr.mxu0 0.0
    %2414 = vmatpush1.msra.mxu0 0.0
    %2415 = vmatprep.subr.mxu0 0.0
    %2416 = vmatpush1.msra.mxu0 0.0
    %2417 = vmatprep.subr.mxu0 0.0
    %2418 = vmatpush1.msra.mxu0 0.0
    %2419 = vmatprep.subr.mxu0 0.0
    %2420 = vmatpush1.msra.mxu0 0.0
    %2421 = vmatprep.subr.mxu0 0.0
    %2422 = vmatpush1.msra.mxu0 0.0
    %2423 = vmatprep.subr.mxu0 0.0
    %2424 = vmatpush1.msra.mxu0 0.0
    %2425 = vmatprep.subr.mxu0 0.0
    %2426 = vmatpush1.msra.mxu0 0.0
    %2427 = vmatprep.subr.mxu0 0.0
    %2428 = vmatpush1.msra.mxu0 0.0
    %2429 = vmatprep.subr.mxu0 0.0
    %2430 = vmatpush1.msra.mxu0 0.0
    %2431 = vmatprep.subr.mxu0 0.0
    %2432 = vmatpush1.msra.mxu0 0.0
    %2433 = vmatprep.subr.mxu0 0.0
    %2434 = vmatpush1.msra.mxu0 0.0
    %2435 = vmatprep.subr.mxu0 0.0
    %2436 = vmatpush1.msra.mxu0 0.0
    %2437 = vmatprep.mubr.f32.mxu0 0.0
    %2438 = vmatmul.mubr.f32.gmra.mrb[0].mxu0 %v2371
    %v2439 = vpop.f32.mrb[0].mxu0
    %v2440 = vadd.f32 0.0, %v2439
    %v2441 = vpop.f32.mrb[0].mxu0
    %2442 = vdwg.mxu0
    %v2443 = vadd.f32 %v1498, %v2440
    %v2444 = vxor.u32 %v2443, 2147483648
    %v2445 = vmul.f32 %v2444, 1.442695
    %v2446 = vpow.pop %v2445
    %v2447 = vadd.f32 %v2446, 1.0
    %v2448 = vrcp.pop %v2447
    %v2449 = vmul.f32 1.0, %v2448
    %v2450 = vtanh.pop %v2443
    %v2451 = vmul.f32 %v2449, %v2354
    %2453 = vrot.lane.b32.xlu0 %v2450, 64
    %v2454 = vpop.permute.xlu0 %2453
    %v2456 = vmul.f32 %v2449, %v2454
    %2458 = vrot.lane.b32.xlu0 %v2456, 32
    %v2459 = vpop.permute.xlu0 %2458
    %v2461 = vadd.f32 %v2451, %v2459
    %v2462 = vtanh.pop %v2461
    %2464 = vrot.lane.b32.xlu0 %v2462, 64
    %v2465 = vpop.permute.xlu0 %2464
    %v2467 = vmul.f32 %v2449, %v2465
    %vm2468 = vcmp.eq.s32.totalorder %v137, 8
    %v2469 = vsel %vm2468, 1, 0
    %2470 = vset.pattern.permute.xlu0 0
    %2471 = vperm.xlu0 %2470, %v2469
    %v2472 = vpop.permute.xlu0 %2471
    %vm2473 = vcmp.eq.s32.totalorder %v2472, 1
    %v2474 = vsel %vm2473, %v2467, %v2367
    %2476 = vrot.lane.b32.xlu0 %v2467, 32
    %v2477 = vpop.permute.xlu0 %2476
    %v2478 = vsel %vm163, %v2477, 0
    %2480 = vmatprep.subr.mxu0 0.0
    %2481 = vmatpush1.msra.mxu0 %v1340
    %2482 = vmatprep.subr.mxu0 0.0
    %2483 = vmatpush1.msra.mxu0 %v1341
    %2484 = vmatprep.subr.mxu0 0.0
    %2485 = vmatpush1.msra.mxu0 %v1342
    %2486 = vmatprep.subr.mxu0 0.0
    %2487 = vmatpush1.msra.mxu0 %v1343
    %2488 = vmatprep.subr.mxu0 0.0
    %2489 = vmatpush1.msra.mxu0 0.0
    %2490 = vmatprep.subr.mxu0 0.0
    %2491 = vmatpush1.msra.mxu0 0.0
    %2492 = vmatprep.subr.mxu0 0.0
    %2493 = vmatpush1.msra.mxu0 0.0
    %2494 = vmatprep.subr.mxu0 0.0
    %2495 = vmatpush1.msra.mxu0 0.0
    %2496 = vmatprep.subr.mxu0 0.0
    %2497 = vmatpush1.msra.mxu0 0.0
    %2498 = vmatprep.subr.mxu0 0.0
    %2499 = vmatpush1.msra.mxu0 0.0
    %2500 = vmatprep.subr.mxu0 0.0
    %2501 = vmatpush1.msra.mxu0 0.0
    %2502 = vmatprep.subr.mxu0 0.0
    %2503 = vmatpush1.msra.mxu0 0.0
    %2504 = vmatprep.subr.mxu0 0.0
    %2505 = vmatpush1.msra.mxu0 0.0
    %2506 = vmatprep.subr.mxu0 0.0
    %2507 = vmatpush1.msra.mxu0 0.0
    %2508 = vmatprep.subr.mxu0 0.0
    %2509 = vmatpush1.msra.mxu0 0.0
    %2510 = vmatprep.subr.mxu0 0.0
    %2511 = vmatpush1.msra.mxu0 0.0
    %2512 = vmatprep.subr.mxu0 0.0
    %2513 = vmatpush1.msra.mxu0 0.0
    %2514 = vmatprep.subr.mxu0 0.0
    %2515 = vmatpush1.msra.mxu0 0.0
    %2516 = vmatprep.subr.mxu0 0.0
    %2517 = vmatpush1.msra.mxu0 0.0
    %2518 = vmatprep.subr.mxu0 0.0
    %2519 = vmatpush1.msra.mxu0 0.0
    %2520 = vmatprep.subr.mxu0 0.0
    %2521 = vmatpush1.msra.mxu0 0.0
    %2522 = vmatprep.subr.mxu0 0.0
    %2523 = vmatpush1.msra.mxu0 0.0
    %2524 = vmatprep.subr.mxu0 0.0
    %2525 = vmatpush1.msra.mxu0 0.0
    %2526 = vmatprep.subr.mxu0 0.0
    %2527 = vmatpush1.msra.mxu0 0.0
    %2528 = vmatprep.subr.mxu0 0.0
    %2529 = vmatpush1.msra.mxu0 0.0
    %2530 = vmatprep.subr.mxu0 0.0
    %2531 = vmatpush1.msra.mxu0 0.0
    %2532 = vmatprep.subr.mxu0 0.0
    %2533 = vmatpush1.msra.mxu0 0.0
    %2534 = vmatprep.subr.mxu0 0.0
    %2535 = vmatpush1.msra.mxu0 0.0
    %2536 = vmatprep.subr.mxu0 0.0
    %2537 = vmatpush1.msra.mxu0 0.0
    %2538 = vmatprep.subr.mxu0 0.0
    %2539 = vmatpush1.msra.mxu0 0.0
    %2540 = vmatprep.subr.mxu0 0.0
    %2541 = vmatpush1.msra.mxu0 0.0
    %2542 = vmatprep.subr.mxu0 0.0
    %2543 = vmatpush1.msra.mxu0 0.0
    %2544 = vmatprep.mubr.f32.mxu0 0.0
    %2545 = vmatmul.mubr.f32.gmra.mrb[0].mxu0 %v2478
    %v2546 = vpop.f32.mrb[0].mxu0
    %v2547 = vadd.f32 0.0, %v2546
    %v2548 = vpop.f32.mrb[0].mxu0
    %2549 = vdwg.mxu0
    %v2550 = vadd.f32 %v1503, %v2547
    %v2551 = vxor.u32 %v2550, 2147483648
    %v2552 = vmul.f32 %v2551, 1.442695
    %v2553 = vpow.pop %v2552
    %v2554 = vadd.f32 %v2553, 1.0
    %v2555 = vrcp.pop %v2554
    %v2556 = vmul.f32 1.0, %v2555
    %v2557 = vtanh.pop %v2550
    %v2558 = vmul.f32 %v2556, %v2461
    %2560 = vrot.lane.b32.xlu0 %v2557, 64
    %v2561 = vpop.permute.xlu0 %2560
    %v2563 = vmul.f32 %v2556, %v2561
    %2565 = vrot.lane.b32.xlu0 %v2563, 32
    %v2566 = vpop.permute.xlu0 %2565
    %v2568 = vadd.f32 %v2558, %v2566
    %v2569 = vtanh.pop %v2568
    %2571 = vrot.lane.b32.xlu0 %v2569, 64
    %v2572 = vpop.permute.xlu0 %2571
    %v2574 = vmul.f32 %v2556, %v2572
    %vm2575 = vcmp.eq.s32.totalorder %v137, 9
    %v2576 = vsel %vm2575, 1, 0
    %2577 = vset.pattern.permute.xlu0 0
    %2578 = vperm.xlu0 %2577, %v2576
    %v2579 = vpop.permute.xlu0 %2578
    %vm2580 = vcmp.eq.s32.totalorder %v2579, 1
    %v2581 = vsel %vm2580, %v2574, %v2474
    %2583 = vrot.lane.b32.xlu0 %v2581, 32
    %v2584 = vpop.permute.xlu0 %2583
    %2586 = vst.msk [vmem:[#allocation15] sm:$0xff] %vm163, %v2584
    %v2587 = vld [vmem:[#allocation12] sm:$0xff]
    %v2588 = vld [vmem:[#allocation12 + $0x8] sm:$0xff]
    %v2589 = vld [vmem:[#allocation12 + $0x10] sm:$0xff]
    %v2590 = vld [vmem:[#allocation12 + $0x18] sm:$0xff]
    %v2591 = vld [vmem:[%s11] sm:$0x1]
    %v2593 = vlaneseq
    %v2594 = vshrl.u32 %v2593, 7
    %v2595 = vsub.s32 0, %v2594
    %v2596 = vrot.slane %v2591, %v2595
    %v2598 = vsel %vm163, %v2584, 0
    %2600 = vmatprep.subr.mxu0 0.0
    %2601 = vmatpush1.msra.mxu0 %v2587
    %2602 = vmatprep.subr.mxu0 0.0
    %2603 = vmatpush1.msra.mxu0 %v2588
    %2604 = vmatprep.subr.mxu0 0.0
    %2605 = vmatpush1.msra.mxu0 %v2589
    %2606 = vmatprep.subr.mxu0 0.0
    %2607 = vmatpush1.msra.mxu0 %v2590
    %2608 = vmatprep.subr.mxu0 0.0
    %2609 = vmatpush1.msra.mxu0 0.0
    %2610 = vmatprep.subr.mxu0 0.0
    %2611 = vmatpush1.msra.mxu0 0.0
    %2612 = vmatprep.subr.mxu0 0.0
    %2613 = vmatpush1.msra.mxu0 0.0
    %2614 = vmatprep.subr.mxu0 0.0
    %2615 = vmatpush1.msra.mxu0 0.0
    %2616 = vmatprep.subr.mxu0 0.0
    %2617 = vmatpush1.msra.mxu0 0.0
    %2618 = vmatprep.subr.mxu0 0.0
    %2619 = vmatpush1.msra.mxu0 0.0
    %2620 = vmatprep.subr.mxu0 0.0
    %2621 = vmatpush1.msra.mxu0 0.0
    %2622 = vmatprep.subr.mxu0 0.0
    %2623 = vmatpush1.msra.mxu0 0.0
    %2624 = vmatprep.subr.mxu0 0.0
    %2625 = vmatpush1.msra.mxu0 0.0
    %2626 = vmatprep.subr.mxu0 0.0
    %2627 = vmatpush1.msra.mxu0 0.0
    %2628 = vmatprep.subr.mxu0 0.0
    %2629 = vmatpush1.msra.mxu0 0.0
    %2630 = vmatprep.subr.mxu0 0.0
    %2631 = vmatpush1.msra.mxu0 0.0
    %2632 = vmatprep.subr.mxu0 0.0
    %2633 = vmatpush1.msra.mxu0 0.0
    %2634 = vmatprep.subr.mxu0 0.0
    %2635 = vmatpush1.msra.mxu0 0.0
    %2636 = vmatprep.subr.mxu0 0.0
    %2637 = vmatpush1.msra.mxu0 0.0
    %2638 = vmatprep.subr.mxu0 0.0
    %2639 = vmatpush1.msra.mxu0 0.0
    %2640 = vmatprep.subr.mxu0 0.0
    %2641 = vmatpush1.msra.mxu0 0.0
    %2642 = vmatprep.subr.mxu0 0.0
    %2643 = vmatpush1.msra.mxu0 0.0
    %2644 = vmatprep.subr.mxu0 0.0
    %2645 = vmatpush1.msra.mxu0 0.0
    %2646 = vmatprep.subr.mxu0 0.0
    %2647 = vmatpush1.msra.mxu0 0.0
    %2648 = vmatprep.subr.mxu0 0.0
    %2649 = vmatpush1.msra.mxu0 0.0
    %2650 = vmatprep.subr.mxu0 0.0
    %2651 = vmatpush1.msra.mxu0 0.0
    %2652 = vmatprep.subr.mxu0 0.0
    %2653 = vmatpush1.msra.mxu0 0.0
    %2654 = vmatprep.subr.mxu0 0.0
    %2655 = vmatpush1.msra.mxu0 0.0
    %2656 = vmatprep.subr.mxu0 0.0
    %2657 = vmatpush1.msra.mxu0 0.0
    %2658 = vmatprep.subr.mxu0 0.0
    %2659 = vmatpush1.msra.mxu0 0.0
    %2660 = vmatprep.subr.mxu0 0.0
    %2661 = vmatpush1.msra.mxu0 0.0
    %2662 = vmatprep.subr.mxu0 0.0
    %2663 = vmatpush1.msra.mxu0 0.0
    %2664 = vmatprep.mubr.f32.mxu0 0.0
    %2665 = vmatmul.mubr.f32.gmra.mrb[0].mxu0 %v2598
    %v2666 = vpop.f32.mrb[0].mxu0
    %v2667 = vadd.f32 %v2596, %v2666
    %v2668 = vpop.f32.mrb[0].mxu0
    %2669 = vdwg.mxu0
    %v2670 = vmax.f32 %v2667, 0.0
    %v2671 = vld [vmem:[%s12] sm:$0xff]
    %v2672 = vld [vmem:[%s12 + $0x8] sm:$0xff]
    %v2673 = vld [vmem:[%s12 + $0x10] sm:$0xff]
    %v2674 = vld [vmem:[%s12 + $0x18] sm:$0xff]
    %v2675 = vld [vmem:[%s12 + $0x20] sm:$0xff]
    %v2676 = vld [vmem:[%s12 + $0x28] sm:$0xff]
    %v2677 = vld [vmem:[%s12 + $0x30] sm:$0xff]
    %v2678 = vld [vmem:[%s12 + $0x38] sm:$0xff]
    %v2679 = vld [vmem:[%s12 + $0x40] sm:$0xff]
    %v2680 = vld [vmem:[%s12 + $0x48] sm:$0xff]
    %v2681 = vld [vmem:[%s12 + $0x50] sm:$0xff]
    %v2682 = vld [vmem:[%s12 + $0x58] sm:$0xff]
    %v2683 = vld [vmem:[%s12 + $0x60] sm:$0xff]
    %v2684 = vld [vmem:[%s12 + $0x68] sm:$0xff]
    %v2685 = vld [vmem:[%s12 + $0x70] sm:$0xff]
    %v2686 = vld [vmem:[%s12 + $0x78] sm:$0xff]
    %v2687 = vld [vmem:[%s13] sm:$0x1]
    %v2689 = vlaneseq
    %v2690 = vshrl.u32 %v2689, 7
    %v2691 = vsub.s32 0, %v2690
    %v2692 = vrot.slane %v2687, %v2691
    %2694 = vmatprep.subr.mxu0 0.0
    %2695 = vmatpush1.msra.mxu0 %v2671
    %2696 = vmatprep.subr.mxu0 0.0
    %2697 = vmatpush1.msra.mxu0 %v2672
    %2698 = vmatprep.subr.mxu0 0.0
    %2699 = vmatpush1.msra.mxu0 %v2673
    %2700 = vmatprep.subr.mxu0 0.0
    %2701 = vmatpush1.msra.mxu0 %v2674
    %2702 = vmatprep.subr.mxu0 0.0
    %2703 = vmatpush1.msra.mxu0 %v2675
    %2704 = vmatprep.subr.mxu0 0.0
    %2705 = vmatpush1.msra.mxu0 %v2676
    %2706 = vmatprep.subr.mxu0 0.0
    %2707 = vmatpush1.msra.mxu0 %v2677
    %2708 = vmatprep.subr.mxu0 0.0
    %2709 = vmatpush1.msra.mxu0 %v2678
    %2710 = vmatprep.subr.mxu0 0.0
    %2711 = vmatpush1.msra.mxu0 %v2679
    %2712 = vmatprep.subr.mxu0 0.0
    %2713 = vmatpush1.msra.mxu0 %v2680
    %2714 = vmatprep.subr.mxu0 0.0
    %2715 = vmatpush1.msra.mxu0 %v2681
    %2716 = vmatprep.subr.mxu0 0.0
    %2717 = vmatpush1.msra.mxu0 %v2682
    %2718 = vmatprep.subr.mxu0 0.0
    %2719 = vmatpush1.msra.mxu0 %v2683
    %2720 = vmatprep.subr.mxu0 0.0
    %2721 = vmatpush1.msra.mxu0 %v2684
    %2722 = vmatprep.subr.mxu0 0.0
    %2723 = vmatpush1.msra.mxu0 %v2685
    %2724 = vmatprep.subr.mxu0 0.0
    %2725 = vmatpush1.msra.mxu0 %v2686
    %2726 = vmatprep.subr.mxu0 0.0
    %2727 = vmatpush1.msra.mxu0 0.0
    %2728 = vmatprep.subr.mxu0 0.0
    %2729 = vmatpush1.msra.mxu0 0.0
    %2730 = vmatprep.subr.mxu0 0.0
    %2731 = vmatpush1.msra.mxu0 0.0
    %2732 = vmatprep.subr.mxu0 0.0
    %2733 = vmatpush1.msra.mxu0 0.0
    %2734 = vmatprep.subr.mxu0 0.0
    %2735 = vmatpush1.msra.mxu0 0.0
    %2736 = vmatprep.subr.mxu0 0.0
    %2737 = vmatpush1.msra.mxu0 0.0
    %2738 = vmatprep.subr.mxu0 0.0
    %2739 = vmatpush1.msra.mxu0 0.0
    %2740 = vmatprep.subr.mxu0 0.0
    %2741 = vmatpush1.msra.mxu0 0.0
    %2742 = vmatprep.subr.mxu0 0.0
    %2743 = vmatpush1.msra.mxu0 0.0
    %2744 = vmatprep.subr.mxu0 0.0
    %2745 = vmatpush1.msra.mxu0 0.0
    %2746 = vmatprep.subr.mxu0 0.0
    %2747 = vmatpush1.msra.mxu0 0.0
    %2748 = vmatprep.subr.mxu0 0.0
    %2749 = vmatpush1.msra.mxu0 0.0
    %2750 = vmatprep.subr.mxu0 0.0
    %2751 = vmatpush1.msra.mxu0 0.0
    %2752 = vmatprep.subr.mxu0 0.0
    %2753 = vmatpush1.msra.mxu0 0.0
    %2754 = vmatprep.subr.mxu0 0.0
    %2755 = vmatpush1.msra.mxu0 0.0
    %2756 = vmatprep.subr.mxu0 0.0
    %2757 = vmatpush1.msra.mxu0 0.0
    %2758 = vmatprep.mubr.f32.mxu0 0.0
    %2759 = vmatmul.mubr.f32.gmra.mrb[0].mxu0 %v2670
    %v2760 = vpop.f32.mrb[0].mxu0
    %v2761 = vadd.f32 %v2692, %v2760
    %v2762 = vpop.f32.mrb[0].mxu0
    %2763 = vdwg.mxu0
    %2764 = vst [vmem:[#allocation14] sm:$0xff] %v2761
    // Predicated region
    $region82: #{tpu_custom_call.1} parent=1 // pred_check
      _
    $region83: #{tpu_custom_call.1} parent=1 // pred_check_branch
      %2766 = sbr.rel (0) target = $region85
    $region84: #{tpu_custom_call.1} parent=1 // pred_region
      %s2768 = ssub.s32 128, 128
      %2769 = vsyncadd [#allocation5], %s2768
      %s2771 = sshll.u32 [#allocation14], 4
      %s2772 = int_to_ptr.vmem [resolvable:$true] %s2771
      %2774 = dma.vmem_to_hbm [thread:$0]  %s2772, 128, %s14, [#allocation5]
    $region85: #{tpu_custom_call.1} parent=1 // pred_fallthru
      _
    // Predicated region
    $region86: #{tpu_custom_call.1} parent=1 // pred_check
      _
    $region87: #{tpu_custom_call.1} parent=1 // pred_check_branch
      %2776 = sbr.rel (0) target = $region89
    $region88: #{tpu_custom_call.1} parent=1 // pred_region
      %s2778 = ssub.s32 128, 128
      %2779 = vsyncadd [#allocation16], %s2778
      %s2781 = sshll.u32 [#allocation15], 4
      %s2782 = int_to_ptr.vmem [resolvable:$true] %s2781
      %2784 = dma.vmem_to_hbm [thread:$0]  %s2782, 128, %s15, [#allocation16]
    $region89: #{tpu_custom_call.1} parent=1 // pred_fallthru
      _
    // Predicated region
    $region90: #{tpu_custom_call.1} parent=1 // pred_check
      _
    $region91: #{tpu_custom_call.1} parent=1 // pred_check_branch
      %2786 = sbr.rel (0) target = $region93
    $region92: #{tpu_custom_call.1} parent=1 // pred_region
      %2787 = dma.done [#allocation5], 128
    $region93: #{tpu_custom_call.1} parent=1 // pred_fallthru
      _
    // Predicated region
    $region94: #{tpu_custom_call.1} parent=1 // pred_check
      _
    $region95: #{tpu_custom_call.1} parent=1 // pred_check_branch
      %2789 = sbr.rel (0) target = $region97
    $region96: #{tpu_custom_call.1} parent=1 // pred_region
      %2790 = dma.done [#allocation16], 128
    $region97: #{tpu_custom_call.1} parent=1 // pred_fallthru
      _
    %2791 = vsyncpa [#allocation4], 1
    %2792 = vsyncpa [#allocation7], 1
    %2793 = vsyncpa [#allocation10], 1
    %2794 = vsyncpa [#allocation13], 1
    %2795 = vsyncpa [#allocation5], 1
    %2796 = vsyncpa [#allocation16], 1

</llo_original>
